<compile_context>
chip_gen: v5e
topology: v5e:2x2
jax: 0.10.0
libtpu: 0.0.40
codegen_flags: <defaults>
</compile_context>

<pallas_src>
import functools

import jax
import jax.numpy as jnp
from jax.experimental import pallas as pl
from jax.experimental.pallas import tpu as pltpu


# ----------------------------- fused conv + BN (+ReLU, +residual) kernel -----------------------------

def _conv_bn_kernel(*refs, relu, eps, has_res):
    """Grid = (Cout//tn, n_taps).  Accumulates tap GEMMs into the resident output block,
    then applies training-mode BatchNorm (+optional residual add, +optional ReLU) at the
    last tap.  Each grid step sees ALL M rows for its channel tile, so batch statistics
    are exact."""
    if has_res:
        a_ref, b_ref, g_ref, be_ref, r_ref, o_ref = refs
    else:
        a_ref, b_ref, g_ref, be_ref, o_ref = refs
        r_ref = None

    t = pl.program_id(1)
    n_taps = pl.num_programs(1)

    @pl.when(t == 0)
    def _():
        o_ref[...] = jnp.zeros_like(o_ref)

    # bf16 x bf16 -> f32 accumulation on the MXU.
    o_ref[...] += jnp.dot(a_ref[0], b_ref[0], preferred_element_type=jnp.float32)

    @pl.when(t == n_taps - 1)
    def _():
        x = o_ref[...]
        m = x.shape[0]
        # Single pass: column sums and sums-of-squares (biased variance, train-mode BN).
        s1 = jnp.sum(x, axis=0, keepdims=True)
        s2 = jnp.sum(x * x, axis=0, keepdims=True)
        mean = s1 * (1.0 / m)
        var = s2 * (1.0 / m) - mean * mean
        y = (x - mean) * jax.lax.rsqrt(var + eps) * g_ref[...] + be_ref[...]
        if r_ref is not None:
            y = y + r_ref[...]
        if relu:
            y = jnp.maximum(y, 0.0)
        o_ref[...] = y


def pallas_conv_bn(taps, w_packed, gamma2d, beta2d, *, relu, residual=None, eps=1e-5):
    """taps: (T, M, Cin) bf16 (T = 9 for 3x3, 1 for 1x1); w_packed: (T, Cin, Cout) bf16;
    gamma2d/beta2d: (1, Cout) f32; residual: optional (M, Cout) f32.  Returns (M, Cout) f32."""
    T, M, Cin = taps.shape
    Cout = w_packed.shape[2]
    assert w_packed.shape[:2] == (T, Cin)
    assert M % 8 == 0, M
    tn = min(256, Cout)          # 256-wide output tiles -> full MXU N width on v6e/v7x
    assert Cout % tn == 0

    in_specs = [
        pl.BlockSpec((1, M, Cin), lambda j, t: (t, 0, 0)),
        pl.BlockSpec((1, Cin, tn), lambda j, t: (t, 0, j)),
        pl.BlockSpec((1, tn), lambda j, t: (0, j)),
        pl.BlockSpec((1, tn), lambda j, t: (0, j)),
    ]
    args = [taps, w_packed, gamma2d, beta2d]
    if residual is not None:
        in_specs.append(pl.BlockSpec((M, tn), lambda j, t: (0, j)))
        args.append(residual)

    kernel = functools.partial(_conv_bn_kernel, relu=relu, eps=eps,
                               has_res=residual is not None)
    return pl.pallas_call(
        kernel,
        out_shape=jax.ShapeDtypeStruct((M, Cout), jnp.float32),
        grid=(Cout // tn, T),
        in_specs=in_specs,
        out_specs=pl.BlockSpec((M, tn), lambda j, t: (0, j)),
        compiler_params=pltpu.CompilerParams(
            dimension_semantics=("parallel", "arbitrary"),
            vmem_limit_bytes=48 * 1024 * 1024,
        ),
    )(*args)


# ----------------------------- im2col glue (plain-JAX reshapes, bf16) -----------------------------

def im2col_3x3(x, stride):
    """x: NHWC -> (9, N*Ho*Wo, Cin) bf16 tap stack (padding=1)."""
    N, H, W, Cin = x.shape
    Ho = (H + 2 - 3) // stride + 1
    Wo = (W + 2 - 3) // stride + 1
    xp = jnp.pad(x, ((0, 0), (1, 1), (1, 1), (0, 0)))
    taps = []
    for kh in range(3):
        for kw in range(3):
            taps.append(
                xp[:, kh:kh + (Ho - 1) * stride + 1:stride,
                       kw:kw + (Wo - 1) * stride + 1:stride, :].reshape(N * Ho * Wo, Cin))
    return jnp.stack(taps, axis=0).astype(jnp.bfloat16), (N, Ho, Wo)


def im2col_1x1(x, stride):
    """x: NHWC -> (1, N*Ho*Wo, Cin) bf16."""
    N, H, W, Cin = x.shape
    xs = x[:, ::stride, ::stride, :]
    Ho, Wo = xs.shape[1], xs.shape[2]
    return xs.reshape(1, N * Ho * Wo, Cin).astype(jnp.bfloat16), (N, Ho, Wo)


# ----------------------------- parameters (pre-packed for the kernel) -----------------------------

def kaiming_conv(key, cout, cin, kh, kw):
    # kaiming_normal_(mode='fan_out', nonlinearity='relu'): std = sqrt(2 / (cout*kh*kw))
    fan_out = cout * kh * kw
    std = (2.0 / fan_out) ** 0.5
    return jax.random.normal(key, (cout, cin, kh, kw), jnp.float32) * std


def pack3x3(w):
    # (Cout, Cin, 3, 3) -> (9, Cin, Cout) bf16, tap index t = kh*3 + kw.
    cout, cin = w.shape[0], w.shape[1]
    return jnp.transpose(w, (2, 3, 1, 0)).reshape(9, cin, cout).astype(jnp.bfloat16)


def pack1x1(w):
    # (Cout, Cin, 1, 1) -> (1, Cin, Cout) bf16.
    cout, cin = w.shape[0], w.shape[1]
    return jnp.transpose(w.reshape(cout, cin), (1, 0)).reshape(1, cin, cout).astype(jnp.bfloat16)


def bn_params(c):
    # nn.init.constant_(weight, 1) / constant_(bias, 0); pre-reshaped for the kernel.
    return jnp.ones((1, c), jnp.float32), jnp.zeros((1, c), jnp.float32)


def make_params(key, exp=1):
    ks = jax.random.split(key, 8)
    p = {}
    p["conv1_w"] = pack3x3(kaiming_conv(ks[0], 128 * exp, 64 * exp, 3, 3))
    p["bn1_g"], p["bn1_b"] = bn_params(128 * exp)
    p["conv2_w"] = pack3x3(kaiming_conv(ks[1], 256 * exp, 128 * exp, 3, 3))
    p["bn2_g"], p["bn2_b"] = bn_params(256 * exp)
    p["conv3_w"] = pack3x3(kaiming_conv(ks[2], 256 * exp, 128 * exp, 3, 3))
    p["bn3_g"], p["bn3_b"] = bn_params(256 * exp)
    # bn_layer: one BasicBlock(256*exp*3 = 768 -> 512, stride=2) with conv1x1 downsample.
    cin_blk = 256 * exp * 3
    planes = 512 * exp
    p["blk_conv1_w"] = pack3x3(kaiming_conv(ks[3], planes, cin_blk, 3, 3))
    p["blk_bn1_g"], p["blk_bn1_b"] = bn_params(planes)
    p["blk_conv2_w"] = pack3x3(kaiming_conv(ks[4], planes, planes, 3, 3))
    p["blk_bn2_g"], p["blk_bn2_b"] = bn_params(planes)
    p["ds_conv_w"] = pack1x1(kaiming_conv(ks[5], planes, cin_blk, 1, 1))
    p["ds_bn_g"], p["ds_bn_b"] = bn_params(planes)
    return p


# ----------------------------- BN_layer forward -----------------------------

def bn_layer_forward(p, x0_nchw, x1_nchw, x2_nchw):
    # NCHW (PyTorch) -> NHWC (kernel layout)
    x0 = jnp.transpose(x0_nchw, (0, 2, 3, 1))
    x1 = jnp.transpose(x1_nchw, (0, 2, 3, 1))
    x2 = jnp.transpose(x2_nchw, (0, 2, 3, 1))

    # l1 = relu(bn2(conv2(relu(bn1(conv1(x[0]))))))
    taps, (N, Ho, Wo) = im2col_3x3(x0, 2)
    t = pallas_conv_bn(taps, p["conv1_w"], p["bn1_g"], p["bn1_b"], relu=True)
    t = t.reshape(N, Ho, Wo, -1)
    taps, (N, Ho, Wo) = im2col_3x3(t, 2)
    l1 = pallas_conv_bn(taps, p["conv2_w"], p["bn2_g"], p["bn2_b"], relu=True)
    l1 = l1.reshape(N, Ho, Wo, -1)

    # l2 = relu(bn3(conv3(x[1])))
    taps, (N, Ho, Wo) = im2col_3x3(x1, 2)
    l2 = pallas_conv_bn(taps, p["conv3_w"], p["bn3_g"], p["bn3_b"], relu=True)
    l2 = l2.reshape(N, Ho, Wo, -1)

    # feature = cat([l1, l2, x[2]], channel axis)
    feature = jnp.concatenate([l1, l2, x2], axis=-1)

    # BasicBlock(768 -> 512, stride=2) with conv1x1 downsample.
    # identity branch: conv1x1(s=2) + BN (no relu)
    taps1, (N, Ho, Wo) = im2col_1x1(feature, 2)
    idn = pallas_conv_bn(taps1, p["ds_conv_w"], p["ds_bn_g"], p["ds_bn_b"], relu=False)

    # main branch: conv3x3(s=2) + BN + ReLU
    taps, _ = im2col_3x3(feature, 2)
    out = pallas_conv_bn(taps, p["blk_conv1_w"], p["blk_bn1_g"], p["blk_bn1_b"], relu=True)
    out = out.reshape(N, Ho, Wo, -1)

    # conv3x3(s=1) + BN + residual-add + ReLU, all fused in one kernel epilogue.
    taps, _ = im2col_3x3(out, 1)
    y = pallas_conv_bn(taps, p["blk_conv2_w"], p["blk_bn2_g"], p["blk_bn2_b"],
                       relu=True, residual=idn)
    y = y.reshape(N, Ho, Wo, -1)
    return jnp.transpose(y, (0, 3, 1, 2))  # back to NCHW


# ----------------------------- main -----------------------------

if __name__ == "__main__":
    key = jax.random.PRNGKey(0)
    k_in0, k_in1, k_in2, k_par = jax.random.split(key, 4)

    B, H0 = 2, 16
    exp = 1  # BasicBlock.expansion
    # Encoder feature maps (PyTorch NCHW): layer1, layer2, layer3 outputs.
    x0 = jax.random.normal(k_in0, (B, 64 * exp, H0, H0), jnp.float32)
    x1 = jax.random.normal(k_in1, (B, 128 * exp, H0 // 2, H0 // 2), jnp.float32)
    x2 = jax.random.normal(k_in2, (B, 256 * exp, H0 // 4, H0 // 4), jnp.float32)

    params = make_params(k_par, exp=exp)

    fwd = jax.jit(bn_layer_forward)
    out = fwd(params, x0, x1, x2)
    out = jax.block_until_ready(out)

    assert out.shape == (B, 512 * exp, H0 // 8, H0 // 8), out.shape
    assert jnp.all(jnp.isfinite(out))
    print("KERNEL_OK")
</pallas_src>

<mosaic_0001>
module attributes {stable_mosaic.version = 11 : i64} {
  func.func @_conv_bn_kernel(%arg0: i32, %arg1: i32, %arg2: memref<1x128x64xbf16, #tpu.memory_space<vmem>>, %arg3: memref<1x64x128xbf16, #tpu.memory_space<vmem>>, %arg4: memref<1x128xf32, #tpu.memory_space<vmem>>, %arg5: memref<1x128xf32, #tpu.memory_space<vmem>>, %arg6: memref<128x128xf32, #tpu.memory_space<vmem>>) attributes {dimension_semantics = [#tpu.dimension_semantics<parallel>, #tpu.dimension_semantics<arbitrary>], iteration_bounds = array<i64: 1, 9>, scalar_prefetch = 0 : i64, scratch_operands = 0 : i64, tpu.core_type = #tpu.core_type<tc>, window_params = [{transform_indices = @transform_0, window_bounds = array<i64: 1, 128, 64>}, {transform_indices = @transform_1, window_bounds = array<i64: 1, 64, 128>}, {transform_indices = @transform_2, window_bounds = array<i64: 1, 128>}, {transform_indices = @transform_3, window_bounds = array<i64: 1, 128>}, {transform_indices = @transform_4, window_bounds = array<i64: 128, 128>}]} {
    %c0_i32 = arith.constant 0 : i32
    %0 = arith.cmpi eq, %arg1, %c0_i32 : i32
    %1 = arith.extui %0 : i1 to i32
    %c0_i32_0 = arith.constant 0 : i32
    %2 = arith.cmpi ne, %1, %c0_i32_0 : i32
    scf.if %2 {
      %cst_11 = arith.constant 0.000000e+00 : f32
      %14 = vector.broadcast %cst_11 : f32 to vector<128x128xf32>
      %c0_12 = arith.constant 0 : index
      %c0_13 = arith.constant 0 : index
      %15 = vector.load %arg6[%c0_12, %c0_13] : memref<128x128xf32, #tpu.memory_space<vmem>>, vector<128x128xf32>
      tpu.vector_store %arg6[%c0_12, %c0_13], %14 {strides = array<i32>} : memref<128x128xf32, #tpu.memory_space<vmem>>, vector<128x128xf32>,
    } else {
    }
    %c0 = arith.constant 0 : index
    %c0_1 = arith.constant 0 : index
    %3 = vector.load %arg6[%c0, %c0_1] : memref<128x128xf32, #tpu.memory_space<vmem>>, vector<128x128xf32>
    %c0_2 = arith.constant 0 : index
    %c0_3 = arith.constant 0 : index
    %c0_4 = arith.constant 0 : index
    %4 = vector.load %arg2[%c0_2, %c0_3, %c0_4] : memref<1x128x64xbf16, #tpu.memory_space<vmem>>, vector<1x128x64xbf16>
    %5 = vector.shape_cast %4 : vector<1x128x64xbf16> to vector<128x64xbf16>
    %c0_5 = arith.constant 0 : index
    %c0_6 = arith.constant 0 : index
    %c0_7 = arith.constant 0 : index
    %6 = vector.load %arg3[%c0_5, %c0_6, %c0_7] : memref<1x64x128xbf16, #tpu.memory_space<vmem>>, vector<1x64x128xbf16>
    %7 = vector.shape_cast %6 : vector<1x64x128xbf16> to vector<64x128xbf16>
    %cst = arith.constant dense<0.000000e+00> : vector<128x128xf32>
    %8 = tpu.matmul %5, %7, %cst {dimension_numbers = #tpu.dot_dimension_numbers<[1], [0], [0], [1], [0, 0, 1, 1], [], []>} : vector<128x64xbf16>, vector<64x128xbf16>, vector<128x128xf32> -> vector<128x128xf32>
    %9 = arith.addf %3, %8 : vector<128x128xf32>
    %c0_8 = arith.constant 0 : index
    %c0_9 = arith.constant 0 : index
    %10 = vector.load %arg6[%c0_8, %c0_9] : memref<128x128xf32, #tpu.memory_space<vmem>>, vector<128x128xf32>
    tpu.vector_store %arg6[%c0_8, %c0_9], %9 {strides = array<i32>} : memref<128x128xf32, #tpu.memory_space<vmem>>, vector<128x128xf32>,
    %c8_i32 = arith.constant 8 : i32
    %11 = arith.cmpi eq, %arg1, %c8_i32 : i32
    %12 = arith.extui %11 : i1 to i32
    %c0_i32_10 = arith.constant 0 : i32
    %13 = arith.cmpi ne, %12, %c0_i32_10 : i32
    scf.if %13 {
      %c0_11 = arith.constant 0 : index
      %c0_12 = arith.constant 0 : index
      %14 = vector.load %arg6[%c0_11, %c0_12] : memref<128x128xf32, #tpu.memory_space<vmem>>, vector<128x128xf32>
      %cst_13 = arith.constant dense<0.000000e+00> : vector<128xf32>
      %15 = vector.multi_reduction <add>, %14, %cst_13 [0] : vector<128x128xf32> to vector<128xf32>
      %16 = vector.shape_cast %15 : vector<128xf32> to vector<1x128xf32>
      %17 = arith.mulf %14, %14 : vector<128x128xf32>
      %cst_14 = arith.constant dense<0.000000e+00> : vector<128xf32>
      %18 = vector.multi_reduction <add>, %17, %cst_14 [0] : vector<128x128xf32> to vector<128xf32>
      %19 = vector.shape_cast %18 : vector<128xf32> to vector<1x128xf32>
      %cst_15 = arith.constant 7.812500e-03 : f32
      %20 = vector.broadcast %cst_15 : f32 to vector<1x128xf32>
      %21 = arith.mulf %16, %20 : vector<1x128xf32>
      %cst_16 = arith.constant 7.812500e-03 : f32
      %22 = vector.broadcast %cst_16 : f32 to vector<1x128xf32>
      %23 = arith.mulf %19, %22 : vector<1x128xf32>
      %24 = arith.mulf %21, %21 : vector<1x128xf32>
      %25 = arith.subf %23, %24 : vector<1x128xf32>
      %26 = vector.broadcast %21 : vector<1x128xf32> to vector<128x128xf32>
      %27 = arith.subf %14, %26 : vector<128x128xf32>
      %cst_17 = arith.constant 9.99999974E-6 : f32
      %28 = vector.broadcast %cst_17 : f32 to vector<1x128xf32>
      %29 = arith.addf %25, %28 : vector<1x128xf32>
      %30 = math.rsqrt %29 : vector<1x128xf32>
      %31 = vector.broadcast %30 : vector<1x128xf32> to vector<128x128xf32>
      %32 = arith.mulf %27, %31 : vector<128x128xf32>
      %c0_18 = arith.constant 0 : index
      %c0_19 = arith.constant 0 : index
      %33 = vector.load %arg4[%c0_18, %c0_19] : memref<1x128xf32, #tpu.memory_space<vmem>>, vector<1x128xf32>
      %34 = vector.broadcast %33 : vector<1x128xf32> to vector<128x128xf32>
      %35 = arith.mulf %32, %34 : vector<128x128xf32>
      %c0_20 = arith.constant 0 : index
      %c0_21 = arith.constant 0 : index
      %36 = vector.load %arg5[%c0_20, %c0_21] : memref<1x128xf32, #tpu.memory_space<vmem>>, vector<1x128xf32>
      %37 = vector.broadcast %36 : vector<1x128xf32> to vector<128x128xf32>
      %38 = arith.addf %35, %37 : vector<128x128xf32>
      %cst_22 = arith.constant 0.000000e+00 : f32
      %39 = vector.broadcast %cst_22 : f32 to vector<128x128xf32>
      %40 = arith.maximumf %38, %39 : vector<128x128xf32>
      %c0_23 = arith.constant 0 : index
      %c0_24 = arith.constant 0 : index
      %41 = vector.load %arg6[%c0_23, %c0_24] : memref<128x128xf32, #tpu.memory_space<vmem>>, vector<128x128xf32>
      tpu.vector_store %arg6[%c0_23, %c0_24], %40 {strides = array<i32>} : memref<128x128xf32, #tpu.memory_space<vmem>>, vector<128x128xf32>,
    } else {
    }
    return
  }
  func.func @transform_0(%arg0: i32, %arg1: i32) -> (i32, i32, i32) {
    %c0_i32 = arith.constant 0 : i32
    %c0_i32_0 = arith.constant 0 : i32
    %c0_i32_1 = arith.constant 0 : i32
    return %arg1, %c0_i32, %c0_i32_0 : i32, i32, i32
  }
  func.func @transform_1(%arg0: i32, %arg1: i32) -> (i32, i32, i32) {
    %c0_i32 = arith.constant 0 : i32
    %c0_i32_0 = arith.constant 0 : i32
    return %arg1, %c0_i32, %arg0 : i32, i32, i32
  }
  func.func @transform_2(%arg0: i32, %arg1: i32) -> (i32, i32) {
    %c0_i32 = arith.constant 0 : i32
    %c0_i32_0 = arith.constant 0 : i32
    return %c0_i32, %arg0 : i32, i32
  }
  func.func @transform_3(%arg0: i32, %arg1: i32) -> (i32, i32) {
    %c0_i32 = arith.constant 0 : i32
    %c0_i32_0 = arith.constant 0 : i32
    return %c0_i32, %arg0 : i32, i32
  }
  func.func @transform_4(%arg0: i32, %arg1: i32) -> (i32, i32) {
    %c0_i32 = arith.constant 0 : i32
    %c0_i32_0 = arith.constant 0 : i32
    return %c0_i32, %arg0 : i32, i32
  }
}

module attributes {stable_mosaic.version = 11 : i64} {
  func.func @_conv_bn_kernel(%arg0: i32, %arg1: i32, %arg2: memref<1x32x128xbf16, #tpu.memory_space<vmem>>, %arg3: memref<1x128x256xbf16, #tpu.memory_space<vmem>>, %arg4: memref<1x256xf32, #tpu.memory_space<vmem>>, %arg5: memref<1x256xf32, #tpu.memory_space<vmem>>, %arg6: memref<32x256xf32, #tpu.memory_space<vmem>>) attributes {dimension_semantics = [#tpu.dimension_semantics<parallel>, #tpu.dimension_semantics<arbitrary>], iteration_bounds = array<i64: 1, 9>, scalar_prefetch = 0 : i64, scratch_operands = 0 : i64, tpu.core_type = #tpu.core_type<tc>, window_params = [{transform_indices = @transform_0, window_bounds = array<i64: 1, 32, 128>}, {transform_indices = @transform_1, window_bounds = array<i64: 1, 128, 256>}, {transform_indices = @transform_2, window_bounds = array<i64: 1, 256>}, {transform_indices = @transform_3, window_bounds = array<i64: 1, 256>}, {transform_indices = @transform_4, window_bounds = array<i64: 32, 256>}]} {
    %c0_i32 = arith.constant 0 : i32
    %0 = arith.cmpi eq, %arg1, %c0_i32 : i32
    %1 = arith.extui %0 : i1 to i32
    %c0_i32_0 = arith.constant 0 : i32
    %2 = arith.cmpi ne, %1, %c0_i32_0 : i32
    scf.if %2 {
      %cst_11 = arith.constant 0.000000e+00 : f32
      %14 = vector.broadcast %cst_11 : f32 to vector<32x256xf32>
      %c0_12 = arith.constant 0 : index
      %c0_13 = arith.constant 0 : index
      %15 = vector.load %arg6[%c0_12, %c0_13] : memref<32x256xf32, #tpu.memory_space<vmem>>, vector<32x256xf32>
      tpu.vector_store %arg6[%c0_12, %c0_13], %14 {strides = array<i32>} : memref<32x256xf32, #tpu.memory_space<vmem>>, vector<32x256xf32>,
    } else {
    }
    %c0 = arith.constant 0 : index
    %c0_1 = arith.constant 0 : index
    %3 = vector.load %arg6[%c0, %c0_1] : memref<32x256xf32, #tpu.memory_space<vmem>>, vector<32x256xf32>
    %c0_2 = arith.constant 0 : index
    %c0_3 = arith.constant 0 : index
    %c0_4 = arith.constant 0 : index
    %4 = vector.load %arg2[%c0_2, %c0_3, %c0_4] : memref<1x32x128xbf16, #tpu.memory_space<vmem>>, vector<1x32x128xbf16>
    %5 = vector.shape_cast %4 : vector<1x32x128xbf16> to vector<32x128xbf16>
    %c0_5 = arith.constant 0 : index
    %c0_6 = arith.constant 0 : index
    %c0_7 = arith.constant 0 : index
    %6 = vector.load %arg3[%c0_5, %c0_6, %c0_7] : memref<1x128x256xbf16, #tpu.memory_space<vmem>>, vector<1x128x256xbf16>
    %7 = vector.shape_cast %6 : vector<1x128x256xbf16> to vector<128x256xbf16>
    %cst = arith.constant dense<0.000000e+00> : vector<32x256xf32>
    %8 = tpu.matmul %5, %7, %cst {dimension_numbers = #tpu.dot_dimension_numbers<[1], [0], [0], [1], [0, 0, 1, 1], [], []>} : vector<32x128xbf16>, vector<128x256xbf16>, vector<32x256xf32> -> vector<32x256xf32>
    %9 = arith.addf %3, %8 : vector<32x256xf32>
    %c0_8 = arith.constant 0 : index
    %c0_9 = arith.constant 0 : index
    %10 = vector.load %arg6[%c0_8, %c0_9] : memref<32x256xf32, #tpu.memory_space<vmem>>, vector<32x256xf32>
    tpu.vector_store %arg6[%c0_8, %c0_9], %9 {strides = array<i32>} : memref<32x256xf32, #tpu.memory_space<vmem>>, vector<32x256xf32>,
    %c8_i32 = arith.constant 8 : i32
    %11 = arith.cmpi eq, %arg1, %c8_i32 : i32
    %12 = arith.extui %11 : i1 to i32
    %c0_i32_10 = arith.constant 0 : i32
    %13 = arith.cmpi ne, %12, %c0_i32_10 : i32
    scf.if %13 {
      %c0_11 = arith.constant 0 : index
      %c0_12 = arith.constant 0 : index
      %14 = vector.load %arg6[%c0_11, %c0_12] : memref<32x256xf32, #tpu.memory_space<vmem>>, vector<32x256xf32>
      %cst_13 = arith.constant dense<0.000000e+00> : vector<256xf32>
      %15 = vector.multi_reduction <add>, %14, %cst_13 [0] : vector<32x256xf32> to vector<256xf32>
      %16 = vector.shape_cast %15 : vector<256xf32> to vector<1x256xf32>
      %17 = arith.mulf %14, %14 : vector<32x256xf32>
      %cst_14 = arith.constant dense<0.000000e+00> : vector<256xf32>
      %18 = vector.multi_reduction <add>, %17, %cst_14 [0] : vector<32x256xf32> to vector<256xf32>
      %19 = vector.shape_cast %18 : vector<256xf32> to vector<1x256xf32>
      %cst_15 = arith.constant 3.125000e-02 : f32
      %20 = vector.broadcast %cst_15 : f32 to vector<1x256xf32>
      %21 = arith.mulf %16, %20 : vector<1x256xf32>
      %cst_16 = arith.constant 3.125000e-02 : f32
      %22 = vector.broadcast %cst_16 : f32 to vector<1x256xf32>
      %23 = arith.mulf %19, %22 : vector<1x256xf32>
      %24 = arith.mulf %21, %21 : vector<1x256xf32>
      %25 = arith.subf %23, %24 : vector<1x256xf32>
      %26 = vector.broadcast %21 : vector<1x256xf32> to vector<32x256xf32>
      %27 = arith.subf %14, %26 : vector<32x256xf32>
      %cst_17 = arith.constant 9.99999974E-6 : f32
      %28 = vector.broadcast %cst_17 : f32 to vector<1x256xf32>
      %29 = arith.addf %25, %28 : vector<1x256xf32>
      %30 = math.rsqrt %29 : vector<1x256xf32>
      %31 = vector.broadcast %30 : vector<1x256xf32> to vector<32x256xf32>
      %32 = arith.mulf %27, %31 : vector<32x256xf32>
      %c0_18 = arith.constant 0 : index
      %c0_19 = arith.constant 0 : index
      %33 = vector.load %arg4[%c0_18, %c0_19] : memref<1x256xf32, #tpu.memory_space<vmem>>, vector<1x256xf32>
      %34 = vector.broadcast %33 : vector<1x256xf32> to vector<32x256xf32>
      %35 = arith.mulf %32, %34 : vector<32x256xf32>
      %c0_20 = arith.constant 0 : index
      %c0_21 = arith.constant 0 : index
      %36 = vector.load %arg5[%c0_20, %c0_21] : memref<1x256xf32, #tpu.memory_space<vmem>>, vector<1x256xf32>
      %37 = vector.broadcast %36 : vector<1x256xf32> to vector<32x256xf32>
      %38 = arith.addf %35, %37 : vector<32x256xf32>
      %cst_22 = arith.constant 0.000000e+00 : f32
      %39 = vector.broadcast %cst_22 : f32 to vector<32x256xf32>
      %40 = arith.maximumf %38, %39 : vector<32x256xf32>
      %c0_23 = arith.constant 0 : index
      %c0_24 = arith.constant 0 : index
      %41 = vector.load %arg6[%c0_23, %c0_24] : memref<32x256xf32, #tpu.memory_space<vmem>>, vector<32x256xf32>
      tpu.vector_store %arg6[%c0_23, %c0_24], %40 {strides = array<i32>} : memref<32x256xf32, #tpu.memory_space<vmem>>, vector<32x256xf32>,
    } else {
    }
    return
  }
  func.func @transform_0(%arg0: i32, %arg1: i32) -> (i32, i32, i32) {
    %c0_i32 = arith.constant 0 : i32
    %c0_i32_0 = arith.constant 0 : i32
    %c0_i32_1 = arith.constant 0 : i32
    return %arg1, %c0_i32, %c0_i32_0 : i32, i32, i32
  }
  func.func @transform_1(%arg0: i32, %arg1: i32) -> (i32, i32, i32) {
    %c0_i32 = arith.constant 0 : i32
    %c0_i32_0 = arith.constant 0 : i32
    return %arg1, %c0_i32, %arg0 : i32, i32, i32
  }
  func.func @transform_2(%arg0: i32, %arg1: i32) -> (i32, i32) {
    %c0_i32 = arith.constant 0 : i32
    %c0_i32_0 = arith.constant 0 : i32
    return %c0_i32, %arg0 : i32, i32
  }
  func.func @transform_3(%arg0: i32, %arg1: i32) -> (i32, i32) {
    %c0_i32 = arith.constant 0 : i32
    %c0_i32_0 = arith.constant 0 : i32
    return %c0_i32, %arg0 : i32, i32
  }
  func.func @transform_4(%arg0: i32, %arg1: i32) -> (i32, i32) {
    %c0_i32 = arith.constant 0 : i32
    %c0_i32_0 = arith.constant 0 : i32
    return %c0_i32, %arg0 : i32, i32
  }
}

module attributes {stable_mosaic.version = 11 : i64} {
  func.func @_conv_bn_kernel(%arg0: i32, %arg1: i32, %arg2: memref<1x8x768xbf16, #tpu.memory_space<vmem>>, %arg3: memref<1x768x256xbf16, #tpu.memory_space<vmem>>, %arg4: memref<1x256xf32, #tpu.memory_space<vmem>>, %arg5: memref<1x256xf32, #tpu.memory_space<vmem>>, %arg6: memref<8x256xf32, #tpu.memory_space<vmem>>) attributes {dimension_semantics = [#tpu.dimension_semantics<parallel>, #tpu.dimension_semantics<arbitrary>], iteration_bounds = array<i64: 2, 9>, scalar_prefetch = 0 : i64, scratch_operands = 0 : i64, tpu.core_type = #tpu.core_type<tc>, window_params = [{transform_indices = @transform_0, window_bounds = array<i64: 1, 8, 768>}, {transform_indices = @transform_1, window_bounds = array<i64: 1, 768, 256>}, {transform_indices = @transform_2, window_bounds = array<i64: 1, 256>}, {transform_indices = @transform_3, window_bounds = array<i64: 1, 256>}, {transform_indices = @transform_4, window_bounds = array<i64: 8, 256>}]} {
    %c0_i32 = arith.constant 0 : i32
    %0 = arith.cmpi eq, %arg1, %c0_i32 : i32
    %1 = arith.extui %0 : i1 to i32
    %c0_i32_0 = arith.constant 0 : i32
    %2 = arith.cmpi ne, %1, %c0_i32_0 : i32
    scf.if %2 {
      %cst_11 = arith.constant 0.000000e+00 : f32
      %14 = vector.broadcast %cst_11 : f32 to vector<8x256xf32>
      %c0_12 = arith.constant 0 : index
      %c0_13 = arith.constant 0 : index
      %15 = vector.load %arg6[%c0_12, %c0_13] : memref<8x256xf32, #tpu.memory_space<vmem>>, vector<8x256xf32>
      tpu.vector_store %arg6[%c0_12, %c0_13], %14 {strides = array<i32>} : memref<8x256xf32, #tpu.memory_space<vmem>>, vector<8x256xf32>,
    } else {
    }
    %c0 = arith.constant 0 : index
    %c0_1 = arith.constant 0 : index
    %3 = vector.load %arg6[%c0, %c0_1] : memref<8x256xf32, #tpu.memory_space<vmem>>, vector<8x256xf32>
    %c0_2 = arith.constant 0 : index
    %c0_3 = arith.constant 0 : index
    %c0_4 = arith.constant 0 : index
    %4 = vector.load %arg2[%c0_2, %c0_3, %c0_4] : memref<1x8x768xbf16, #tpu.memory_space<vmem>>, vector<1x8x768xbf16>
    %5 = vector.shape_cast %4 : vector<1x8x768xbf16> to vector<8x768xbf16>
    %c0_5 = arith.constant 0 : index
    %c0_6 = arith.constant 0 : index
    %c0_7 = arith.constant 0 : index
    %6 = vector.load %arg3[%c0_5, %c0_6, %c0_7] : memref<1x768x256xbf16, #tpu.memory_space<vmem>>, vector<1x768x256xbf16>
    %7 = vector.shape_cast %6 : vector<1x768x256xbf16> to vector<768x256xbf16>
    %cst = arith.constant dense<0.000000e+00> : vector<8x256xf32>
    %8 = tpu.matmul %5, %7, %cst {dimension_numbers = #tpu.dot_dimension_numbers<[1], [0], [0], [1], [0, 0, 1, 1], [], []>} : vector<8x768xbf16>, vector<768x256xbf16>, vector<8x256xf32> -> vector<8x256xf32>
    %9 = arith.addf %3, %8 : vector<8x256xf32>
    %c0_8 = arith.constant 0 : index
    %c0_9 = arith.constant 0 : index
    %10 = vector.load %arg6[%c0_8, %c0_9] : memref<8x256xf32, #tpu.memory_space<vmem>>, vector<8x256xf32>
    tpu.vector_store %arg6[%c0_8, %c0_9], %9 {strides = array<i32>} : memref<8x256xf32, #tpu.memory_space<vmem>>, vector<8x256xf32>,
    %c8_i32 = arith.constant 8 : i32
    %11 = arith.cmpi eq, %arg1, %c8_i32 : i32
    %12 = arith.extui %11 : i1 to i32
    %c0_i32_10 = arith.constant 0 : i32
    %13 = arith.cmpi ne, %12, %c0_i32_10 : i32
    scf.if %13 {
      %c0_11 = arith.constant 0 : index
      %c0_12 = arith.constant 0 : index
      %14 = vector.load %arg6[%c0_11, %c0_12] : memref<8x256xf32, #tpu.memory_space<vmem>>, vector<8x256xf32>
      %cst_13 = arith.constant dense<0.000000e+00> : vector<256xf32>
      %15 = vector.multi_reduction <add>, %14, %cst_13 [0] : vector<8x256xf32> to vector<256xf32>
      %16 = vector.shape_cast %15 : vector<256xf32> to vector<1x256xf32>
      %17 = arith.mulf %14, %14 : vector<8x256xf32>
      %cst_14 = arith.constant dense<0.000000e+00> : vector<256xf32>
      %18 = vector.multi_reduction <add>, %17, %cst_14 [0] : vector<8x256xf32> to vector<256xf32>
      %19 = vector.shape_cast %18 : vector<256xf32> to vector<1x256xf32>
      %cst_15 = arith.constant 1.250000e-01 : f32
      %20 = vector.broadcast %cst_15 : f32 to vector<1x256xf32>
      %21 = arith.mulf %16, %20 : vector<1x256xf32>
      %cst_16 = arith.constant 1.250000e-01 : f32
      %22 = vector.broadcast %cst_16 : f32 to vector<1x256xf32>
      %23 = arith.mulf %19, %22 : vector<1x256xf32>
      %24 = arith.mulf %21, %21 : vector<1x256xf32>
      %25 = arith.subf %23, %24 : vector<1x256xf32>
      %26 = vector.broadcast %21 : vector<1x256xf32> to vector<8x256xf32>
      %27 = arith.subf %14, %26 : vector<8x256xf32>
      %cst_17 = arith.constant 9.99999974E-6 : f32
      %28 = vector.broadcast %cst_17 : f32 to vector<1x256xf32>
      %29 = arith.addf %25, %28 : vector<1x256xf32>
      %30 = math.rsqrt %29 : vector<1x256xf32>
      %31 = vector.broadcast %30 : vector<1x256xf32> to vector<8x256xf32>
      %32 = arith.mulf %27, %31 : vector<8x256xf32>
      %c0_18 = arith.constant 0 : index
      %c0_19 = arith.constant 0 : index
      %33 = vector.load %arg4[%c0_18, %c0_19] : memref<1x256xf32, #tpu.memory_space<vmem>>, vector<1x256xf32>
      %34 = vector.broadcast %33 : vector<1x256xf32> to vector<8x256xf32>
      %35 = arith.mulf %32, %34 : vector<8x256xf32>
      %c0_20 = arith.constant 0 : index
      %c0_21 = arith.constant 0 : index
      %36 = vector.load %arg5[%c0_20, %c0_21] : memref<1x256xf32, #tpu.memory_space<vmem>>, vector<1x256xf32>
      %37 = vector.broadcast %36 : vector<1x256xf32> to vector<8x256xf32>
      %38 = arith.addf %35, %37 : vector<8x256xf32>
      %cst_22 = arith.constant 0.000000e+00 : f32
      %39 = vector.broadcast %cst_22 : f32 to vector<8x256xf32>
      %40 = arith.maximumf %38, %39 : vector<8x256xf32>
      %c0_23 = arith.constant 0 : index
      %c0_24 = arith.constant 0 : index
      %41 = vector.load %arg6[%c0_23, %c0_24] : memref<8x256xf32, #tpu.memory_space<vmem>>, vector<8x256xf32>
      tpu.vector_store %arg6[%c0_23, %c0_24], %40 {strides = array<i32>} : memref<8x256xf32, #tpu.memory_space<vmem>>, vector<8x256xf32>,
    } else {
    }
    return
  }
  func.func @transform_0(%arg0: i32, %arg1: i32) -> (i32, i32, i32) {
    %c0_i32 = arith.constant 0 : i32
    %c0_i32_0 = arith.constant 0 : i32
    %c0_i32_1 = arith.constant 0 : i32
    return %arg1, %c0_i32, %c0_i32_0 : i32, i32, i32
  }
  func.func @transform_1(%arg0: i32, %arg1: i32) -> (i32, i32, i32) {
    %c0_i32 = arith.constant 0 : i32
    %c0_i32_0 = arith.constant 0 : i32
    return %arg1, %c0_i32, %arg0 : i32, i32, i32
  }
  func.func @transform_2(%arg0: i32, %arg1: i32) -> (i32, i32) {
    %c0_i32 = arith.constant 0 : i32
    %c0_i32_0 = arith.constant 0 : i32
    return %c0_i32, %arg0 : i32, i32
  }
  func.func @transform_3(%arg0: i32, %arg1: i32) -> (i32, i32) {
    %c0_i32 = arith.constant 0 : i32
    %c0_i32_0 = arith.constant 0 : i32
    return %c0_i32, %arg0 : i32, i32
  }
  func.func @transform_4(%arg0: i32, %arg1: i32) -> (i32, i32) {
    %c0_i32 = arith.constant 0 : i32
    %c0_i32_0 = arith.constant 0 : i32
    return %c0_i32, %arg0 : i32, i32
  }
}

module attributes {stable_mosaic.version = 11 : i64} {
  func.func @_conv_bn_kernel(%arg0: i32, %arg1: i32, %arg2: memref<1x8x768xbf16, #tpu.memory_space<vmem>>, %arg3: memref<1x768x256xbf16, #tpu.memory_space<vmem>>, %arg4: memref<1x256xf32, #tpu.memory_space<vmem>>, %arg5: memref<1x256xf32, #tpu.memory_space<vmem>>, %arg6: memref<8x256xf32, #tpu.memory_space<vmem>>) attributes {dimension_semantics = [#tpu.dimension_semantics<parallel>, #tpu.dimension_semantics<arbitrary>], iteration_bounds = array<i64: 2, 1>, scalar_prefetch = 0 : i64, scratch_operands = 0 : i64, tpu.core_type = #tpu.core_type<tc>, window_params = [{transform_indices = @transform_0, window_bounds = array<i64: 1, 8, 768>}, {transform_indices = @transform_1, window_bounds = array<i64: 1, 768, 256>}, {transform_indices = @transform_2, window_bounds = array<i64: 1, 256>}, {transform_indices = @transform_3, window_bounds = array<i64: 1, 256>}, {transform_indices = @transform_4, window_bounds = array<i64: 8, 256>}]} {
    %c0_i32 = arith.constant 0 : i32
    %0 = arith.cmpi eq, %arg1, %c0_i32 : i32
    %1 = arith.extui %0 : i1 to i32
    %c0_i32_0 = arith.constant 0 : i32
    %2 = arith.cmpi ne, %1, %c0_i32_0 : i32
    scf.if %2 {
      %cst_12 = arith.constant 0.000000e+00 : f32
      %14 = vector.broadcast %cst_12 : f32 to vector<8x256xf32>
      %c0_13 = arith.constant 0 : index
      %c0_14 = arith.constant 0 : index
      %15 = vector.load %arg6[%c0_13, %c0_14] : memref<8x256xf32, #tpu.memory_space<vmem>>, vector<8x256xf32>
      tpu.vector_store %arg6[%c0_13, %c0_14], %14 {strides = array<i32>} : memref<8x256xf32, #tpu.memory_space<vmem>>, vector<8x256xf32>,
    } else {
    }
    %c0 = arith.constant 0 : index
    %c0_1 = arith.constant 0 : index
    %3 = vector.load %arg6[%c0, %c0_1] : memref<8x256xf32, #tpu.memory_space<vmem>>, vector<8x256xf32>
    %c0_2 = arith.constant 0 : index
    %c0_3 = arith.constant 0 : index
    %c0_4 = arith.constant 0 : index
    %4 = vector.load %arg2[%c0_2, %c0_3, %c0_4] : memref<1x8x768xbf16, #tpu.memory_space<vmem>>, vector<1x8x768xbf16>
    %5 = vector.shape_cast %4 : vector<1x8x768xbf16> to vector<8x768xbf16>
    %c0_5 = arith.constant 0 : index
    %c0_6 = arith.constant 0 : index
    %c0_7 = arith.constant 0 : index
    %6 = vector.load %arg3[%c0_5, %c0_6, %c0_7] : memref<1x768x256xbf16, #tpu.memory_space<vmem>>, vector<1x768x256xbf16>
    %7 = vector.shape_cast %6 : vector<1x768x256xbf16> to vector<768x256xbf16>
    %cst = arith.constant dense<0.000000e+00> : vector<8x256xf32>
    %8 = tpu.matmul %5, %7, %cst {dimension_numbers = #tpu.dot_dimension_numbers<[1], [0], [0], [1], [0, 0, 1, 1], [], []>} : vector<8x768xbf16>, vector<768x256xbf16>, vector<8x256xf32> -> vector<8x256xf32>
    %9 = arith.addf %3, %8 : vector<8x256xf32>
    %c0_8 = arith.constant 0 : index
    %c0_9 = arith.constant 0 : index
    %10 = vector.load %arg6[%c0_8, %c0_9] : memref<8x256xf32, #tpu.memory_space<vmem>>, vector<8x256xf32>
    tpu.vector_store %arg6[%c0_8, %c0_9], %9 {strides = array<i32>} : memref<8x256xf32, #tpu.memory_space<vmem>>, vector<8x256xf32>,
    %c0_i32_10 = arith.constant 0 : i32
    %11 = arith.cmpi eq, %arg1, %c0_i32_10 : i32
    %12 = arith.extui %11 : i1 to i32
    %c0_i32_11 = arith.constant 0 : i32
    %13 = arith.cmpi ne, %12, %c0_i32_11 : i32
    scf.if %13 {
      %c0_12 = arith.constant 0 : index
      %c0_13 = arith.constant 0 : index
      %14 = vector.load %arg6[%c0_12, %c0_13] : memref<8x256xf32, #tpu.memory_space<vmem>>, vector<8x256xf32>
      %cst_14 = arith.constant dense<0.000000e+00> : vector<256xf32>
      %15 = vector.multi_reduction <add>, %14, %cst_14 [0] : vector<8x256xf32> to vector<256xf32>
      %16 = vector.shape_cast %15 : vector<256xf32> to vector<1x256xf32>
      %17 = arith.mulf %14, %14 : vector<8x256xf32>
      %cst_15 = arith.constant dense<0.000000e+00> : vector<256xf32>
      %18 = vector.multi_reduction <add>, %17, %cst_15 [0] : vector<8x256xf32> to vector<256xf32>
      %19 = vector.shape_cast %18 : vector<256xf32> to vector<1x256xf32>
      %cst_16 = arith.constant 1.250000e-01 : f32
      %20 = vector.broadcast %cst_16 : f32 to vector<1x256xf32>
      %21 = arith.mulf %16, %20 : vector<1x256xf32>
      %cst_17 = arith.constant 1.250000e-01 : f32
      %22 = vector.broadcast %cst_17 : f32 to vector<1x256xf32>
      %23 = arith.mulf %19, %22 : vector<1x256xf32>
      %24 = arith.mulf %21, %21 : vector<1x256xf32>
      %25 = arith.subf %23, %24 : vector<1x256xf32>
      %26 = vector.broadcast %21 : vector<1x256xf32> to vector<8x256xf32>
      %27 = arith.subf %14, %26 : vector<8x256xf32>
      %cst_18 = arith.constant 9.99999974E-6 : f32
      %28 = vector.broadcast %cst_18 : f32 to vector<1x256xf32>
      %29 = arith.addf %25, %28 : vector<1x256xf32>
      %30 = math.rsqrt %29 : vector<1x256xf32>
      %31 = vector.broadcast %30 : vector<1x256xf32> to vector<8x256xf32>
      %32 = arith.mulf %27, %31 : vector<8x256xf32>
      %c0_19 = arith.constant 0 : index
      %c0_20 = arith.constant 0 : index
      %33 = vector.load %arg4[%c0_19, %c0_20] : memref<1x256xf32, #tpu.memory_space<vmem>>, vector<1x256xf32>
      %34 = vector.broadcast %33 : vector<1x256xf32> to vector<8x256xf32>
      %35 = arith.mulf %32, %34 : vector<8x256xf32>
      %c0_21 = arith.constant 0 : index
      %c0_22 = arith.constant 0 : index
      %36 = vector.load %arg5[%c0_21, %c0_22] : memref<1x256xf32, #tpu.memory_space<vmem>>, vector<1x256xf32>
      %37 = vector.broadcast %36 : vector<1x256xf32> to vector<8x256xf32>
      %38 = arith.addf %35, %37 : vector<8x256xf32>
      %c0_23 = arith.constant 0 : index
      %c0_24 = arith.constant 0 : index
      %39 = vector.load %arg6[%c0_23, %c0_24] : memref<8x256xf32, #tpu.memory_space<vmem>>, vector<8x256xf32>
      tpu.vector_store %arg6[%c0_23, %c0_24], %38 {strides = array<i32>} : memref<8x256xf32, #tpu.memory_space<vmem>>, vector<8x256xf32>,
    } else {
    }
    return
  }
  func.func @transform_0(%arg0: i32, %arg1: i32) -> (i32, i32, i32) {
    %c0_i32 = arith.constant 0 : i32
    %c0_i32_0 = arith.constant 0 : i32
    %c0_i32_1 = arith.constant 0 : i32
    return %arg1, %c0_i32, %c0_i32_0 : i32, i32, i32
  }
  func.func @transform_1(%arg0: i32, %arg1: i32) -> (i32, i32, i32) {
    %c0_i32 = arith.constant 0 : i32
    %c0_i32_0 = arith.constant 0 : i32
    return %arg1, %c0_i32, %arg0 : i32, i32, i32
  }
  func.func @transform_2(%arg0: i32, %arg1: i32) -> (i32, i32) {
    %c0_i32 = arith.constant 0 : i32
    %c0_i32_0 = arith.constant 0 : i32
    return %c0_i32, %arg0 : i32, i32
  }
  func.func @transform_3(%arg0: i32, %arg1: i32) -> (i32, i32) {
    %c0_i32 = arith.constant 0 : i32
    %c0_i32_0 = arith.constant 0 : i32
    return %c0_i32, %arg0 : i32, i32
  }
  func.func @transform_4(%arg0: i32, %arg1: i32) -> (i32, i32) {
    %c0_i32 = arith.constant 0 : i32
    %c0_i32_0 = arith.constant 0 : i32
    return %c0_i32, %arg0 : i32, i32
  }
}

module attributes {stable_mosaic.version = 11 : i64} {
  func.func @_conv_bn_kernel(%arg0: i32, %arg1: i32, %arg2: memref<1x8x512xbf16, #tpu.memory_space<vmem>>, %arg3: memref<1x512x256xbf16, #tpu.memory_space<vmem>>, %arg4: memref<1x256xf32, #tpu.memory_space<vmem>>, %arg5: memref<1x256xf32, #tpu.memory_space<vmem>>, %arg6: memref<8x256xf32, #tpu.memory_space<vmem>>, %arg7: memref<8x256xf32, #tpu.memory_space<vmem>>) attributes {dimension_semantics = [#tpu.dimension_semantics<parallel>, #tpu.dimension_semantics<arbitrary>], iteration_bounds = array<i64: 2, 9>, scalar_prefetch = 0 : i64, scratch_operands = 0 : i64, tpu.core_type = #tpu.core_type<tc>, window_params = [{transform_indices = @transform_0, window_bounds = array<i64: 1, 8, 512>}, {transform_indices = @transform_1, window_bounds = array<i64: 1, 512, 256>}, {transform_indices = @transform_2, window_bounds = array<i64: 1, 256>}, {transform_indices = @transform_3, window_bounds = array<i64: 1, 256>}, {transform_indices = @transform_4, window_bounds = array<i64: 8, 256>}, {transform_indices = @transform_5, window_bounds = array<i64: 8, 256>}]} {
    %c0_i32 = arith.constant 0 : i32
    %0 = arith.cmpi eq, %arg1, %c0_i32 : i32
    %1 = arith.extui %0 : i1 to i32
    %c0_i32_0 = arith.constant 0 : i32
    %2 = arith.cmpi ne, %1, %c0_i32_0 : i32
    scf.if %2 {
      %cst_11 = arith.constant 0.000000e+00 : f32
      %14 = vector.broadcast %cst_11 : f32 to vector<8x256xf32>
      %c0_12 = arith.constant 0 : index
      %c0_13 = arith.constant 0 : index
      %15 = vector.load %arg7[%c0_12, %c0_13] : memref<8x256xf32, #tpu.memory_space<vmem>>, vector<8x256xf32>
      tpu.vector_store %arg7[%c0_12, %c0_13], %14 {strides = array<i32>} : memref<8x256xf32, #tpu.memory_space<vmem>>, vector<8x256xf32>,
    } else {
    }
    %c0 = arith.constant 0 : index
    %c0_1 = arith.constant 0 : index
    %3 = vector.load %arg7[%c0, %c0_1] : memref<8x256xf32, #tpu.memory_space<vmem>>, vector<8x256xf32>
    %c0_2 = arith.constant 0 : index
    %c0_3 = arith.constant 0 : index
    %c0_4 = arith.constant 0 : index
    %4 = vector.load %arg2[%c0_2, %c0_3, %c0_4] : memref<1x8x512xbf16, #tpu.memory_space<vmem>>, vector<1x8x512xbf16>
    %5 = vector.shape_cast %4 : vector<1x8x512xbf16> to vector<8x512xbf16>
    %c0_5 = arith.constant 0 : index
    %c0_6 = arith.constant 0 : index
    %c0_7 = arith.constant 0 : index
    %6 = vector.load %arg3[%c0_5, %c0_6, %c0_7] : memref<1x512x256xbf16, #tpu.memory_space<vmem>>, vector<1x512x256xbf16>
    %7 = vector.shape_cast %6 : vector<1x512x256xbf16> to vector<512x256xbf16>
    %cst = arith.constant dense<0.000000e+00> : vector<8x256xf32>
    %8 = tpu.matmul %5, %7, %cst {dimension_numbers = #tpu.dot_dimension_numbers<[1], [0], [0], [1], [0, 0, 1, 1], [], []>} : vector<8x512xbf16>, vector<512x256xbf16>, vector<8x256xf32> -> vector<8x256xf32>
    %9 = arith.addf %3, %8 : vector<8x256xf32>
    %c0_8 = arith.constant 0 : index
    %c0_9 = arith.constant 0 : index
    %10 = vector.load %arg7[%c0_8, %c0_9] : memref<8x256xf32, #tpu.memory_space<vmem>>, vector<8x256xf32>
    tpu.vector_store %arg7[%c0_8, %c0_9], %9 {strides = array<i32>} : memref<8x256xf32, #tpu.memory_space<vmem>>, vector<8x256xf32>,
    %c8_i32 = arith.constant 8 : i32
    %11 = arith.cmpi eq, %arg1, %c8_i32 : i32
    %12 = arith.extui %11 : i1 to i32
    %c0_i32_10 = arith.constant 0 : i32
    %13 = arith.cmpi ne, %12, %c0_i32_10 : i32
    scf.if %13 {
      %c0_11 = arith.constant 0 : index
      %c0_12 = arith.constant 0 : index
      %14 = vector.load %arg7[%c0_11, %c0_12] : memref<8x256xf32, #tpu.memory_space<vmem>>, vector<8x256xf32>
      %cst_13 = arith.constant dense<0.000000e+00> : vector<256xf32>
      %15 = vector.multi_reduction <add>, %14, %cst_13 [0] : vector<8x256xf32> to vector<256xf32>
      %16 = vector.shape_cast %15 : vector<256xf32> to vector<1x256xf32>
      %17 = arith.mulf %14, %14 : vector<8x256xf32>
      %cst_14 = arith.constant dense<0.000000e+00> : vector<256xf32>
      %18 = vector.multi_reduction <add>, %17, %cst_14 [0] : vector<8x256xf32> to vector<256xf32>
      %19 = vector.shape_cast %18 : vector<256xf32> to vector<1x256xf32>
      %cst_15 = arith.constant 1.250000e-01 : f32
      %20 = vector.broadcast %cst_15 : f32 to vector<1x256xf32>
      %21 = arith.mulf %16, %20 : vector<1x256xf32>
      %cst_16 = arith.constant 1.250000e-01 : f32
      %22 = vector.broadcast %cst_16 : f32 to vector<1x256xf32>
      %23 = arith.mulf %19, %22 : vector<1x256xf32>
      %24 = arith.mulf %21, %21 : vector<1x256xf32>
      %25 = arith.subf %23, %24 : vector<1x256xf32>
      %26 = vector.broadcast %21 : vector<1x256xf32> to vector<8x256xf32>
      %27 = arith.subf %14, %26 : vector<8x256xf32>
      %cst_17 = arith.constant 9.99999974E-6 : f32
      %28 = vector.broadcast %cst_17 : f32 to vector<1x256xf32>
      %29 = arith.addf %25, %28 : vector<1x256xf32>
      %30 = math.rsqrt %29 : vector<1x256xf32>
      %31 = vector.broadcast %30 : vector<1x256xf32> to vector<8x256xf32>
      %32 = arith.mulf %27, %31 : vector<8x256xf32>
      %c0_18 = arith.constant 0 : index
      %c0_19 = arith.constant 0 : index
      %33 = vector.load %arg4[%c0_18, %c0_19] : memref<1x256xf32, #tpu.memory_space<vmem>>, vector<1x256xf32>
      %34 = vector.broadcast %33 : vector<1x256xf32> to vector<8x256xf32>
      %35 = arith.mulf %32, %34 : vector<8x256xf32>
      %c0_20 = arith.constant 0 : index
      %c0_21 = arith.constant 0 : index
      %36 = vector.load %arg5[%c0_20, %c0_21] : memref<1x256xf32, #tpu.memory_space<vmem>>, vector<1x256xf32>
      %37 = vector.broadcast %36 : vector<1x256xf32> to vector<8x256xf32>
      %38 = arith.addf %35, %37 : vector<8x256xf32>
      %c0_22 = arith.constant 0 : index
      %c0_23 = arith.constant 0 : index
      %39 = vector.load %arg6[%c0_22, %c0_23] : memref<8x256xf32, #tpu.memory_space<vmem>>, vector<8x256xf32>
      %40 = arith.addf %38, %39 : vector<8x256xf32>
      %cst_24 = arith.constant 0.000000e+00 : f32
      %41 = vector.broadcast %cst_24 : f32 to vector<8x256xf32>
      %42 = arith.maximumf %40, %41 : vector<8x256xf32>
      %c0_25 = arith.constant 0 : index
      %c0_26 = arith.constant 0 : index
      %43 = vector.load %arg7[%c0_25, %c0_26] : memref<8x256xf32, #tpu.memory_space<vmem>>, vector<8x256xf32>
      tpu.vector_store %arg7[%c0_25, %c0_26], %42 {strides = array<i32>} : memref<8x256xf32, #tpu.memory_space<vmem>>, vector<8x256xf32>,
    } else {
    }
    return
  }
  func.func @transform_0(%arg0: i32, %arg1: i32) -> (i32, i32, i32) {
    %c0_i32 = arith.constant 0 : i32
    %c0_i32_0 = arith.constant 0 : i32
    %c0_i32_1 = arith.constant 0 : i32
    return %arg1, %c0_i32, %c0_i32_0 : i32, i32, i32
  }
  func.func @transform_1(%arg0: i32, %arg1: i32) -> (i32, i32, i32) {
    %c0_i32 = arith.constant 0 : i32
    %c0_i32_0 = arith.constant 0 : i32
    return %arg1, %c0_i32, %arg0 : i32, i32, i32
  }
  func.func @transform_2(%arg0: i32, %arg1: i32) -> (i32, i32) {
    %c0_i32 = arith.constant 0 : i32
    %c0_i32_0 = arith.constant 0 : i32
    return %c0_i32, %arg0 : i32, i32
  }
  func.func @transform_3(%arg0: i32, %arg1: i32) -> (i32, i32) {
    %c0_i32 = arith.constant 0 : i32
    %c0_i32_0 = arith.constant 0 : i32
    return %c0_i32, %arg0 : i32, i32
  }
  func.func @transform_4(%arg0: i32, %arg1: i32) -> (i32, i32) {
    %c0_i32 = arith.constant 0 : i32
    %c0_i32_0 = arith.constant 0 : i32
    return %c0_i32, %arg0 : i32, i32
  }
  func.func @transform_5(%arg0: i32, %arg1: i32) -> (i32, i32) {
    %c0_i32 = arith.constant 0 : i32
    %c0_i32_0 = arith.constant 0 : i32
    return %c0_i32, %arg0 : i32, i32
  }
}

</mosaic_0001>

<llo_original>
// kernel: bn_layer_forward.6
$region0: #{bn_layer_forward.6}
  #allocation0 [shape = 'u32[]', space=smem, size = 0x4, offset = 0x4, fixed_abs, tag = 'smem constant byte address 0x4 - core index']
  #allocation1 [shape = 'u32[72,128]{1,0:T(1,128)}', space=vmem, size = 0x9000, scoped, tag = 'internal scratch']
  %s0 = inlined_call_operand.vmem [shape: bf16[9,128,64], index: 0, kind: input, shape index: {}]
  %s1 = inlined_call_operand.hbm [shape: bf16[9,64,128], index: 1, kind: input, shape index: {}]
  %s2 = inlined_call_operand.hbm [shape: f32[1,128], index: 2, kind: input, shape index: {}]
  %s3 = inlined_call_operand.hbm [shape: f32[1,128], index: 3, kind: input, shape index: {}]
  %s4 = inlined_call_operand.vmem [shape: f32[128,128], index: 4, kind: output, shape index: {}]
  %s5 = sld [smem:[#allocation0]]
  $region69: #{bn_layer_forward.6} parent=0
    _
  %s7 = ssub.s32 1, %s5
  %s8 = scalar_select 0, %s7, %s5
  $region1: #{bn_layer_forward.6} parent=0
    #allocation2 [shape = 'u8[32768]{0}', space=vmem, size = 0x8000, scoped, tag = 'input window, operand 1']
    #allocation3 [shape = 's32[2]{0}', space=sflag, size = 0x8, scoped, tag = 'scoped memory for bn_layer_forward.6']
    #allocation4 [shape = 'u8[512]{0}', space=vmem, size = 0x400, scoped, tag = 'input window, operand 2, single buffered']
    #allocation5 [shape = 's32[1]{0}', space=sflag, size = 0x4, scoped, tag = 'scoped memory for bn_layer_forward.6']
    #allocation6 [shape = 'u8[512]{0}', space=vmem, size = 0x400, scoped, tag = 'input window, operand 3, single buffered']
    %9 = vsyncpa [#allocation3], 0
    %s10 = scalar_lea.sflag [#allocation3], 1
    %11 = vsyncpa %s10, 0
    %12 = vsyncpa [#allocation5], 0
    loop: start=0, step=1, limit=11
    $region2: #{bn_layer_forward.6} parent=1 // loop_pre_header
      _
    $region3: #{bn_layer_forward.6} parent=1 // loop_header
      %s14 = sphi 0, %s18
      %p15 = scmp.ge.s32.totalorder %s14, 11
      %s21 = sphi 0, %s33
      %s22 = sphi 0, %s29
      %s23 = sphi 0, %s21
      %s24 = sphi 0, %s22
      %s25 = sphi 0, %s23
      %s26 = sphi 0, %s24
      %s36 = sphi 0, %s38
      %s39 = sphi 0, %s36
      %s40 = sphi 0, %s39
      %s56 = sphi 0, %s40
      %s64 = sphi 0, %s66
      %s67 = sphi 0, %s64
      %s68 = sphi 0, %s67
      %s84 = sphi 0, %s68
      %s90 = sphi 0, %s92
      %s93 = sphi 0, %s90
      %s94 = sphi 0, %s93
      %s110 = sphi 0, %s94
      %s116 = sphi 0, %s118
      %s119 = sphi 0, %s116
      %s120 = sphi 0, %s119
      %s136 = sphi 0, %s120
      %s142 = sphi 0, %s144
      %s145 = sphi 0, %s142
      %s146 = sphi 0, %s145
      %s162 = sphi 0, %s146
    $region4: #{bn_layer_forward.6} parent=1 // loop_header_branch
      %17 = sbr.rel (%p15) target = $region8
    $region5: #{bn_layer_forward.6} parent=1 // loop_body
      %s19 = ssub.s32 %s14, 1
      %s20 = ssub.s32 %s14, 2
      %s27 = sadd.s32 1, %s22
      %p28 = scmp.ge.s32.totalorder %s27, 9
      %s29 = scalar_select %p28, 0, %s27
      %s30 = sadd.s32 1, %s21
      %s31 = scalar_select %p28, %s30, %s21
      %p32 = scmp.ge.s32.totalorder %s31, 1
      %s33 = scalar_select %p32, 0, %s31
      %s34 = ssub.s32 %s22, %s29
      %p35 = scmp.eq.s32.totalorder %s34, 0
      %s37 = sadd.s32 %s36, 1
      %s38 = scalar_select %p35, %s36, %s37
      %p41 = pneg %p35
      %p42 = scmp.eq.s32.totalorder %s14, 8
      %p43 = por %p41, %p42
      %p44 = scmp.ne.s32.totalorder %s36, %s39
      %p45 = scmp.eq.s32.totalorder %s14, 0
      %p46 = por %p44, %p45
      %p47 = scmp.ne.s32.totalorder %s36, %s39
      %p48 = scmp.eq.s32.totalorder %s19, 8
      %p49 = por %p47, %p48
      %p50 = scmp.ne.s32.totalorder %s39, %s40
      %p51 = scmp.eq.s32.totalorder %s19, 0
      %p52 = por %p50, %p51
      %p53 = scmp.ne.s32.totalorder %s39, %s40
      %p54 = scmp.eq.s32.totalorder %s20, 8
      %p55 = por %p53, %p54
      %p57 = scmp.ne.s32.totalorder %s40, %s56
      %p58 = scmp.eq.s32.totalorder %s20, 0
      %p59 = por %p57, %p58
      %s60 = ssub.s32 %s22, %s29
      %s61 = ssub.s32 %s21, %s33
      %s62 = sor.u32 %s60, %s61
      %p63 = scmp.eq.s32.totalorder %s62, 0
      %s65 = sadd.s32 %s64, 1
      %s66 = scalar_select %p63, %s64, %s65
      %p69 = pneg %p63
      %p70 = scmp.eq.s32.totalorder %s14, 8
      %p71 = por %p69, %p70
      %p72 = scmp.ne.s32.totalorder %s64, %s67
      %p73 = scmp.eq.s32.totalorder %s14, 0
      %p74 = por %p72, %p73
      %p75 = scmp.ne.s32.totalorder %s64, %s67
      %p76 = scmp.eq.s32.totalorder %s19, 8
      %p77 = por %p75, %p76
      %p78 = scmp.ne.s32.totalorder %s67, %s68
      %p79 = scmp.eq.s32.totalorder %s19, 0
      %p80 = por %p78, %p79
      %p81 = scmp.ne.s32.totalorder %s67, %s68
      %p82 = scmp.eq.s32.totalorder %s20, 8
      %p83 = por %p81, %p82
      %p85 = scmp.ne.s32.totalorder %s68, %s84
      %p86 = scmp.eq.s32.totalorder %s20, 0
      %p87 = por %p85, %p86
      %s88 = ssub.s32 %s21, %s33
      %p89 = scmp.eq.s32.totalorder %s88, 0
      %s91 = sadd.s32 %s90, 1
      %s92 = scalar_select %p89, %s90, %s91
      %p95 = pneg %p89
      %p96 = scmp.eq.s32.totalorder %s14, 8
      %p97 = por %p95, %p96
      %p98 = scmp.ne.s32.totalorder %s90, %s93
      %p99 = scmp.eq.s32.totalorder %s14, 0
      %p100 = por %p98, %p99
      %p101 = scmp.ne.s32.totalorder %s90, %s93
      %p102 = scmp.eq.s32.totalorder %s19, 8
      %p103 = por %p101, %p102
      %p104 = scmp.ne.s32.totalorder %s93, %s94
      %p105 = scmp.eq.s32.totalorder %s19, 0
      %p106 = por %p104, %p105
      %p107 = scmp.ne.s32.totalorder %s93, %s94
      %p108 = scmp.eq.s32.totalorder %s20, 8
      %p109 = por %p107, %p108
      %p111 = scmp.ne.s32.totalorder %s94, %s110
      %p112 = scmp.eq.s32.totalorder %s20, 0
      %p113 = por %p111, %p112
      %s114 = ssub.s32 %s21, %s33
      %p115 = scmp.eq.s32.totalorder %s114, 0
      %s117 = sadd.s32 %s116, 1
      %s118 = scalar_select %p115, %s116, %s117
      %p121 = pneg %p115
      %p122 = scmp.eq.s32.totalorder %s14, 8
      %p123 = por %p121, %p122
      %p124 = scmp.ne.s32.totalorder %s116, %s119
      %p125 = scmp.eq.s32.totalorder %s14, 0
      %p126 = por %p124, %p125
      %p127 = scmp.ne.s32.totalorder %s116, %s119
      %p128 = scmp.eq.s32.totalorder %s19, 8
      %p129 = por %p127, %p128
      %p130 = scmp.ne.s32.totalorder %s119, %s120
      %p131 = scmp.eq.s32.totalorder %s19, 0
      %p132 = por %p130, %p131
      %p133 = scmp.ne.s32.totalorder %s119, %s120
      %p134 = scmp.eq.s32.totalorder %s20, 8
      %p135 = por %p133, %p134
      %p137 = scmp.ne.s32.totalorder %s120, %s136
      %p138 = scmp.eq.s32.totalorder %s20, 0
      %p139 = por %p137, %p138
      %s140 = ssub.s32 %s21, %s33
      %p141 = scmp.eq.s32.totalorder %s140, 0
      %s143 = sadd.s32 %s142, 1
      %s144 = scalar_select %p141, %s142, %s143
      %p147 = pneg %p141
      %p148 = scmp.eq.s32.totalorder %s14, 8
      %p149 = por %p147, %p148
      %p150 = scmp.ne.s32.totalorder %s142, %s145
      %p151 = scmp.eq.s32.totalorder %s14, 0
      %p152 = por %p150, %p151
      %p153 = scmp.ne.s32.totalorder %s142, %s145
      %p154 = scmp.eq.s32.totalorder %s19, 8
      %p155 = por %p153, %p154
      %p156 = scmp.ne.s32.totalorder %s145, %s146
      %p157 = scmp.eq.s32.totalorder %s19, 0
      %p158 = por %p156, %p157
      %p159 = scmp.ne.s32.totalorder %s145, %s146
      %p160 = scmp.eq.s32.totalorder %s20, 8
      %p161 = por %p159, %p160
      %p163 = scmp.ne.s32.totalorder %s146, %s162
      %p164 = scmp.eq.s32.totalorder %s20, 0
      %p165 = por %p163, %p164
      %p166 = scmp.le.s32.totalorder 1, %s14
      %p167 = scmp.lt.s32.totalorder %s14, 10
      %p168 = pnand %p166, %p167
      %p169 = pneg %p168
      // Predicated region
      $region9: #{bn_layer_forward.6} parent=5 // pred_check
        _
      $region10: #{bn_layer_forward.6} parent=5 // pred_check_branch
        %171 = sbr.rel (%p168) target = $region12
      $region11: #{bn_layer_forward.6} parent=5 // pred_region
        %s172 = ssub.s32 %s14, 1
        // Predicated region
        $region13: #{bn_layer_forward.6} parent=11 // pred_check
          %p173 = pneg %p106
        $region14: #{bn_layer_forward.6} parent=11 // pred_check_branch
          %175 = sbr.rel (%p173) target = $region16
        $region15: #{bn_layer_forward.6} parent=11 // pred_region
          %177 = vsyncadd [#allocation5], 0
          %s178 = scalar_lea.hbm %s2, %s23
          %s180 = sshll.u32 %s178, 4
          %s181 = int_to_ptr.hbm [resolvable:$true] %s180
          %s182 = sshll.u32 [#allocation4], 4
          %s183 = int_to_ptr.vmem [resolvable:$true] %s182
          %185 = dma.hbm_to_vmem [thread:$0]  %s181, 16, %s183, [#allocation5]
        $region16: #{bn_layer_forward.6} parent=11 // pred_fallthru
          _
        // Predicated region
        $region17: #{bn_layer_forward.6} parent=11 // pred_check
          %p186 = pneg %p132
        $region18: #{bn_layer_forward.6} parent=11 // pred_check_branch
          %188 = sbr.rel (%p186) target = $region20
        $region19: #{bn_layer_forward.6} parent=11 // pred_region
          %190 = vsyncadd [#allocation5], 0
          %s191 = scalar_lea.hbm %s3, %s23
          %s193 = sshll.u32 %s191, 4
          %s194 = int_to_ptr.hbm [resolvable:$true] %s193
          %s195 = sshll.u32 [#allocation6], 4
          %s196 = int_to_ptr.vmem [resolvable:$true] %s195
          %198 = dma.hbm_to_vmem [thread:$0]  %s194, 16, %s196, [#allocation5]
        $region20: #{bn_layer_forward.6} parent=11 // pred_fallthru
          _
      $region12: #{bn_layer_forward.6} parent=5 // pred_fallthru
        _
      %p199 = scmp.lt.s32.totalorder %s14, 9
      // Predicated region
      $region21: #{bn_layer_forward.6} parent=5 // pred_check
        %p200 = pneg %p199
      $region22: #{bn_layer_forward.6} parent=5 // pred_check_branch
        %202 = sbr.rel (%p200) target = $region24
      $region23: #{bn_layer_forward.6} parent=5 // pred_region
        // Predicated region
        $region25: #{bn_layer_forward.6} parent=23 // pred_check
          %p203 = pneg %p46
        $region26: #{bn_layer_forward.6} parent=23 // pred_check_branch
          %205 = sbr.rel (%p203) target = $region28
        $region27: #{bn_layer_forward.6} parent=23 // pred_region
          %p206 = scmp.lt.s32.totalorder %s22, 8
          %s207 = scalar_select %p206, %s22, 8
          %s208 = smul.addr %s207, 16
          %s209 = smul.addr %s208, 4
          %s210 = scalar_lea.vmem %s0, %s209
        $region28: #{bn_layer_forward.6} parent=23 // pred_fallthru
          _
        // Predicated region
        $region29: #{bn_layer_forward.6} parent=23 // pred_check
          %p211 = pneg %p74
        $region30: #{bn_layer_forward.6} parent=23 // pred_check_branch
          %213 = sbr.rel (%p211) target = $region32
        $region31: #{bn_layer_forward.6} parent=23 // pred_region
          %s214 = sand.u32 %s64, 1
          %s215 = scalar_lea.sflag [#allocation3], %s214
          %s216 = sand.u32 %s64, 1
          %s217 = smul.addr %s216, 32
          %s218 = scalar_lea.vmem [#allocation2], %s217
          %220 = vsyncadd %s215, 0
          %s221 = smul.addr %s22, 8
          %s222 = sadd.s32 %s21, %s221
          %s223 = smul.addr %s222, 4
          %s224 = scalar_lea.hbm %s1, %s223
          %s225 = sshll.u32 %s224, 4
          %s226 = int_to_ptr.hbm [resolvable:$true] %s225
          %s227 = sshll.u32 %s218, 4
          %s228 = int_to_ptr.vmem [resolvable:$true] %s227
          %233 = dma.hbm_to_vmem [thread:$0]  %s226, 512, %s228, %s215, 64, 64, 4
        $region32: #{bn_layer_forward.6} parent=23 // pred_fallthru
          _
      $region24: #{bn_layer_forward.6} parent=5 // pred_fallthru
        _
      %p234 = scmp.le.s32.totalorder 1, %s14
      %p235 = scmp.lt.s32.totalorder %s14, 10
      %p236 = pnand %p234, %p235
      %p237 = pneg %p236
      // Predicated region
      $region33: #{bn_layer_forward.6} parent=5 // pred_check
        _
      $region34: #{bn_layer_forward.6} parent=5 // pred_check_branch
        %239 = sbr.rel (%p236) target = $region36
      $region35: #{bn_layer_forward.6} parent=5 // pred_region
        %s240 = ssub.s32 %s14, 1
        %s241 = sand.u32 %s67, 1
        %s242 = scalar_lea.sflag [#allocation3], %s241
        %s243 = sand.u32 %s67, 1
        %s244 = smul.addr %s243, 32
        %s245 = scalar_lea.vmem [#allocation2], %s244
        // Predicated region
        $region37: #{bn_layer_forward.6} parent=35 // pred_check
          %p246 = pneg %p80
        $region38: #{bn_layer_forward.6} parent=35 // pred_check_branch
          %248 = sbr.rel (%p246) target = $region40
        $region39: #{bn_layer_forward.6} parent=35 // pred_region
          %250 = dma.done %s242, 512
        $region40: #{bn_layer_forward.6} parent=35 // pred_fallthru
          _
        // Predicated region
        $region41: #{bn_layer_forward.6} parent=35 // pred_check
          %p251 = pneg %p106
        $region42: #{bn_layer_forward.6} parent=35 // pred_check_branch
          %253 = sbr.rel (%p251) target = $region44
        $region43: #{bn_layer_forward.6} parent=35 // pred_region
          %255 = dma.done [#allocation5], 16
        $region44: #{bn_layer_forward.6} parent=35 // pred_fallthru
          _
        // Predicated region
        $region45: #{bn_layer_forward.6} parent=35 // pred_check
          %p256 = pneg %p132
        $region46: #{bn_layer_forward.6} parent=35 // pred_check_branch
          %258 = sbr.rel (%p256) target = $region48
        $region47: #{bn_layer_forward.6} parent=35 // pred_region
          %260 = dma.done [#allocation5], 16
        $region48: #{bn_layer_forward.6} parent=35 // pred_fallthru
          _
        %p261 = scmp.lt.s32.totalorder %s24, 8
        %s262 = scalar_select %p261, %s24, 8
        %s263 = smul.addr %s262, 16
        %s264 = smul.addr %s263, 4
        %s265 = scalar_lea.vmem %s0, %s264
        %p266 = pneg %p52
        %p267 = pneg %p49
        %s268 = sand.u32 %s67, 1
        %s269 = scalar_lea.sflag [#allocation3], %s268
        %s270 = sand.u32 %s67, 1
        %s271 = smul.addr %s270, 32
        %s272 = scalar_lea.vmem [#allocation2], %s271
        %p273 = pneg %p80
        %p274 = pneg %p77
        %p275 = pneg %p106
        %p276 = pneg %p103
        %p277 = pneg %p132
        %p278 = pneg %p129
        %p279 = pneg %p158
        %p280 = pneg %p155
        %p281 = scmp.lt.s32.totalorder %s23, 0
        %s282 = scalar_select %p281, %s23, 0
        %s283 = smul.addr %s282, 8
        %s284 = scalar_lea.vmem %s4, %s283
        %p285 = scmp.lt.s32.totalorder %s24, 8
        %s286 = scalar_select %p285, %s24, 8
        %s287 = smul.addr %s286, 16
        %s288 = smul.addr %s287, 4
        %s289 = scalar_lea.vmem %s0, %s288
        %p290 = scmp.lt.s32.totalorder %s23, 0
        %s291 = scalar_select %p290, %s23, 0
        %s292 = smul.addr %s291, 8
        %s293 = scalar_lea.vmem %s4, %s292
        %p295 = scmp.eq.s32.totalorder %s24, 0
        // Predicated region
        $region49: #{bn_layer_forward.6} parent=35 // pred_check
          %p296 = pneg %p295
        $region50: #{bn_layer_forward.6} parent=35 // pred_check_branch
          %298 = sbr.rel (%p296) target = $region52
        $region51: #{bn_layer_forward.6} parent=35 // pred_region
          %299 = vst [vmem:[%s293] sm:$0xff] 0.0
          %300 = vst [vmem:[%s293 + $0x8] sm:$0xff] 0.0
          %301 = vst [vmem:[%s293 + $0x10] sm:$0xff] 0.0
          %302 = vst [vmem:[%s293 + $0x18] sm:$0xff] 0.0
          %303 = vst [vmem:[%s293 + $0x20] sm:$0xff] 0.0
          %304 = vst [vmem:[%s293 + $0x28] sm:$0xff] 0.0
          %305 = vst [vmem:[%s293 + $0x30] sm:$0xff] 0.0
          %306 = vst [vmem:[%s293 + $0x38] sm:$0xff] 0.0
          %307 = vst [vmem:[%s293 + $0x40] sm:$0xff] 0.0
          %308 = vst [vmem:[%s293 + $0x48] sm:$0xff] 0.0
          %309 = vst [vmem:[%s293 + $0x50] sm:$0xff] 0.0
          %310 = vst [vmem:[%s293 + $0x58] sm:$0xff] 0.0
          %311 = vst [vmem:[%s293 + $0x60] sm:$0xff] 0.0
          %312 = vst [vmem:[%s293 + $0x68] sm:$0xff] 0.0
          %313 = vst [vmem:[%s293 + $0x70] sm:$0xff] 0.0
          %314 = vst [vmem:[%s293 + $0x78] sm:$0xff] 0.0
        $region52: #{bn_layer_forward.6} parent=35 // pred_fallthru
          _
        %v315 = vld [vmem:[%s293] sm:$0xff]
        %v316 = vld [vmem:[%s293 + $0x8] sm:$0xff]
        %v317 = vld [vmem:[%s293 + $0x10] sm:$0xff]
        %v318 = vld [vmem:[%s293 + $0x18] sm:$0xff]
        %v319 = vld [vmem:[%s293 + $0x20] sm:$0xff]
        %v320 = vld [vmem:[%s293 + $0x28] sm:$0xff]
        %v321 = vld [vmem:[%s293 + $0x30] sm:$0xff]
        %v322 = vld [vmem:[%s293 + $0x38] sm:$0xff]
        %v323 = vld [vmem:[%s293 + $0x40] sm:$0xff]
        %v324 = vld [vmem:[%s293 + $0x48] sm:$0xff]
        %v325 = vld [vmem:[%s293 + $0x50] sm:$0xff]
        %v326 = vld [vmem:[%s293 + $0x58] sm:$0xff]
        %v327 = vld [vmem:[%s293 + $0x60] sm:$0xff]
        %v328 = vld [vmem:[%s293 + $0x68] sm:$0xff]
        %v329 = vld [vmem:[%s293 + $0x70] sm:$0xff]
        %v330 = vld [vmem:[%s293 + $0x78] sm:$0xff]
        %v331 = vld [vmem:[%s289] sm:$0xf]
        %v332 = vld [vmem:[%s289 + $0x4] sm:$0xf]
        %v333 = vld [vmem:[%s289 + $0x8] sm:$0xf]
        %v334 = vld [vmem:[%s289 + $0xc] sm:$0xf]
        %v335 = vld [vmem:[%s289 + $0x10] sm:$0xf]
        %v336 = vld [vmem:[%s289 + $0x14] sm:$0xf]
        %v337 = vld [vmem:[%s289 + $0x18] sm:$0xf]
        %v338 = vld [vmem:[%s289 + $0x1c] sm:$0xf]
        %v339 = vld [vmem:[%s289 + $0x20] sm:$0xf]
        %v340 = vld [vmem:[%s289 + $0x24] sm:$0xf]
        %v341 = vld [vmem:[%s289 + $0x28] sm:$0xf]
        %v342 = vld [vmem:[%s289 + $0x2c] sm:$0xf]
        %v343 = vld [vmem:[%s289 + $0x30] sm:$0xf]
        %v344 = vld [vmem:[%s289 + $0x34] sm:$0xf]
        %v345 = vld [vmem:[%s289 + $0x38] sm:$0xf]
        %v346 = vld [vmem:[%s289 + $0x3c] sm:$0xf]
        %v347 = vld [vmem:[%s245] sm:$0xf]
        %v348 = vld [vmem:[%s245 + $0x4] sm:$0xf]
        %v349 = vld [vmem:[%s245 + $0x8] sm:$0xf]
        %v350 = vld [vmem:[%s245 + $0xc] sm:$0xf]
        %v351 = vld [vmem:[%s245 + $0x10] sm:$0xf]
        %v352 = vld [vmem:[%s245 + $0x14] sm:$0xf]
        %v353 = vld [vmem:[%s245 + $0x18] sm:$0xf]
        %v354 = vld [vmem:[%s245 + $0x1c] sm:$0xf]
        %v371 = vunpack.c.l.b16 %v331
        %v372 = vunpack.c.l.b16 %v332
        %v373 = vunpack.c.l.b16 %v333
        %v374 = vunpack.c.l.b16 %v334
        %v375 = vunpack.c.l.b16 %v335
        %v376 = vunpack.c.l.b16 %v336
        %v377 = vunpack.c.l.b16 %v337
        %v378 = vunpack.c.l.b16 %v338
        %v379 = vunpack.c.l.b16 %v339
        %v380 = vunpack.c.l.b16 %v340
        %v381 = vunpack.c.l.b16 %v341
        %v382 = vunpack.c.l.b16 %v342
        %v383 = vunpack.c.l.b16 %v343
        %v384 = vunpack.c.l.b16 %v344
        %v385 = vunpack.c.l.b16 %v345
        %v386 = vunpack.c.l.b16 %v346
        %v387 = vpack.c.b16 %v372, %v371
        %v388 = vpack.c.b16 %v374, %v373
        %v389 = vpack.c.b16 %v376, %v375
        %v390 = vpack.c.b16 %v378, %v377
        %v391 = vpack.c.b16 %v380, %v379
        %v392 = vpack.c.b16 %v382, %v381
        %v393 = vpack.c.b16 %v384, %v383
        %v394 = vpack.c.b16 %v386, %v385
        %v403 = vunpack.c.l.b16 %v347
        %v404 = vunpack.c.l.b16 %v348
        %v405 = vunpack.c.l.b16 %v349
        %v406 = vunpack.c.l.b16 %v350
        %v407 = vunpack.c.l.b16 %v351
        %v408 = vunpack.c.l.b16 %v352
        %v409 = vunpack.c.l.b16 %v353
        %v410 = vunpack.c.l.b16 %v354
        %v411 = vpack.c.b16 %v404, %v403
        %v412 = vpack.c.b16 %v406, %v405
        %v413 = vpack.c.b16 %v408, %v407
        %v414 = vpack.c.b16 %v410, %v409
        %vm419 = vcmask 523264
        %v421 = vsel %vm419, %v387, 0
        %v424 = vsel %vm419, %v388, 0
        %v427 = vsel %vm419, %v389, 0
        %v430 = vsel %vm419, %v390, 0
        %v433 = vsel %vm419, %v391, 0
        %v436 = vsel %vm419, %v392, 0
        %v439 = vsel %vm419, %v393, 0
        %v442 = vsel %vm419, %v394, 0
        %444 = vmatpush.bf16.msra.mxu0 0
        %445 = vmatpush.bf16.msra.mxu0 0
        %446 = vmatpush.bf16.msra.mxu0 0
        %447 = vmatpush.bf16.msra.mxu0 0
        %448 = vmatpush.bf16.msra.mxu0 %v414
        %449 = vmatpush.bf16.msra.mxu0 %v413
        %450 = vmatpush.bf16.msra.mxu0 %v412
        %451 = vmatpush.bf16.msra.mxu0 %v411
        %452 = vmatmul.bf16.gmra.mxu0 %v421
        %v453 = vpop.f32.mrf.mxu0
        %v454 = vadd.f32 0.0, %v453
        %v455 = vpop.f32.mrf.mxu0
        %v456 = vadd.f32 0.0, %v455
        %457 = vmatmul.bf16.gmra.mxu0 %v424
        %v458 = vpop.f32.mrf.mxu0
        %v459 = vadd.f32 0.0, %v458
        %v460 = vpop.f32.mrf.mxu0
        %v461 = vadd.f32 0.0, %v460
        %462 = vmatmul.bf16.gmra.mxu0 %v427
        %v463 = vpop.f32.mrf.mxu0
        %v464 = vadd.f32 0.0, %v463
        %v465 = vpop.f32.mrf.mxu0
        %v466 = vadd.f32 0.0, %v465
        %467 = vmatmul.bf16.gmra.mxu0 %v430
        %v468 = vpop.f32.mrf.mxu0
        %v469 = vadd.f32 0.0, %v468
        %v470 = vpop.f32.mrf.mxu0
        %v471 = vadd.f32 0.0, %v470
        %472 = vmatmul.bf16.gmra.mxu0 %v433
        %v473 = vpop.f32.mrf.mxu0
        %v474 = vadd.f32 0.0, %v473
        %v475 = vpop.f32.mrf.mxu0
        %v476 = vadd.f32 0.0, %v475
        %477 = vmatmul.bf16.gmra.mxu0 %v436
        %v478 = vpop.f32.mrf.mxu0
        %v479 = vadd.f32 0.0, %v478
        %v480 = vpop.f32.mrf.mxu0
        %v481 = vadd.f32 0.0, %v480
        %482 = vmatmul.bf16.gmra.mxu0 %v439
        %v483 = vpop.f32.mrf.mxu0
        %v484 = vadd.f32 0.0, %v483
        %v485 = vpop.f32.mrf.mxu0
        %v486 = vadd.f32 0.0, %v485
        %487 = vmatmul.bf16.gmra.mxu0 %v442
        %v488 = vpop.f32.mrf.mxu0
        %v489 = vadd.f32 0.0, %v488
        %v490 = vpop.f32.mrf.mxu0
        %v491 = vadd.f32 0.0, %v490
        %492 = vdwg.mxu0
        %v493 = vadd.f32 %v315, %v454
        %v494 = vadd.f32 %v316, %v456
        %v495 = vadd.f32 %v317, %v459
        %v496 = vadd.f32 %v318, %v461
        %v497 = vadd.f32 %v319, %v464
        %v498 = vadd.f32 %v320, %v466
        %v499 = vadd.f32 %v321, %v469
        %v500 = vadd.f32 %v322, %v471
        %v501 = vadd.f32 %v323, %v474
        %v502 = vadd.f32 %v324, %v476
        %v503 = vadd.f32 %v325, %v479
        %v504 = vadd.f32 %v326, %v481
        %v505 = vadd.f32 %v327, %v484
        %v506 = vadd.f32 %v328, %v486
        %v507 = vadd.f32 %v329, %v489
        %v508 = vadd.f32 %v330, %v491
        %509 = vst [vmem:[%s293] sm:$0xff] %v493
        %510 = vst [vmem:[%s293 + $0x8] sm:$0xff] %v494
        %511 = vst [vmem:[%s293 + $0x10] sm:$0xff] %v495
        %512 = vst [vmem:[%s293 + $0x18] sm:$0xff] %v496
        %513 = vst [vmem:[%s293 + $0x20] sm:$0xff] %v497
        %514 = vst [vmem:[%s293 + $0x28] sm:$0xff] %v498
        %515 = vst [vmem:[%s293 + $0x30] sm:$0xff] %v499
        %516 = vst [vmem:[%s293 + $0x38] sm:$0xff] %v500
        %517 = vst [vmem:[%s293 + $0x40] sm:$0xff] %v501
        %518 = vst [vmem:[%s293 + $0x48] sm:$0xff] %v502
        %519 = vst [vmem:[%s293 + $0x50] sm:$0xff] %v503
        %520 = vst [vmem:[%s293 + $0x58] sm:$0xff] %v504
        %521 = vst [vmem:[%s293 + $0x60] sm:$0xff] %v505
        %522 = vst [vmem:[%s293 + $0x68] sm:$0xff] %v506
        %523 = vst [vmem:[%s293 + $0x70] sm:$0xff] %v507
        %524 = vst [vmem:[%s293 + $0x78] sm:$0xff] %v508
        %p525 = scmp.eq.s32.totalorder %s24, 8
        // Predicated region
        $region53: #{bn_layer_forward.6} parent=35 // pred_check
          %p526 = pneg %p525
        $region54: #{bn_layer_forward.6} parent=35 // pred_check_branch
          %528 = sbr.rel (%p526) target = $region56
        $region55: #{bn_layer_forward.6} parent=35 // pred_region
          %v529 = vld [vmem:[%s293] sm:$0xff]
          %v530 = vld [vmem:[%s293 + $0x8] sm:$0xff]
          %v531 = vld [vmem:[%s293 + $0x10] sm:$0xff]
          %v532 = vld [vmem:[%s293 + $0x18] sm:$0xff]
          %v533 = vld [vmem:[%s293 + $0x20] sm:$0xff]
          %v534 = vld [vmem:[%s293 + $0x28] sm:$0xff]
          %v535 = vld [vmem:[%s293 + $0x30] sm:$0xff]
          %v536 = vld [vmem:[%s293 + $0x38] sm:$0xff]
          %v537 = vld [vmem:[%s293 + $0x40] sm:$0xff]
          %v538 = vld [vmem:[%s293 + $0x48] sm:$0xff]
          %v539 = vld [vmem:[%s293 + $0x50] sm:$0xff]
          %v540 = vld [vmem:[%s293 + $0x58] sm:$0xff]
          %v541 = vld [vmem:[%s293 + $0x60] sm:$0xff]
          %v542 = vld [vmem:[%s293 + $0x68] sm:$0xff]
          %v543 = vld [vmem:[%s293 + $0x70] sm:$0xff]
          %v544 = vld [vmem:[%s293 + $0x78] sm:$0xff]
          %v545 = vadd.f32 %v529, %v530
          %v546 = vadd.f32 %v545, %v531
          %v547 = vadd.f32 %v546, %v532
          %v548 = vadd.f32 %v547, %v533
          %v549 = vadd.f32 %v548, %v534
          %v550 = vadd.f32 %v549, %v535
          %v551 = vadd.f32 %v550, %v536
          %v552 = vadd.f32 %v551, %v537
          %v553 = vadd.f32 %v552, %v538
          %v554 = vadd.f32 %v553, %v539
          %v555 = vadd.f32 %v554, %v540
          %v556 = vadd.f32 %v555, %v541
          %v557 = vadd.f32 %v556, %v542
          %v558 = vadd.f32 %v557, %v543
          %v559 = vadd.f32 %v558, %v544
          %v560 = vrot.slane %v559, 4
          %v561 = vadd.f32 %v559, %v560
          %v562 = vrot.slane %v561, 2
          %v563 = vadd.f32 %v561, %v562
          %v564 = vrot.slane %v563, 1
          %v565 = vadd.f32 %v563, %v564
          %v566 = vmul.f32 %v529, %v529
          %v567 = vmul.f32 %v530, %v530
          %v568 = vmul.f32 %v531, %v531
          %v569 = vmul.f32 %v532, %v532
          %v570 = vmul.f32 %v533, %v533
          %v571 = vmul.f32 %v534, %v534
          %v572 = vmul.f32 %v535, %v535
          %v573 = vmul.f32 %v536, %v536
          %v574 = vmul.f32 %v537, %v537
          %v575 = vmul.f32 %v538, %v538
          %v576 = vmul.f32 %v539, %v539
          %v577 = vmul.f32 %v540, %v540
          %v578 = vmul.f32 %v541, %v541
          %v579 = vmul.f32 %v542, %v542
          %v580 = vmul.f32 %v543, %v543
          %v581 = vmul.f32 %v544, %v544
          %v582 = vadd.f32 %v566, %v567
          %v583 = vadd.f32 %v582, %v568
          %v584 = vadd.f32 %v583, %v569
          %v585 = vadd.f32 %v584, %v570
          %v586 = vadd.f32 %v585, %v571
          %v587 = vadd.f32 %v586, %v572
          %v588 = vadd.f32 %v587, %v573
          %v589 = vadd.f32 %v588, %v574
          %v590 = vadd.f32 %v589, %v575
          %v591 = vadd.f32 %v590, %v576
          %v592 = vadd.f32 %v591, %v577
          %v593 = vadd.f32 %v592, %v578
          %v594 = vadd.f32 %v593, %v579
          %v595 = vadd.f32 %v594, %v580
          %v596 = vadd.f32 %v595, %v581
          %v597 = vrot.slane %v596, 4
          %v598 = vadd.f32 %v596, %v597
          %v599 = vrot.slane %v598, 2
          %v600 = vadd.f32 %v598, %v599
          %v601 = vrot.slane %v600, 1
          %v602 = vadd.f32 %v600, %v601
          %v603 = vmul.f32 %v565, 0.0078125
          %v604 = vmul.f32 %v602, 0.0078125
          %v605 = vmul.f32 %v603, %v603
          %v606 = vsub.f32 %v604, %v605
          %v607 = vsub.f32 %v529, %v603
          %v608 = vsub.f32 %v530, %v603
          %v609 = vsub.f32 %v531, %v603
          %v610 = vsub.f32 %v532, %v603
          %v611 = vsub.f32 %v533, %v603
          %v612 = vsub.f32 %v534, %v603
          %v613 = vsub.f32 %v535, %v603
          %v614 = vsub.f32 %v536, %v603
          %v615 = vsub.f32 %v537, %v603
          %v616 = vsub.f32 %v538, %v603
          %v617 = vsub.f32 %v539, %v603
          %v618 = vsub.f32 %v540, %v603
          %v619 = vsub.f32 %v541, %v603
          %v620 = vsub.f32 %v542, %v603
          %v621 = vsub.f32 %v543, %v603
          %v622 = vsub.f32 %v544, %v603
          %v623 = vadd.f32 %v606, 1e-05
          %v624 = vrsqrt.pop %v623
          %v625 = vmul.f32 %v624, %v623
          %v626 = vmul.f32 %v625, %v624
          %v627 = vmul.f32 0.5, %v626
          %v628 = vsub.f32 1.5, %v627
          %v629 = vmul.f32 %v624, %v628
          %vm630 = vweird.f32 %v623
          %vm631 = vweird.f32 %v624
          %vm632 = vmor %vm630, %vm631
          %v633 = vsel %vm632, %v624, %v629
          %v634 = vmul.f32 %v607, %v633
          %v635 = vmul.f32 %v608, %v633
          %v636 = vmul.f32 %v609, %v633
          %v637 = vmul.f32 %v610, %v633
          %v638 = vmul.f32 %v611, %v633
          %v639 = vmul.f32 %v612, %v633
          %v640 = vmul.f32 %v613, %v633
          %v641 = vmul.f32 %v614, %v633
          %v642 = vmul.f32 %v615, %v633
          %v643 = vmul.f32 %v616, %v633
          %v644 = vmul.f32 %v617, %v633
          %v645 = vmul.f32 %v618, %v633
          %v646 = vmul.f32 %v619, %v633
          %v647 = vmul.f32 %v620, %v633
          %v648 = vmul.f32 %v621, %v633
          %v649 = vmul.f32 %v622, %v633
          %v650 = vld [vmem:[#allocation4] sm:$0x1]
          %v652 = vperm.slane %v650, 0
          %v654 = vmul.f32 %v634, %v652
          %v655 = vmul.f32 %v635, %v652
          %v656 = vmul.f32 %v636, %v652
          %v657 = vmul.f32 %v637, %v652
          %v658 = vmul.f32 %v638, %v652
          %v659 = vmul.f32 %v639, %v652
          %v660 = vmul.f32 %v640, %v652
          %v661 = vmul.f32 %v641, %v652
          %v662 = vmul.f32 %v642, %v652
          %v663 = vmul.f32 %v643, %v652
          %v664 = vmul.f32 %v644, %v652
          %v665 = vmul.f32 %v645, %v652
          %v666 = vmul.f32 %v646, %v652
          %v667 = vmul.f32 %v647, %v652
          %v668 = vmul.f32 %v648, %v652
          %v669 = vmul.f32 %v649, %v652
          %v670 = vld [vmem:[#allocation6] sm:$0x1]
          %v672 = vperm.slane %v670, 0
          %v674 = vadd.f32 %v654, %v672
          %v675 = vadd.f32 %v655, %v672
          %v676 = vadd.f32 %v656, %v672
          %v677 = vadd.f32 %v657, %v672
          %v678 = vadd.f32 %v658, %v672
          %v679 = vadd.f32 %v659, %v672
          %v680 = vadd.f32 %v660, %v672
          %v681 = vadd.f32 %v661, %v672
          %v682 = vadd.f32 %v662, %v672
          %v683 = vadd.f32 %v663, %v672
          %v684 = vadd.f32 %v664, %v672
          %v685 = vadd.f32 %v665, %v672
          %v686 = vadd.f32 %v666, %v672
          %v687 = vadd.f32 %v667, %v672
          %v688 = vadd.f32 %v668, %v672
          %v689 = vadd.f32 %v669, %v672
          %v690 = vmax.f32 %v674, 0.0
          %v691 = vmax.f32 %v675, 0.0
          %v692 = vmax.f32 %v676, 0.0
          %v693 = vmax.f32 %v677, 0.0
          %v694 = vmax.f32 %v678, 0.0
          %v695 = vmax.f32 %v679, 0.0
          %v696 = vmax.f32 %v680, 0.0
          %v697 = vmax.f32 %v681, 0.0
          %v698 = vmax.f32 %v682, 0.0
          %v699 = vmax.f32 %v683, 0.0
          %v700 = vmax.f32 %v684, 0.0
          %v701 = vmax.f32 %v685, 0.0
          %v702 = vmax.f32 %v686, 0.0
          %v703 = vmax.f32 %v687, 0.0
          %v704 = vmax.f32 %v688, 0.0
          %v705 = vmax.f32 %v689, 0.0
          %706 = vst [vmem:[%s293] sm:$0xff] %v690
          %707 = vst [vmem:[%s293 + $0x8] sm:$0xff] %v691
          %708 = vst [vmem:[%s293 + $0x10] sm:$0xff] %v692
          %709 = vst [vmem:[%s293 + $0x18] sm:$0xff] %v693
          %710 = vst [vmem:[%s293 + $0x20] sm:$0xff] %v694
          %711 = vst [vmem:[%s293 + $0x28] sm:$0xff] %v695
          %712 = vst [vmem:[%s293 + $0x30] sm:$0xff] %v696
          %713 = vst [vmem:[%s293 + $0x38] sm:$0xff] %v697
          %714 = vst [vmem:[%s293 + $0x40] sm:$0xff] %v698
          %715 = vst [vmem:[%s293 + $0x48] sm:$0xff] %v699
          %716 = vst [vmem:[%s293 + $0x50] sm:$0xff] %v700
          %717 = vst [vmem:[%s293 + $0x58] sm:$0xff] %v701
          %718 = vst [vmem:[%s293 + $0x60] sm:$0xff] %v702
          %719 = vst [vmem:[%s293 + $0x68] sm:$0xff] %v703
          %720 = vst [vmem:[%s293 + $0x70] sm:$0xff] %v704
          %721 = vst [vmem:[%s293 + $0x78] sm:$0xff] %v705
        $region56: #{bn_layer_forward.6} parent=35 // pred_fallthru
          _
        %p722 = scmp.lt.s32.totalorder %s23, 0
        %s723 = scalar_select %p722, %s23, 0
        %s724 = smul.addr %s723, 8
        %s725 = scalar_lea.vmem %s4, %s724
        // Predicated region
        $region57: #{bn_layer_forward.6} parent=35 // pred_check
          %p726 = pneg %p155
        $region58: #{bn_layer_forward.6} parent=35 // pred_check_branch
          %728 = sbr.rel (%p726) target = $region60
        $region59: #{bn_layer_forward.6} parent=35 // pred_region
          _
        $region60: #{bn_layer_forward.6} parent=35 // pred_fallthru
          _
        // Predicated region
        $region61: #{bn_layer_forward.6} parent=35 // pred_check
          %p729 = pneg %p155
        $region62: #{bn_layer_forward.6} parent=35 // pred_check_branch
          %731 = sbr.rel (%p729) target = $region64
        $region63: #{bn_layer_forward.6} parent=35 // pred_region
          %p732 = scmp.lt.s32.totalorder %s23, 0
          %s733 = scalar_select %p732, %s23, 0
          %s734 = smul.addr %s733, 8
          %s735 = scalar_lea.vmem %s4, %s734
        $region64: #{bn_layer_forward.6} parent=35 // pred_fallthru
          _
      $region36: #{bn_layer_forward.6} parent=5 // pred_fallthru
        _
      %p736 = scmp.le.s32.totalorder 2, %s14
      // Predicated region
      $region65: #{bn_layer_forward.6} parent=5 // pred_check
        %p737 = pneg %p736
      $region66: #{bn_layer_forward.6} parent=5 // pred_check_branch
        %739 = sbr.rel (%p737) target = $region68
      $region67: #{bn_layer_forward.6} parent=5 // pred_region
        %s740 = ssub.s32 %s14, 2
      $region68: #{bn_layer_forward.6} parent=5 // pred_fallthru
        _
    $region6: #{bn_layer_forward.6} parent=1 // loop_footer
      %s18 = sadd.s32 1, %s14
    $region7: #{bn_layer_forward.6} parent=1 // loop_footer_branch
      %13 = sbr.rel target = $region3
    $region8: #{bn_layer_forward.6} parent=1 // loop_exit
      _
    %741 = vsyncpa [#allocation3], 1
    %s742 = scalar_lea.sflag [#allocation3], 1
    %743 = vsyncpa %s742, 1
    %744 = vsyncpa [#allocation5], 1

// kernel: bn_layer_forward.7
$region0: #{bn_layer_forward.7}
  #allocation0 [shape = 'u32[]', space=smem, size = 0x4, offset = 0x4, fixed_abs, tag = 'smem constant byte address 0x4 - core index']
  #allocation1 [shape = 'u32[72,128]{1,0:T(1,128)}', space=vmem, size = 0x9000, scoped, tag = 'internal scratch']
  %s0 = inlined_call_operand.vmem [shape: bf16[9,32,128], index: 0, kind: input, shape index: {}]
  %s1 = inlined_call_operand.hbm [shape: bf16[9,128,256], index: 1, kind: input, shape index: {}]
  %s2 = inlined_call_operand.hbm [shape: f32[1,256], index: 2, kind: input, shape index: {}]
  %s3 = inlined_call_operand.hbm [shape: f32[1,256], index: 3, kind: input, shape index: {}]
  %s4 = inlined_call_operand.vmem [shape: f32[32,256], index: 4, kind: output, shape index: {}]
  %s5 = sld [smem:[#allocation0]]
  $region69: #{bn_layer_forward.7} parent=0
    _
  %s7 = ssub.s32 1, %s5
  %s8 = scalar_select 0, %s7, %s5
  $region1: #{bn_layer_forward.7} parent=0
    #allocation2 [shape = 'u8[131072]{0}', space=vmem, size = 0x20000, scoped, tag = 'input window, operand 1']
    #allocation3 [shape = 's32[2]{0}', space=sflag, size = 0x8, scoped, tag = 'scoped memory for bn_layer_forward.7']
    #allocation4 [shape = 'u8[1024]{0}', space=vmem, size = 0x400, scoped, tag = 'input window, operand 2, single buffered']
    #allocation5 [shape = 's32[1]{0}', space=sflag, size = 0x4, scoped, tag = 'scoped memory for bn_layer_forward.7']
    #allocation6 [shape = 'u8[1024]{0}', space=vmem, size = 0x400, scoped, tag = 'input window, operand 3, single buffered']
    %9 = vsyncpa [#allocation3], 0
    %s10 = scalar_lea.sflag [#allocation3], 1
    %11 = vsyncpa %s10, 0
    %12 = vsyncpa [#allocation5], 0
    loop: start=0, step=1, limit=11
    $region2: #{bn_layer_forward.7} parent=1 // loop_pre_header
      _
    $region3: #{bn_layer_forward.7} parent=1 // loop_header
      %s14 = sphi 0, %s18
      %p15 = scmp.ge.s32.totalorder %s14, 11
      %s21 = sphi 0, %s33
      %s22 = sphi 0, %s29
      %s23 = sphi 0, %s21
      %s24 = sphi 0, %s22
      %s25 = sphi 0, %s23
      %s26 = sphi 0, %s24
      %s36 = sphi 0, %s38
      %s39 = sphi 0, %s36
      %s40 = sphi 0, %s39
      %s56 = sphi 0, %s40
      %s64 = sphi 0, %s66
      %s67 = sphi 0, %s64
      %s68 = sphi 0, %s67
      %s84 = sphi 0, %s68
      %s90 = sphi 0, %s92
      %s93 = sphi 0, %s90
      %s94 = sphi 0, %s93
      %s110 = sphi 0, %s94
      %s116 = sphi 0, %s118
      %s119 = sphi 0, %s116
      %s120 = sphi 0, %s119
      %s136 = sphi 0, %s120
      %s142 = sphi 0, %s144
      %s145 = sphi 0, %s142
      %s146 = sphi 0, %s145
      %s162 = sphi 0, %s146
    $region4: #{bn_layer_forward.7} parent=1 // loop_header_branch
      %17 = sbr.rel (%p15) target = $region8
    $region5: #{bn_layer_forward.7} parent=1 // loop_body
      %s19 = ssub.s32 %s14, 1
      %s20 = ssub.s32 %s14, 2
      %s27 = sadd.s32 1, %s22
      %p28 = scmp.ge.s32.totalorder %s27, 9
      %s29 = scalar_select %p28, 0, %s27
      %s30 = sadd.s32 1, %s21
      %s31 = scalar_select %p28, %s30, %s21
      %p32 = scmp.ge.s32.totalorder %s31, 1
      %s33 = scalar_select %p32, 0, %s31
      %s34 = ssub.s32 %s22, %s29
      %p35 = scmp.eq.s32.totalorder %s34, 0
      %s37 = sadd.s32 %s36, 1
      %s38 = scalar_select %p35, %s36, %s37
      %p41 = pneg %p35
      %p42 = scmp.eq.s32.totalorder %s14, 8
      %p43 = por %p41, %p42
      %p44 = scmp.ne.s32.totalorder %s36, %s39
      %p45 = scmp.eq.s32.totalorder %s14, 0
      %p46 = por %p44, %p45
      %p47 = scmp.ne.s32.totalorder %s36, %s39
      %p48 = scmp.eq.s32.totalorder %s19, 8
      %p49 = por %p47, %p48
      %p50 = scmp.ne.s32.totalorder %s39, %s40
      %p51 = scmp.eq.s32.totalorder %s19, 0
      %p52 = por %p50, %p51
      %p53 = scmp.ne.s32.totalorder %s39, %s40
      %p54 = scmp.eq.s32.totalorder %s20, 8
      %p55 = por %p53, %p54
      %p57 = scmp.ne.s32.totalorder %s40, %s56
      %p58 = scmp.eq.s32.totalorder %s20, 0
      %p59 = por %p57, %p58
      %s60 = ssub.s32 %s22, %s29
      %s61 = ssub.s32 %s21, %s33
      %s62 = sor.u32 %s60, %s61
      %p63 = scmp.eq.s32.totalorder %s62, 0
      %s65 = sadd.s32 %s64, 1
      %s66 = scalar_select %p63, %s64, %s65
      %p69 = pneg %p63
      %p70 = scmp.eq.s32.totalorder %s14, 8
      %p71 = por %p69, %p70
      %p72 = scmp.ne.s32.totalorder %s64, %s67
      %p73 = scmp.eq.s32.totalorder %s14, 0
      %p74 = por %p72, %p73
      %p75 = scmp.ne.s32.totalorder %s64, %s67
      %p76 = scmp.eq.s32.totalorder %s19, 8
      %p77 = por %p75, %p76
      %p78 = scmp.ne.s32.totalorder %s67, %s68
      %p79 = scmp.eq.s32.totalorder %s19, 0
      %p80 = por %p78, %p79
      %p81 = scmp.ne.s32.totalorder %s67, %s68
      %p82 = scmp.eq.s32.totalorder %s20, 8
      %p83 = por %p81, %p82
      %p85 = scmp.ne.s32.totalorder %s68, %s84
      %p86 = scmp.eq.s32.totalorder %s20, 0
      %p87 = por %p85, %p86
      %s88 = ssub.s32 %s21, %s33
      %p89 = scmp.eq.s32.totalorder %s88, 0
      %s91 = sadd.s32 %s90, 1
      %s92 = scalar_select %p89, %s90, %s91
      %p95 = pneg %p89
      %p96 = scmp.eq.s32.totalorder %s14, 8
      %p97 = por %p95, %p96
      %p98 = scmp.ne.s32.totalorder %s90, %s93
      %p99 = scmp.eq.s32.totalorder %s14, 0
      %p100 = por %p98, %p99
      %p101 = scmp.ne.s32.totalorder %s90, %s93
      %p102 = scmp.eq.s32.totalorder %s19, 8
      %p103 = por %p101, %p102
      %p104 = scmp.ne.s32.totalorder %s93, %s94
      %p105 = scmp.eq.s32.totalorder %s19, 0
      %p106 = por %p104, %p105
      %p107 = scmp.ne.s32.totalorder %s93, %s94
      %p108 = scmp.eq.s32.totalorder %s20, 8
      %p109 = por %p107, %p108
      %p111 = scmp.ne.s32.totalorder %s94, %s110
      %p112 = scmp.eq.s32.totalorder %s20, 0
      %p113 = por %p111, %p112
      %s114 = ssub.s32 %s21, %s33
      %p115 = scmp.eq.s32.totalorder %s114, 0
      %s117 = sadd.s32 %s116, 1
      %s118 = scalar_select %p115, %s116, %s117
      %p121 = pneg %p115
      %p122 = scmp.eq.s32.totalorder %s14, 8
      %p123 = por %p121, %p122
      %p124 = scmp.ne.s32.totalorder %s116, %s119
      %p125 = scmp.eq.s32.totalorder %s14, 0
      %p126 = por %p124, %p125
      %p127 = scmp.ne.s32.totalorder %s116, %s119
      %p128 = scmp.eq.s32.totalorder %s19, 8
      %p129 = por %p127, %p128
      %p130 = scmp.ne.s32.totalorder %s119, %s120
      %p131 = scmp.eq.s32.totalorder %s19, 0
      %p132 = por %p130, %p131
      %p133 = scmp.ne.s32.totalorder %s119, %s120
      %p134 = scmp.eq.s32.totalorder %s20, 8
      %p135 = por %p133, %p134
      %p137 = scmp.ne.s32.totalorder %s120, %s136
      %p138 = scmp.eq.s32.totalorder %s20, 0
      %p139 = por %p137, %p138
      %s140 = ssub.s32 %s21, %s33
      %p141 = scmp.eq.s32.totalorder %s140, 0
      %s143 = sadd.s32 %s142, 1
      %s144 = scalar_select %p141, %s142, %s143
      %p147 = pneg %p141
      %p148 = scmp.eq.s32.totalorder %s14, 8
      %p149 = por %p147, %p148
      %p150 = scmp.ne.s32.totalorder %s142, %s145
      %p151 = scmp.eq.s32.totalorder %s14, 0
      %p152 = por %p150, %p151
      %p153 = scmp.ne.s32.totalorder %s142, %s145
      %p154 = scmp.eq.s32.totalorder %s19, 8
      %p155 = por %p153, %p154
      %p156 = scmp.ne.s32.totalorder %s145, %s146
      %p157 = scmp.eq.s32.totalorder %s19, 0
      %p158 = por %p156, %p157
      %p159 = scmp.ne.s32.totalorder %s145, %s146
      %p160 = scmp.eq.s32.totalorder %s20, 8
      %p161 = por %p159, %p160
      %p163 = scmp.ne.s32.totalorder %s146, %s162
      %p164 = scmp.eq.s32.totalorder %s20, 0
      %p165 = por %p163, %p164
      %p166 = scmp.le.s32.totalorder 1, %s14
      %p167 = scmp.lt.s32.totalorder %s14, 10
      %p168 = pnand %p166, %p167
      %p169 = pneg %p168
      // Predicated region
      $region9: #{bn_layer_forward.7} parent=5 // pred_check
        _
      $region10: #{bn_layer_forward.7} parent=5 // pred_check_branch
        %171 = sbr.rel (%p168) target = $region12
      $region11: #{bn_layer_forward.7} parent=5 // pred_region
        %s172 = ssub.s32 %s14, 1
        // Predicated region
        $region13: #{bn_layer_forward.7} parent=11 // pred_check
          %p173 = pneg %p106
        $region14: #{bn_layer_forward.7} parent=11 // pred_check_branch
          %175 = sbr.rel (%p173) target = $region16
        $region15: #{bn_layer_forward.7} parent=11 // pred_region
          %s176 = smul.u32 2, %s23
          %178 = vsyncadd [#allocation5], 0
          %s179 = scalar_lea.hbm %s2, %s176
          %s181 = sshll.u32 %s179, 4
          %s182 = int_to_ptr.hbm [resolvable:$true] %s181
          %s183 = sshll.u32 [#allocation4], 4
          %s184 = int_to_ptr.vmem [resolvable:$true] %s183
          %186 = dma.hbm_to_vmem [thread:$0]  %s182, 32, %s184, [#allocation5]
        $region16: #{bn_layer_forward.7} parent=11 // pred_fallthru
          _
        // Predicated region
        $region17: #{bn_layer_forward.7} parent=11 // pred_check
          %p187 = pneg %p132
        $region18: #{bn_layer_forward.7} parent=11 // pred_check_branch
          %189 = sbr.rel (%p187) target = $region20
        $region19: #{bn_layer_forward.7} parent=11 // pred_region
          %s190 = smul.u32 2, %s23
          %192 = vsyncadd [#allocation5], 0
          %s193 = scalar_lea.hbm %s3, %s190
          %s195 = sshll.u32 %s193, 4
          %s196 = int_to_ptr.hbm [resolvable:$true] %s195
          %s197 = sshll.u32 [#allocation6], 4
          %s198 = int_to_ptr.vmem [resolvable:$true] %s197
          %200 = dma.hbm_to_vmem [thread:$0]  %s196, 32, %s198, [#allocation5]
        $region20: #{bn_layer_forward.7} parent=11 // pred_fallthru
          _
      $region12: #{bn_layer_forward.7} parent=5 // pred_fallthru
        _
      %p201 = scmp.lt.s32.totalorder %s14, 9
      // Predicated region
      $region21: #{bn_layer_forward.7} parent=5 // pred_check
        %p202 = pneg %p201
      $region22: #{bn_layer_forward.7} parent=5 // pred_check_branch
        %204 = sbr.rel (%p202) target = $region24
      $region23: #{bn_layer_forward.7} parent=5 // pred_region
        // Predicated region
        $region25: #{bn_layer_forward.7} parent=23 // pred_check
          %p205 = pneg %p46
        $region26: #{bn_layer_forward.7} parent=23 // pred_check_branch
          %207 = sbr.rel (%p205) target = $region28
        $region27: #{bn_layer_forward.7} parent=23 // pred_region
          %p208 = scmp.lt.s32.totalorder %s22, 8
          %s209 = scalar_select %p208, %s22, 8
          %s210 = smul.addr %s209, 4
          %s211 = smul.addr %s210, 4
          %s212 = scalar_lea.vmem %s0, %s211
        $region28: #{bn_layer_forward.7} parent=23 // pred_fallthru
          _
        // Predicated region
        $region29: #{bn_layer_forward.7} parent=23 // pred_check
          %p213 = pneg %p74
        $region30: #{bn_layer_forward.7} parent=23 // pred_check_branch
          %215 = sbr.rel (%p213) target = $region32
        $region31: #{bn_layer_forward.7} parent=23 // pred_region
          %s216 = sand.u32 %s64, 1
          %s217 = scalar_lea.sflag [#allocation3], %s216
          %s218 = sand.u32 %s64, 1
          %s219 = smul.addr %s218, 128
          %s220 = scalar_lea.vmem [#allocation2], %s219
          %s221 = smul.u32 2, %s21
          %223 = vsyncadd %s217, 0
          %s224 = smul.addr %s22, 32
          %s225 = sadd.s32 %s221, %s224
          %s226 = smul.addr %s225, 4
          %s227 = scalar_lea.hbm %s1, %s226
          %s228 = sshll.u32 %s227, 4
          %s229 = int_to_ptr.hbm [resolvable:$true] %s228
          %s230 = sshll.u32 %s220, 4
          %s231 = int_to_ptr.vmem [resolvable:$true] %s230
          %236 = dma.hbm_to_vmem [thread:$0]  %s229, 2048, %s231, %s217, 128, 128, 8
        $region32: #{bn_layer_forward.7} parent=23 // pred_fallthru
          _
      $region24: #{bn_layer_forward.7} parent=5 // pred_fallthru
        _
      %p237 = scmp.le.s32.totalorder 1, %s14
      %p238 = scmp.lt.s32.totalorder %s14, 10
      %p239 = pnand %p237, %p238
      %p240 = pneg %p239
      // Predicated region
      $region33: #{bn_layer_forward.7} parent=5 // pred_check
        _
      $region34: #{bn_layer_forward.7} parent=5 // pred_check_branch
        %242 = sbr.rel (%p239) target = $region36
      $region35: #{bn_layer_forward.7} parent=5 // pred_region
        %s243 = ssub.s32 %s14, 1
        %s244 = sand.u32 %s67, 1
        %s245 = scalar_lea.sflag [#allocation3], %s244
        %s246 = sand.u32 %s67, 1
        %s247 = smul.addr %s246, 128
        %s248 = scalar_lea.vmem [#allocation2], %s247
        // Predicated region
        $region37: #{bn_layer_forward.7} parent=35 // pred_check
          %p249 = pneg %p80
        $region38: #{bn_layer_forward.7} parent=35 // pred_check_branch
          %251 = sbr.rel (%p249) target = $region40
        $region39: #{bn_layer_forward.7} parent=35 // pred_region
          %253 = dma.done %s245, 2048
        $region40: #{bn_layer_forward.7} parent=35 // pred_fallthru
          _
        // Predicated region
        $region41: #{bn_layer_forward.7} parent=35 // pred_check
          %p254 = pneg %p106
        $region42: #{bn_layer_forward.7} parent=35 // pred_check_branch
          %256 = sbr.rel (%p254) target = $region44
        $region43: #{bn_layer_forward.7} parent=35 // pred_region
          %258 = dma.done [#allocation5], 32
        $region44: #{bn_layer_forward.7} parent=35 // pred_fallthru
          _
        // Predicated region
        $region45: #{bn_layer_forward.7} parent=35 // pred_check
          %p259 = pneg %p132
        $region46: #{bn_layer_forward.7} parent=35 // pred_check_branch
          %261 = sbr.rel (%p259) target = $region48
        $region47: #{bn_layer_forward.7} parent=35 // pred_region
          %263 = dma.done [#allocation5], 32
        $region48: #{bn_layer_forward.7} parent=35 // pred_fallthru
          _
        %p264 = scmp.lt.s32.totalorder %s24, 8
        %s265 = scalar_select %p264, %s24, 8
        %s266 = smul.addr %s265, 4
        %s267 = smul.addr %s266, 4
        %s268 = scalar_lea.vmem %s0, %s267
        %p269 = pneg %p52
        %p270 = pneg %p49
        %s271 = sand.u32 %s67, 1
        %s272 = scalar_lea.sflag [#allocation3], %s271
        %s273 = sand.u32 %s67, 1
        %s274 = smul.addr %s273, 128
        %s275 = scalar_lea.vmem [#allocation2], %s274
        %p276 = pneg %p80
        %p277 = pneg %p77
        %p278 = pneg %p106
        %p279 = pneg %p103
        %p280 = pneg %p132
        %p281 = pneg %p129
        %p282 = pneg %p158
        %p283 = pneg %p155
        %s284 = smul.u32 2, %s23
        %p285 = scmp.lt.s32.totalorder %s284, 1
        %s286 = scalar_select %p285, %s284, 1
        %s287 = smul.addr %s286, 8
        %s288 = scalar_lea.vmem %s4, %s287
        %p289 = scmp.lt.s32.totalorder %s24, 8
        %s290 = scalar_select %p289, %s24, 8
        %s291 = smul.addr %s290, 4
        %s292 = smul.addr %s291, 4
        %s293 = scalar_lea.vmem %s0, %s292
        %s294 = smul.u32 2, %s23
        %s295 = smul.u32 2, %s23
        %s296 = smul.u32 2, %s23
        %s297 = smul.u32 2, %s23
        %p298 = scmp.lt.s32.totalorder %s297, 1
        %s299 = scalar_select %p298, %s297, 1
        %s300 = smul.addr %s299, 8
        %s301 = scalar_lea.vmem %s4, %s300
        %s302 = smul.u32 2, %s23
        %p303 = scmp.eq.s32.totalorder %s24, 0
        // Predicated region
        $region49: #{bn_layer_forward.7} parent=35 // pred_check
          %p304 = pneg %p303
        $region50: #{bn_layer_forward.7} parent=35 // pred_check_branch
          %306 = sbr.rel (%p304) target = $region52
        $region51: #{bn_layer_forward.7} parent=35 // pred_region
          %307 = vst [vmem:[%s301] sm:$0xff] 0.0
          %308 = vst [vmem:[%s301 + $0x8] sm:$0xff] 0.0
          %309 = vst [vmem:[%s301 + $0x10] sm:$0xff] 0.0
          %310 = vst [vmem:[%s301 + $0x18] sm:$0xff] 0.0
          %311 = vst [vmem:[%s301 + $0x20] sm:$0xff] 0.0
          %312 = vst [vmem:[%s301 + $0x28] sm:$0xff] 0.0
          %313 = vst [vmem:[%s301 + $0x30] sm:$0xff] 0.0
          %314 = vst [vmem:[%s301 + $0x38] sm:$0xff] 0.0
        $region52: #{bn_layer_forward.7} parent=35 // pred_fallthru
          _
        %v315 = vld [vmem:[%s301] sm:$0xff]
        %v316 = vld [vmem:[%s301 + $0x8] sm:$0xff]
        %v317 = vld [vmem:[%s301 + $0x10] sm:$0xff]
        %v318 = vld [vmem:[%s301 + $0x18] sm:$0xff]
        %v319 = vld [vmem:[%s301 + $0x20] sm:$0xff]
        %v320 = vld [vmem:[%s301 + $0x28] sm:$0xff]
        %v321 = vld [vmem:[%s301 + $0x30] sm:$0xff]
        %v322 = vld [vmem:[%s301 + $0x38] sm:$0xff]
        %v323 = vld [vmem:[%s293] sm:$0xf]
        %v324 = vld [vmem:[%s293 + $0x4] sm:$0xf]
        %v325 = vld [vmem:[%s293 + $0x8] sm:$0xf]
        %v326 = vld [vmem:[%s293 + $0xc] sm:$0xf]
        %v327 = vld [vmem:[%s248] sm:$0xff]
        %v328 = vld [vmem:[%s248 + $0x8] sm:$0xff]
        %v329 = vld [vmem:[%s248 + $0x10] sm:$0xff]
        %v330 = vld [vmem:[%s248 + $0x18] sm:$0xff]
        %v331 = vld [vmem:[%s248 + $0x20] sm:$0xff]
        %v332 = vld [vmem:[%s248 + $0x28] sm:$0xff]
        %v333 = vld [vmem:[%s248 + $0x30] sm:$0xff]
        %v334 = vld [vmem:[%s248 + $0x38] sm:$0xff]
        %v335 = vld [vmem:[%s248 + $0x40] sm:$0xff]
        %v336 = vld [vmem:[%s248 + $0x48] sm:$0xff]
        %v337 = vld [vmem:[%s248 + $0x50] sm:$0xff]
        %v338 = vld [vmem:[%s248 + $0x58] sm:$0xff]
        %v339 = vld [vmem:[%s248 + $0x60] sm:$0xff]
        %v340 = vld [vmem:[%s248 + $0x68] sm:$0xff]
        %v341 = vld [vmem:[%s248 + $0x70] sm:$0xff]
        %v342 = vld [vmem:[%s248 + $0x78] sm:$0xff]
        %v347 = vunpack.c.l.b16 %v323
        %v348 = vunpack.c.l.b16 %v324
        %v349 = vunpack.c.l.b16 %v325
        %v350 = vunpack.c.l.b16 %v326
        %v351 = vpack.c.b16 %v348, %v347
        %v352 = vpack.c.b16 %v350, %v349
        %v371 = vunpack.c.l.b16 %v327
        %v372 = vunpack.c.h.b16 %v327
        %v373 = vunpack.c.l.b16 %v328
        %v374 = vunpack.c.h.b16 %v328
        %v375 = vunpack.c.l.b16 %v329
        %v376 = vunpack.c.h.b16 %v329
        %v377 = vunpack.c.l.b16 %v330
        %v378 = vunpack.c.h.b16 %v330
        %v379 = vunpack.c.l.b16 %v331
        %v380 = vunpack.c.h.b16 %v331
        %v381 = vunpack.c.l.b16 %v332
        %v382 = vunpack.c.h.b16 %v332
        %v383 = vunpack.c.l.b16 %v333
        %v384 = vunpack.c.h.b16 %v333
        %v385 = vunpack.c.l.b16 %v334
        %v386 = vunpack.c.h.b16 %v334
        %v387 = vunpack.c.l.b16 %v335
        %v388 = vunpack.c.h.b16 %v335
        %v389 = vunpack.c.l.b16 %v336
        %v390 = vunpack.c.h.b16 %v336
        %v391 = vunpack.c.l.b16 %v337
        %v392 = vunpack.c.h.b16 %v337
        %v393 = vunpack.c.l.b16 %v338
        %v394 = vunpack.c.h.b16 %v338
        %v395 = vunpack.c.l.b16 %v339
        %v396 = vunpack.c.h.b16 %v339
        %v397 = vunpack.c.l.b16 %v340
        %v398 = vunpack.c.h.b16 %v340
        %v399 = vunpack.c.l.b16 %v341
        %v400 = vunpack.c.h.b16 %v341
        %v401 = vunpack.c.l.b16 %v342
        %v402 = vunpack.c.h.b16 %v342
        %v403 = vpack.c.b16 %v373, %v371
        %v404 = vpack.c.b16 %v374, %v372
        %v405 = vpack.c.b16 %v377, %v375
        %v406 = vpack.c.b16 %v378, %v376
        %v407 = vpack.c.b16 %v381, %v379
        %v408 = vpack.c.b16 %v382, %v380
        %v409 = vpack.c.b16 %v385, %v383
        %v410 = vpack.c.b16 %v386, %v384
        %v411 = vpack.c.b16 %v389, %v387
        %v412 = vpack.c.b16 %v390, %v388
        %v413 = vpack.c.b16 %v393, %v391
        %v414 = vpack.c.b16 %v394, %v392
        %v415 = vpack.c.b16 %v397, %v395
        %v416 = vpack.c.b16 %v398, %v396
        %v417 = vpack.c.b16 %v401, %v399
        %v418 = vpack.c.b16 %v402, %v400
        %435 = vmatpush.bf16.msra.mxu0 %v417
        %436 = vmatpush.bf16.msra.mxu0 %v415
        %437 = vmatpush.bf16.msra.mxu0 %v413
        %438 = vmatpush.bf16.msra.mxu0 %v411
        %439 = vmatpush.bf16.msra.mxu0 %v409
        %440 = vmatpush.bf16.msra.mxu0 %v407
        %441 = vmatpush.bf16.msra.mxu0 %v405
        %442 = vmatpush.bf16.msra.mxu0 %v403
        %443 = vmatmul.bf16.gmra.mxu0 %v351
        %v444 = vpop.f32.mrf.mxu0
        %v445 = vadd.f32 0.0, %v444
        %v446 = vpop.f32.mrf.mxu0
        %v447 = vadd.f32 0.0, %v446
        %448 = vmatmul.bf16.gmra.mxu0 %v352
        %v449 = vpop.f32.mrf.mxu0
        %v450 = vadd.f32 0.0, %v449
        %v451 = vpop.f32.mrf.mxu0
        %v452 = vadd.f32 0.0, %v451
        %453 = vdwg.mxu0
        %454 = vmatpush.bf16.msra.mxu0 %v418
        %455 = vmatpush.bf16.msra.mxu0 %v416
        %456 = vmatpush.bf16.msra.mxu0 %v414
        %457 = vmatpush.bf16.msra.mxu0 %v412
        %458 = vmatpush.bf16.msra.mxu0 %v410
        %459 = vmatpush.bf16.msra.mxu0 %v408
        %460 = vmatpush.bf16.msra.mxu0 %v406
        %461 = vmatpush.bf16.msra.mxu0 %v404
        %462 = vmatmul.bf16.gmra.mxu0 %v351
        %v463 = vpop.f32.mrf.mxu0
        %v464 = vadd.f32 0.0, %v463
        %v465 = vpop.f32.mrf.mxu0
        %v466 = vadd.f32 0.0, %v465
        %467 = vmatmul.bf16.gmra.mxu0 %v352
        %v468 = vpop.f32.mrf.mxu0
        %v469 = vadd.f32 0.0, %v468
        %v470 = vpop.f32.mrf.mxu0
        %v471 = vadd.f32 0.0, %v470
        %472 = vdwg.mxu0
        %v473 = vadd.f32 %v315, %v445
        %v474 = vadd.f32 %v316, %v464
        %v475 = vadd.f32 %v317, %v447
        %v476 = vadd.f32 %v318, %v466
        %v477 = vadd.f32 %v319, %v450
        %v478 = vadd.f32 %v320, %v469
        %v479 = vadd.f32 %v321, %v452
        %v480 = vadd.f32 %v322, %v471
        %481 = vst [vmem:[%s301] sm:$0xff] %v473
        %482 = vst [vmem:[%s301 + $0x8] sm:$0xff] %v474
        %483 = vst [vmem:[%s301 + $0x10] sm:$0xff] %v475
        %484 = vst [vmem:[%s301 + $0x18] sm:$0xff] %v476
        %485 = vst [vmem:[%s301 + $0x20] sm:$0xff] %v477
        %486 = vst [vmem:[%s301 + $0x28] sm:$0xff] %v478
        %487 = vst [vmem:[%s301 + $0x30] sm:$0xff] %v479
        %488 = vst [vmem:[%s301 + $0x38] sm:$0xff] %v480
        %p489 = scmp.eq.s32.totalorder %s24, 8
        // Predicated region
        $region53: #{bn_layer_forward.7} parent=35 // pred_check
          %p490 = pneg %p489
        $region54: #{bn_layer_forward.7} parent=35 // pred_check_branch
          %492 = sbr.rel (%p490) target = $region56
        $region55: #{bn_layer_forward.7} parent=35 // pred_region
          %v493 = vld [vmem:[%s301] sm:$0xff]
          %v494 = vld [vmem:[%s301 + $0x8] sm:$0xff]
          %v495 = vld [vmem:[%s301 + $0x10] sm:$0xff]
          %v496 = vld [vmem:[%s301 + $0x18] sm:$0xff]
          %v497 = vld [vmem:[%s301 + $0x20] sm:$0xff]
          %v498 = vld [vmem:[%s301 + $0x28] sm:$0xff]
          %v499 = vld [vmem:[%s301 + $0x30] sm:$0xff]
          %v500 = vld [vmem:[%s301 + $0x38] sm:$0xff]
          %v501 = vadd.f32 %v493, %v495
          %v502 = vadd.f32 %v501, %v497
          %v503 = vadd.f32 %v502, %v499
          %v504 = vrot.slane %v503, 4
          %v505 = vadd.f32 %v503, %v504
          %v506 = vrot.slane %v505, 2
          %v507 = vadd.f32 %v505, %v506
          %v508 = vrot.slane %v507, 1
          %v509 = vadd.f32 %v507, %v508
          %v510 = vadd.f32 %v494, %v496
          %v511 = vadd.f32 %v510, %v498
          %v512 = vadd.f32 %v511, %v500
          %v513 = vrot.slane %v512, 4
          %v514 = vadd.f32 %v512, %v513
          %v515 = vrot.slane %v514, 2
          %v516 = vadd.f32 %v514, %v515
          %v517 = vrot.slane %v516, 1
          %v518 = vadd.f32 %v516, %v517
          %v519 = vmul.f32 %v493, %v493
          %v520 = vmul.f32 %v494, %v494
          %v521 = vmul.f32 %v495, %v495
          %v522 = vmul.f32 %v496, %v496
          %v523 = vmul.f32 %v497, %v497
          %v524 = vmul.f32 %v498, %v498
          %v525 = vmul.f32 %v499, %v499
          %v526 = vmul.f32 %v500, %v500
          %v527 = vadd.f32 %v519, %v521
          %v528 = vadd.f32 %v527, %v523
          %v529 = vadd.f32 %v528, %v525
          %v530 = vrot.slane %v529, 4
          %v531 = vadd.f32 %v529, %v530
          %v532 = vrot.slane %v531, 2
          %v533 = vadd.f32 %v531, %v532
          %v534 = vrot.slane %v533, 1
          %v535 = vadd.f32 %v533, %v534
          %v536 = vadd.f32 %v520, %v522
          %v537 = vadd.f32 %v536, %v524
          %v538 = vadd.f32 %v537, %v526
          %v539 = vrot.slane %v538, 4
          %v540 = vadd.f32 %v538, %v539
          %v541 = vrot.slane %v540, 2
          %v542 = vadd.f32 %v540, %v541
          %v543 = vrot.slane %v542, 1
          %v544 = vadd.f32 %v542, %v543
          %v545 = vmul.f32 %v509, 0.03125
          %v546 = vmul.f32 %v518, 0.03125
          %v547 = vmul.f32 %v535, 0.03125
          %v548 = vmul.f32 %v544, 0.03125
          %v549 = vmul.f32 %v545, %v545
          %v550 = vmul.f32 %v546, %v546
          %v551 = vsub.f32 %v547, %v549
          %v552 = vsub.f32 %v548, %v550
          %v553 = vsub.f32 %v493, %v545
          %v554 = vsub.f32 %v494, %v546
          %v555 = vsub.f32 %v495, %v545
          %v556 = vsub.f32 %v496, %v546
          %v557 = vsub.f32 %v497, %v545
          %v558 = vsub.f32 %v498, %v546
          %v559 = vsub.f32 %v499, %v545
          %v560 = vsub.f32 %v500, %v546
          %v561 = vadd.f32 %v551, 1e-05
          %v562 = vadd.f32 %v552, 1e-05
          %v563 = vrsqrt.pop %v561
          %v564 = vmul.f32 %v563, %v561
          %v565 = vmul.f32 %v564, %v563
          %v566 = vmul.f32 0.5, %v565
          %v567 = vsub.f32 1.5, %v566
          %v568 = vmul.f32 %v563, %v567
          %vm569 = vweird.f32 %v561
          %vm570 = vweird.f32 %v563
          %vm571 = vmor %vm569, %vm570
          %v572 = vsel %vm571, %v563, %v568
          %v573 = vrsqrt.pop %v562
          %v574 = vmul.f32 %v573, %v562
          %v575 = vmul.f32 %v574, %v573
          %v576 = vmul.f32 0.5, %v575
          %v577 = vsub.f32 1.5, %v576
          %v578 = vmul.f32 %v573, %v577
          %vm579 = vweird.f32 %v562
          %vm580 = vweird.f32 %v573
          %vm581 = vmor %vm579, %vm580
          %v582 = vsel %vm581, %v573, %v578
          %v583 = vmul.f32 %v553, %v572
          %v584 = vmul.f32 %v554, %v582
          %v585 = vmul.f32 %v555, %v572
          %v586 = vmul.f32 %v556, %v582
          %v587 = vmul.f32 %v557, %v572
          %v588 = vmul.f32 %v558, %v582
          %v589 = vmul.f32 %v559, %v572
          %v590 = vmul.f32 %v560, %v582
          %v591 = vld [vmem:[#allocation4] sm:$0x3]
          %v593 = vperm.slane %v591, 0
          %v594 = vperm.slane %v591, 1
          %v597 = vmul.f32 %v583, %v593
          %v598 = vmul.f32 %v584, %v594
          %v599 = vmul.f32 %v585, %v593
          %v600 = vmul.f32 %v586, %v594
          %v601 = vmul.f32 %v587, %v593
          %v602 = vmul.f32 %v588, %v594
          %v603 = vmul.f32 %v589, %v593
          %v604 = vmul.f32 %v590, %v594
          %v605 = vld [vmem:[#allocation6] sm:$0x3]
          %v607 = vperm.slane %v605, 0
          %v608 = vperm.slane %v605, 1
          %v611 = vadd.f32 %v597, %v607
          %v612 = vadd.f32 %v598, %v608
          %v613 = vadd.f32 %v599, %v607
          %v614 = vadd.f32 %v600, %v608
          %v615 = vadd.f32 %v601, %v607
          %v616 = vadd.f32 %v602, %v608
          %v617 = vadd.f32 %v603, %v607
          %v618 = vadd.f32 %v604, %v608
          %v619 = vmax.f32 %v611, 0.0
          %v620 = vmax.f32 %v612, 0.0
          %v621 = vmax.f32 %v613, 0.0
          %v622 = vmax.f32 %v614, 0.0
          %v623 = vmax.f32 %v615, 0.0
          %v624 = vmax.f32 %v616, 0.0
          %v625 = vmax.f32 %v617, 0.0
          %v626 = vmax.f32 %v618, 0.0
          %627 = vst [vmem:[%s301] sm:$0xff] %v619
          %628 = vst [vmem:[%s301 + $0x8] sm:$0xff] %v620
          %629 = vst [vmem:[%s301 + $0x10] sm:$0xff] %v621
          %630 = vst [vmem:[%s301 + $0x18] sm:$0xff] %v622
          %631 = vst [vmem:[%s301 + $0x20] sm:$0xff] %v623
          %632 = vst [vmem:[%s301 + $0x28] sm:$0xff] %v624
          %633 = vst [vmem:[%s301 + $0x30] sm:$0xff] %v625
          %634 = vst [vmem:[%s301 + $0x38] sm:$0xff] %v626
        $region56: #{bn_layer_forward.7} parent=35 // pred_fallthru
          _
        %s635 = smul.u32 2, %s23
        %p636 = scmp.lt.s32.totalorder %s635, 1
        %s637 = scalar_select %p636, %s635, 1
        %s638 = smul.addr %s637, 8
        %s639 = scalar_lea.vmem %s4, %s638
        // Predicated region
        $region57: #{bn_layer_forward.7} parent=35 // pred_check
          %p640 = pneg %p155
        $region58: #{bn_layer_forward.7} parent=35 // pred_check_branch
          %642 = sbr.rel (%p640) target = $region60
        $region59: #{bn_layer_forward.7} parent=35 // pred_region
          %s643 = smul.u32 2, %s23
        $region60: #{bn_layer_forward.7} parent=35 // pred_fallthru
          _
        // Predicated region
        $region61: #{bn_layer_forward.7} parent=35 // pred_check
          %p644 = pneg %p155
        $region62: #{bn_layer_forward.7} parent=35 // pred_check_branch
          %646 = sbr.rel (%p644) target = $region64
        $region63: #{bn_layer_forward.7} parent=35 // pred_region
          %s647 = smul.u32 2, %s23
          %p648 = scmp.lt.s32.totalorder %s647, 1
          %s649 = scalar_select %p648, %s647, 1
          %s650 = smul.addr %s649, 8
          %s651 = scalar_lea.vmem %s4, %s650
        $region64: #{bn_layer_forward.7} parent=35 // pred_fallthru
          _
      $region36: #{bn_layer_forward.7} parent=5 // pred_fallthru
        _
      %p652 = scmp.le.s32.totalorder 2, %s14
      // Predicated region
      $region65: #{bn_layer_forward.7} parent=5 // pred_check
        %p653 = pneg %p652
      $region66: #{bn_layer_forward.7} parent=5 // pred_check_branch
        %655 = sbr.rel (%p653) target = $region68
      $region67: #{bn_layer_forward.7} parent=5 // pred_region
        %s656 = ssub.s32 %s14, 2
      $region68: #{bn_layer_forward.7} parent=5 // pred_fallthru
        _
    $region6: #{bn_layer_forward.7} parent=1 // loop_footer
      %s18 = sadd.s32 1, %s14
    $region7: #{bn_layer_forward.7} parent=1 // loop_footer_branch
      %13 = sbr.rel target = $region3
    $region8: #{bn_layer_forward.7} parent=1 // loop_exit
      _
    %657 = vsyncpa [#allocation3], 1
    %s658 = scalar_lea.sflag [#allocation3], 1
    %659 = vsyncpa %s658, 1
    %660 = vsyncpa [#allocation5], 1

// kernel: bn_layer_forward.10
$region0: #{bn_layer_forward.10}
  #allocation0 [shape = 'u32[]', space=smem, size = 0x4, offset = 0x4, fixed_abs, tag = 'smem constant byte address 0x4 - core index']
  #allocation1 [shape = 'u32[72,128]{1,0:T(1,128)}', space=vmem, size = 0x9000, scoped, tag = 'internal scratch']
  %s0 = inlined_call_operand.vmem [shape: bf16[9,8,768], index: 0, kind: input, shape index: {}]
  %s1 = inlined_call_operand.hbm [shape: bf16[9,768,512], index: 1, kind: input, shape index: {}]
  %s2 = inlined_call_operand.hbm [shape: f32[1,512], index: 2, kind: input, shape index: {}]
  %s3 = inlined_call_operand.hbm [shape: f32[1,512], index: 3, kind: input, shape index: {}]
  %s4 = inlined_call_operand.vmem [shape: f32[8,512], index: 4, kind: output, shape index: {}]
  %s5 = sld [smem:[#allocation0]]
  $region69: #{bn_layer_forward.10} parent=0
    _
  %s7 = ssub.s32 1, %s5
  %s8 = scalar_select 0, %s7, %s5
  $region1: #{bn_layer_forward.10} parent=0
    #allocation2 [shape = 'u8[786432]{0}', space=vmem, size = 0xc0000, scoped, tag = 'input window, operand 1']
    #allocation3 [shape = 's32[2]{0}', space=sflag, size = 0x8, scoped, tag = 'scoped memory for bn_layer_forward.10']
    #allocation4 [shape = 'u8[2048]{0}', space=vmem, size = 0x800, scoped, tag = 'input window, operand 2']
    #allocation5 [shape = 's32[2]{0}', space=sflag, size = 0x8, scoped, tag = 'scoped memory for bn_layer_forward.10']
    #allocation6 [shape = 'u8[2048]{0}', space=vmem, size = 0x800, scoped, tag = 'input window, operand 3']
    %9 = vsyncpa [#allocation3], 0
    %s10 = scalar_lea.sflag [#allocation3], 1
    %11 = vsyncpa %s10, 0
    %12 = vsyncpa [#allocation5], 0
    %s13 = scalar_lea.sflag [#allocation5], 1
    %14 = vsyncpa %s13, 0
    loop: start=0, step=1, limit=20
    $region2: #{bn_layer_forward.10} parent=1 // loop_pre_header
      _
    $region3: #{bn_layer_forward.10} parent=1 // loop_header
      %s16 = sphi 0, %s20
      %p17 = scmp.ge.s32.totalorder %s16, 20
      %s23 = sphi 0, %s35
      %s24 = sphi 0, %s31
      %s25 = sphi 0, %s23
      %s26 = sphi 0, %s24
      %s27 = sphi 0, %s25
      %s28 = sphi 0, %s26
      %s38 = sphi 0, %s40
      %s41 = sphi 0, %s38
      %s42 = sphi 0, %s41
      %s58 = sphi 0, %s42
      %s66 = sphi 0, %s68
      %s69 = sphi 0, %s66
      %s70 = sphi 0, %s69
      %s86 = sphi 0, %s70
      %s92 = sphi 0, %s94
      %s95 = sphi 0, %s92
      %s96 = sphi 0, %s95
      %s112 = sphi 0, %s96
      %s118 = sphi 0, %s120
      %s121 = sphi 0, %s118
      %s122 = sphi 0, %s121
      %s138 = sphi 0, %s122
      %s144 = sphi 0, %s146
      %s147 = sphi 0, %s144
      %s148 = sphi 0, %s147
      %s164 = sphi 0, %s148
    $region4: #{bn_layer_forward.10} parent=1 // loop_header_branch
      %19 = sbr.rel (%p17) target = $region8
    $region5: #{bn_layer_forward.10} parent=1 // loop_body
      %s21 = ssub.s32 %s16, 1
      %s22 = ssub.s32 %s16, 2
      %s29 = sadd.s32 1, %s24
      %p30 = scmp.ge.s32.totalorder %s29, 9
      %s31 = scalar_select %p30, 0, %s29
      %s32 = sadd.s32 1, %s23
      %s33 = scalar_select %p30, %s32, %s23
      %p34 = scmp.ge.s32.totalorder %s33, 2
      %s35 = scalar_select %p34, 0, %s33
      %s36 = ssub.s32 %s24, %s31
      %p37 = scmp.eq.s32.totalorder %s36, 0
      %s39 = sadd.s32 %s38, 1
      %s40 = scalar_select %p37, %s38, %s39
      %p43 = pneg %p37
      %p44 = scmp.eq.s32.totalorder %s16, 17
      %p45 = por %p43, %p44
      %p46 = scmp.ne.s32.totalorder %s38, %s41
      %p47 = scmp.eq.s32.totalorder %s16, 0
      %p48 = por %p46, %p47
      %p49 = scmp.ne.s32.totalorder %s38, %s41
      %p50 = scmp.eq.s32.totalorder %s21, 17
      %p51 = por %p49, %p50
      %p52 = scmp.ne.s32.totalorder %s41, %s42
      %p53 = scmp.eq.s32.totalorder %s21, 0
      %p54 = por %p52, %p53
      %p55 = scmp.ne.s32.totalorder %s41, %s42
      %p56 = scmp.eq.s32.totalorder %s22, 17
      %p57 = por %p55, %p56
      %p59 = scmp.ne.s32.totalorder %s42, %s58
      %p60 = scmp.eq.s32.totalorder %s22, 0
      %p61 = por %p59, %p60
      %s62 = ssub.s32 %s24, %s31
      %s63 = ssub.s32 %s23, %s35
      %s64 = sor.u32 %s62, %s63
      %p65 = scmp.eq.s32.totalorder %s64, 0
      %s67 = sadd.s32 %s66, 1
      %s68 = scalar_select %p65, %s66, %s67
      %p71 = pneg %p65
      %p72 = scmp.eq.s32.totalorder %s16, 17
      %p73 = por %p71, %p72
      %p74 = scmp.ne.s32.totalorder %s66, %s69
      %p75 = scmp.eq.s32.totalorder %s16, 0
      %p76 = por %p74, %p75
      %p77 = scmp.ne.s32.totalorder %s66, %s69
      %p78 = scmp.eq.s32.totalorder %s21, 17
      %p79 = por %p77, %p78
      %p80 = scmp.ne.s32.totalorder %s69, %s70
      %p81 = scmp.eq.s32.totalorder %s21, 0
      %p82 = por %p80, %p81
      %p83 = scmp.ne.s32.totalorder %s69, %s70
      %p84 = scmp.eq.s32.totalorder %s22, 17
      %p85 = por %p83, %p84
      %p87 = scmp.ne.s32.totalorder %s70, %s86
      %p88 = scmp.eq.s32.totalorder %s22, 0
      %p89 = por %p87, %p88
      %s90 = ssub.s32 %s23, %s35
      %p91 = scmp.eq.s32.totalorder %s90, 0
      %s93 = sadd.s32 %s92, 1
      %s94 = scalar_select %p91, %s92, %s93
      %p97 = pneg %p91
      %p98 = scmp.eq.s32.totalorder %s16, 17
      %p99 = por %p97, %p98
      %p100 = scmp.ne.s32.totalorder %s92, %s95
      %p101 = scmp.eq.s32.totalorder %s16, 0
      %p102 = por %p100, %p101
      %p103 = scmp.ne.s32.totalorder %s92, %s95
      %p104 = scmp.eq.s32.totalorder %s21, 17
      %p105 = por %p103, %p104
      %p106 = scmp.ne.s32.totalorder %s95, %s96
      %p107 = scmp.eq.s32.totalorder %s21, 0
      %p108 = por %p106, %p107
      %p109 = scmp.ne.s32.totalorder %s95, %s96
      %p110 = scmp.eq.s32.totalorder %s22, 17
      %p111 = por %p109, %p110
      %p113 = scmp.ne.s32.totalorder %s96, %s112
      %p114 = scmp.eq.s32.totalorder %s22, 0
      %p115 = por %p113, %p114
      %s116 = ssub.s32 %s23, %s35
      %p117 = scmp.eq.s32.totalorder %s116, 0
      %s119 = sadd.s32 %s118, 1
      %s120 = scalar_select %p117, %s118, %s119
      %p123 = pneg %p117
      %p124 = scmp.eq.s32.totalorder %s16, 17
      %p125 = por %p123, %p124
      %p126 = scmp.ne.s32.totalorder %s118, %s121
      %p127 = scmp.eq.s32.totalorder %s16, 0
      %p128 = por %p126, %p127
      %p129 = scmp.ne.s32.totalorder %s118, %s121
      %p130 = scmp.eq.s32.totalorder %s21, 17
      %p131 = por %p129, %p130
      %p132 = scmp.ne.s32.totalorder %s121, %s122
      %p133 = scmp.eq.s32.totalorder %s21, 0
      %p134 = por %p132, %p133
      %p135 = scmp.ne.s32.totalorder %s121, %s122
      %p136 = scmp.eq.s32.totalorder %s22, 17
      %p137 = por %p135, %p136
      %p139 = scmp.ne.s32.totalorder %s122, %s138
      %p140 = scmp.eq.s32.totalorder %s22, 0
      %p141 = por %p139, %p140
      %s142 = ssub.s32 %s23, %s35
      %p143 = scmp.eq.s32.totalorder %s142, 0
      %s145 = sadd.s32 %s144, 1
      %s146 = scalar_select %p143, %s144, %s145
      %p149 = pneg %p143
      %p150 = scmp.eq.s32.totalorder %s16, 17
      %p151 = por %p149, %p150
      %p152 = scmp.ne.s32.totalorder %s144, %s147
      %p153 = scmp.eq.s32.totalorder %s16, 0
      %p154 = por %p152, %p153
      %p155 = scmp.ne.s32.totalorder %s144, %s147
      %p156 = scmp.eq.s32.totalorder %s21, 17
      %p157 = por %p155, %p156
      %p158 = scmp.ne.s32.totalorder %s147, %s148
      %p159 = scmp.eq.s32.totalorder %s21, 0
      %p160 = por %p158, %p159
      %p161 = scmp.ne.s32.totalorder %s147, %s148
      %p162 = scmp.eq.s32.totalorder %s22, 17
      %p163 = por %p161, %p162
      %p165 = scmp.ne.s32.totalorder %s148, %s164
      %p166 = scmp.eq.s32.totalorder %s22, 0
      %p167 = por %p165, %p166
      %p168 = scmp.le.s32.totalorder 1, %s16
      %p169 = scmp.lt.s32.totalorder %s16, 19
      %p170 = pnand %p168, %p169
      %p171 = pneg %p170
      // Predicated region
      $region9: #{bn_layer_forward.10} parent=5 // pred_check
        _
      $region10: #{bn_layer_forward.10} parent=5 // pred_check_branch
        %173 = sbr.rel (%p170) target = $region12
      $region11: #{bn_layer_forward.10} parent=5 // pred_region
        %s174 = ssub.s32 %s16, 1
      $region12: #{bn_layer_forward.10} parent=5 // pred_fallthru
        _
      %p175 = scmp.lt.s32.totalorder %s16, 18
      // Predicated region
      $region13: #{bn_layer_forward.10} parent=5 // pred_check
        %p176 = pneg %p175
      $region14: #{bn_layer_forward.10} parent=5 // pred_check_branch
        %178 = sbr.rel (%p176) target = $region16
      $region15: #{bn_layer_forward.10} parent=5 // pred_region
        // Predicated region
        $region17: #{bn_layer_forward.10} parent=15 // pred_check
          %p179 = pneg %p48
        $region18: #{bn_layer_forward.10} parent=15 // pred_check_branch
          %181 = sbr.rel (%p179) target = $region20
        $region19: #{bn_layer_forward.10} parent=15 // pred_region
          %p182 = scmp.lt.s32.totalorder %s24, 8
          %s183 = scalar_select %p182, %s24, 8
          %s184 = smul.addr %s183, 6
          %s185 = smul.addr %s184, 4
          %s186 = scalar_lea.vmem %s0, %s185
        $region20: #{bn_layer_forward.10} parent=15 // pred_fallthru
          _
        // Predicated region
        $region21: #{bn_layer_forward.10} parent=15 // pred_check
          %p187 = pneg %p76
        $region22: #{bn_layer_forward.10} parent=15 // pred_check_branch
          %189 = sbr.rel (%p187) target = $region24
        $region23: #{bn_layer_forward.10} parent=15 // pred_region
          %s190 = sand.u32 %s66, 1
          %s191 = scalar_lea.sflag [#allocation3], %s190
          %s192 = sand.u32 %s66, 1
          %s193 = smul.addr %s192, 768
          %s194 = scalar_lea.vmem [#allocation2], %s193
          %s195 = smul.u32 2, %s23
          %197 = vsyncadd %s191, 0
          %s198 = smul.addr %s24, 384
          %s199 = sadd.s32 %s195, %s198
          %s200 = smul.addr %s199, 4
          %s201 = scalar_lea.hbm %s1, %s200
          %s202 = sshll.u32 %s201, 4
          %s203 = int_to_ptr.hbm [resolvable:$true] %s202
          %s204 = sshll.u32 %s194, 4
          %s205 = int_to_ptr.vmem [resolvable:$true] %s204
          %210 = dma.hbm_to_vmem [thread:$0]  %s203, 12288, %s205, %s191, 256, 128, 8
        $region24: #{bn_layer_forward.10} parent=15 // pred_fallthru
          _
        // Predicated region
        $region25: #{bn_layer_forward.10} parent=15 // pred_check
          %p211 = pneg %p102
        $region26: #{bn_layer_forward.10} parent=15 // pred_check_branch
          %213 = sbr.rel (%p211) target = $region28
        $region27: #{bn_layer_forward.10} parent=15 // pred_region
          %s214 = sand.u32 %s16, 1
          %s215 = scalar_lea.sflag [#allocation5], %s214
          %s216 = sand.u32 %s92, 1
          %s217 = smul.addr %s216, 2
          %s218 = scalar_lea.vmem [#allocation4], %s217
          %s219 = smul.u32 2, %s23
          %221 = vsyncadd %s215, 0
          %s222 = scalar_lea.hbm %s2, %s219
          %s224 = sshll.u32 %s222, 4
          %s225 = int_to_ptr.hbm [resolvable:$true] %s224
          %s226 = sshll.u32 %s218, 4
          %s227 = int_to_ptr.vmem [resolvable:$true] %s226
          %229 = dma.hbm_to_vmem [thread:$0]  %s225, 32, %s227, %s215
        $region28: #{bn_layer_forward.10} parent=15 // pred_fallthru
          _
        // Predicated region
        $region29: #{bn_layer_forward.10} parent=15 // pred_check
          %p230 = pneg %p128
        $region30: #{bn_layer_forward.10} parent=15 // pred_check_branch
          %232 = sbr.rel (%p230) target = $region32
        $region31: #{bn_layer_forward.10} parent=15 // pred_region
          %s233 = sand.u32 %s16, 1
          %s234 = scalar_lea.sflag [#allocation5], %s233
          %s235 = sand.u32 %s118, 1
          %s236 = smul.addr %s235, 2
          %s237 = scalar_lea.vmem [#allocation6], %s236
          %s238 = smul.u32 2, %s23
          %240 = vsyncadd %s234, 0
          %s241 = scalar_lea.hbm %s3, %s238
          %s243 = sshll.u32 %s241, 4
          %s244 = int_to_ptr.hbm [resolvable:$true] %s243
          %s245 = sshll.u32 %s237, 4
          %s246 = int_to_ptr.vmem [resolvable:$true] %s245
          %248 = dma.hbm_to_vmem [thread:$0]  %s244, 32, %s246, %s234
        $region32: #{bn_layer_forward.10} parent=15 // pred_fallthru
          _
      $region16: #{bn_layer_forward.10} parent=5 // pred_fallthru
        _
      %p249 = scmp.le.s32.totalorder 1, %s16
      %p250 = scmp.lt.s32.totalorder %s16, 19
      %p251 = pnand %p249, %p250
      %p252 = pneg %p251
      // Predicated region
      $region33: #{bn_layer_forward.10} parent=5 // pred_check
        _
      $region34: #{bn_layer_forward.10} parent=5 // pred_check_branch
        %254 = sbr.rel (%p251) target = $region36
      $region35: #{bn_layer_forward.10} parent=5 // pred_region
        %s255 = ssub.s32 %s16, 1
        %s256 = sand.u32 %s69, 1
        %s257 = scalar_lea.sflag [#allocation3], %s256
        %s258 = sand.u32 %s69, 1
        %s259 = smul.addr %s258, 768
        %s260 = scalar_lea.vmem [#allocation2], %s259
        // Predicated region
        $region37: #{bn_layer_forward.10} parent=35 // pred_check
          %p261 = pneg %p82
        $region38: #{bn_layer_forward.10} parent=35 // pred_check_branch
          %263 = sbr.rel (%p261) target = $region40
        $region39: #{bn_layer_forward.10} parent=35 // pred_region
          %265 = dma.done %s257, 12288
        $region40: #{bn_layer_forward.10} parent=35 // pred_fallthru
          _
        %s266 = sand.u32 %s21, 1
        %s267 = scalar_lea.sflag [#allocation5], %s266
        %s268 = sand.u32 %s95, 1
        %s269 = smul.addr %s268, 2
        %s270 = scalar_lea.vmem [#allocation4], %s269
        // Predicated region
        $region41: #{bn_layer_forward.10} parent=35 // pred_check
          %p271 = pneg %p108
        $region42: #{bn_layer_forward.10} parent=35 // pred_check_branch
          %273 = sbr.rel (%p271) target = $region44
        $region43: #{bn_layer_forward.10} parent=35 // pred_region
          %275 = dma.done %s267, 32
        $region44: #{bn_layer_forward.10} parent=35 // pred_fallthru
          _
        %s276 = sand.u32 %s21, 1
        %s277 = scalar_lea.sflag [#allocation5], %s276
        %s278 = sand.u32 %s121, 1
        %s279 = smul.addr %s278, 2
        %s280 = scalar_lea.vmem [#allocation6], %s279
        // Predicated region
        $region45: #{bn_layer_forward.10} parent=35 // pred_check
          %p281 = pneg %p134
        $region46: #{bn_layer_forward.10} parent=35 // pred_check_branch
          %283 = sbr.rel (%p281) target = $region48
        $region47: #{bn_layer_forward.10} parent=35 // pred_region
          %285 = dma.done %s277, 32
        $region48: #{bn_layer_forward.10} parent=35 // pred_fallthru
          _
        %p286 = scmp.lt.s32.totalorder %s26, 8
        %s287 = scalar_select %p286, %s26, 8
        %s288 = smul.addr %s287, 6
        %s289 = smul.addr %s288, 4
        %s290 = scalar_lea.vmem %s0, %s289
        %p291 = pneg %p54
        %p292 = pneg %p51
        %s293 = sand.u32 %s69, 1
        %s294 = scalar_lea.sflag [#allocation3], %s293
        %s295 = sand.u32 %s69, 1
        %s296 = smul.addr %s295, 768
        %s297 = scalar_lea.vmem [#allocation2], %s296
        %p298 = pneg %p82
        %p299 = pneg %p79
        %s300 = sand.u32 %s21, 1
        %s301 = scalar_lea.sflag [#allocation5], %s300
        %s302 = sand.u32 %s95, 1
        %s303 = smul.addr %s302, 2
        %s304 = scalar_lea.vmem [#allocation4], %s303
        %p305 = pneg %p108
        %p306 = pneg %p105
        %s307 = sand.u32 %s21, 1
        %s308 = scalar_lea.sflag [#allocation5], %s307
        %s309 = sand.u32 %s121, 1
        %s310 = smul.addr %s309, 2
        %s311 = scalar_lea.vmem [#allocation6], %s310
        %p312 = pneg %p134
        %p313 = pneg %p131
        %p314 = pneg %p160
        %p315 = pneg %p157
        %s316 = smul.u32 2, %s25
        %p317 = scmp.lt.s32.totalorder %s316, 3
        %s318 = scalar_select %p317, %s316, 3
        %s319 = smul.addr %s318, 8
        %s320 = scalar_lea.vmem %s4, %s319
        %p321 = scmp.lt.s32.totalorder %s26, 8
        %s322 = scalar_select %p321, %s26, 8
        %s323 = smul.addr %s322, 6
        %s324 = smul.addr %s323, 4
        %s325 = scalar_lea.vmem %s0, %s324
        %s326 = smul.u32 2, %s25
        %s327 = smul.u32 2, %s25
        %s328 = smul.u32 2, %s25
        %s329 = smul.u32 2, %s25
        %p330 = scmp.lt.s32.totalorder %s329, 3
        %s331 = scalar_select %p330, %s329, 3
        %s332 = smul.addr %s331, 8
        %s333 = scalar_lea.vmem %s4, %s332
        %s334 = smul.u32 2, %s25
        %p335 = scmp.eq.s32.totalorder %s26, 0
        // Predicated region
        $region49: #{bn_layer_forward.10} parent=35 // pred_check
          %p336 = pneg %p335
        $region50: #{bn_layer_forward.10} parent=35 // pred_check_branch
          %338 = sbr.rel (%p336) target = $region52
        $region51: #{bn_layer_forward.10} parent=35 // pred_region
          %339 = vst [vmem:[%s333] sm:$0xff] 0.0
          %340 = vst [vmem:[%s333 + $0x8] sm:$0xff] 0.0
        $region52: #{bn_layer_forward.10} parent=35 // pred_fallthru
          _
        %v341 = vld [vmem:[%s333] sm:$0xff]
        %v342 = vld [vmem:[%s333 + $0x8] sm:$0xff]
        %v343 = vld [vmem:[%s325] sm:$0xff]
        %v344 = vld [vmem:[%s325 + $0x8] sm:$0xff]
        %v345 = vld [vmem:[%s325 + $0x10] sm:$0xff]
        %v346 = vld [vmem:[%s260] sm:$0xff]
        %v347 = vld [vmem:[%s260 + $0x8] sm:$0xff]
        %v348 = vld [vmem:[%s260 + $0x10] sm:$0xff]
        %v349 = vld [vmem:[%s260 + $0x18] sm:$0xff]
        %v350 = vld [vmem:[%s260 + $0x20] sm:$0xff]
        %v351 = vld [vmem:[%s260 + $0x28] sm:$0xff]
        %v352 = vld [vmem:[%s260 + $0x30] sm:$0xff]
        %v353 = vld [vmem:[%s260 + $0x38] sm:$0xff]
        %v354 = vld [vmem:[%s260 + $0x40] sm:$0xff]
        %v355 = vld [vmem:[%s260 + $0x48] sm:$0xff]
        %v356 = vld [vmem:[%s260 + $0x50] sm:$0xff]
        %v357 = vld [vmem:[%s260 + $0x58] sm:$0xff]
        %v358 = vld [vmem:[%s260 + $0x60] sm:$0xff]
        %v359 = vld [vmem:[%s260 + $0x68] sm:$0xff]
        %v360 = vld [vmem:[%s260 + $0x70] sm:$0xff]
        %v361 = vld [vmem:[%s260 + $0x78] sm:$0xff]
        %v362 = vld [vmem:[%s260 + $0x80] sm:$0xff]
        %v363 = vld [vmem:[%s260 + $0x88] sm:$0xff]
        %v364 = vld [vmem:[%s260 + $0x90] sm:$0xff]
        %v365 = vld [vmem:[%s260 + $0x98] sm:$0xff]
        %v366 = vld [vmem:[%s260 + $0xa0] sm:$0xff]
        %v367 = vld [vmem:[%s260 + $0xa8] sm:$0xff]
        %v368 = vld [vmem:[%s260 + $0xb0] sm:$0xff]
        %v369 = vld [vmem:[%s260 + $0xb8] sm:$0xff]
        %v370 = vld [vmem:[%s260 + $0xc0] sm:$0xff]
        %v371 = vld [vmem:[%s260 + $0xc8] sm:$0xff]
        %v372 = vld [vmem:[%s260 + $0xd0] sm:$0xff]
        %v373 = vld [vmem:[%s260 + $0xd8] sm:$0xff]
        %v374 = vld [vmem:[%s260 + $0xe0] sm:$0xff]
        %v375 = vld [vmem:[%s260 + $0xe8] sm:$0xff]
        %v376 = vld [vmem:[%s260 + $0xf0] sm:$0xff]
        %v377 = vld [vmem:[%s260 + $0xf8] sm:$0xff]
        %v378 = vld [vmem:[%s260 + $0x100] sm:$0xff]
        %v379 = vld [vmem:[%s260 + $0x108] sm:$0xff]
        %v380 = vld [vmem:[%s260 + $0x110] sm:$0xff]
        %v381 = vld [vmem:[%s260 + $0x118] sm:$0xff]
        %v382 = vld [vmem:[%s260 + $0x120] sm:$0xff]
        %v383 = vld [vmem:[%s260 + $0x128] sm:$0xff]
        %v384 = vld [vmem:[%s260 + $0x130] sm:$0xff]
        %v385 = vld [vmem:[%s260 + $0x138] sm:$0xff]
        %v386 = vld [vmem:[%s260 + $0x140] sm:$0xff]
        %v387 = vld [vmem:[%s260 + $0x148] sm:$0xff]
        %v388 = vld [vmem:[%s260 + $0x150] sm:$0xff]
        %v389 = vld [vmem:[%s260 + $0x158] sm:$0xff]
        %v390 = vld [vmem:[%s260 + $0x160] sm:$0xff]
        %v391 = vld [vmem:[%s260 + $0x168] sm:$0xff]
        %v392 = vld [vmem:[%s260 + $0x170] sm:$0xff]
        %v393 = vld [vmem:[%s260 + $0x178] sm:$0xff]
        %v394 = vld [vmem:[%s260 + $0x180] sm:$0xff]
        %v395 = vld [vmem:[%s260 + $0x188] sm:$0xff]
        %v396 = vld [vmem:[%s260 + $0x190] sm:$0xff]
        %v397 = vld [vmem:[%s260 + $0x198] sm:$0xff]
        %v398 = vld [vmem:[%s260 + $0x1a0] sm:$0xff]
        %v399 = vld [vmem:[%s260 + $0x1a8] sm:$0xff]
        %v400 = vld [vmem:[%s260 + $0x1b0] sm:$0xff]
        %v401 = vld [vmem:[%s260 + $0x1b8] sm:$0xff]
        %v402 = vld [vmem:[%s260 + $0x1c0] sm:$0xff]
        %v403 = vld [vmem:[%s260 + $0x1c8] sm:$0xff]
        %v404 = vld [vmem:[%s260 + $0x1d0] sm:$0xff]
        %v405 = vld [vmem:[%s260 + $0x1d8] sm:$0xff]
        %v406 = vld [vmem:[%s260 + $0x1e0] sm:$0xff]
        %v407 = vld [vmem:[%s260 + $0x1e8] sm:$0xff]
        %v408 = vld [vmem:[%s260 + $0x1f0] sm:$0xff]
        %v409 = vld [vmem:[%s260 + $0x1f8] sm:$0xff]
        %v410 = vld [vmem:[%s260 + $0x200] sm:$0xff]
        %v411 = vld [vmem:[%s260 + $0x208] sm:$0xff]
        %v412 = vld [vmem:[%s260 + $0x210] sm:$0xff]
        %v413 = vld [vmem:[%s260 + $0x218] sm:$0xff]
        %v414 = vld [vmem:[%s260 + $0x220] sm:$0xff]
        %v415 = vld [vmem:[%s260 + $0x228] sm:$0xff]
        %v416 = vld [vmem:[%s260 + $0x230] sm:$0xff]
        %v417 = vld [vmem:[%s260 + $0x238] sm:$0xff]
        %v418 = vld [vmem:[%s260 + $0x240] sm:$0xff]
        %v419 = vld [vmem:[%s260 + $0x248] sm:$0xff]
        %v420 = vld [vmem:[%s260 + $0x250] sm:$0xff]
        %v421 = vld [vmem:[%s260 + $0x258] sm:$0xff]
        %v422 = vld [vmem:[%s260 + $0x260] sm:$0xff]
        %v423 = vld [vmem:[%s260 + $0x268] sm:$0xff]
        %v424 = vld [vmem:[%s260 + $0x270] sm:$0xff]
        %v425 = vld [vmem:[%s260 + $0x278] sm:$0xff]
        %v426 = vld [vmem:[%s260 + $0x280] sm:$0xff]
        %v427 = vld [vmem:[%s260 + $0x288] sm:$0xff]
        %v428 = vld [vmem:[%s260 + $0x290] sm:$0xff]
        %v429 = vld [vmem:[%s260 + $0x298] sm:$0xff]
        %v430 = vld [vmem:[%s260 + $0x2a0] sm:$0xff]
        %v431 = vld [vmem:[%s260 + $0x2a8] sm:$0xff]
        %v432 = vld [vmem:[%s260 + $0x2b0] sm:$0xff]
        %v433 = vld [vmem:[%s260 + $0x2b8] sm:$0xff]
        %v434 = vld [vmem:[%s260 + $0x2c0] sm:$0xff]
        %v435 = vld [vmem:[%s260 + $0x2c8] sm:$0xff]
        %v436 = vld [vmem:[%s260 + $0x2d0] sm:$0xff]
        %v437 = vld [vmem:[%s260 + $0x2d8] sm:$0xff]
        %v438 = vld [vmem:[%s260 + $0x2e0] sm:$0xff]
        %v439 = vld [vmem:[%s260 + $0x2e8] sm:$0xff]
        %v440 = vld [vmem:[%s260 + $0x2f0] sm:$0xff]
        %v441 = vld [vmem:[%s260 + $0x2f8] sm:$0xff]
        %v445 = vunpack.c.l.b16 %v343
        %v446 = vunpack.c.h.b16 %v343
        %v447 = vunpack.c.l.b16 %v344
        %v448 = vunpack.c.h.b16 %v344
        %v449 = vunpack.c.l.b16 %v345
        %v450 = vunpack.c.h.b16 %v345
        %v451 = vpack.c.b16 %v445, %v445
        %v452 = vpack.c.b16 %v446, %v446
        %v453 = vpack.c.b16 %v447, %v447
        %v454 = vpack.c.b16 %v448, %v448
        %v455 = vpack.c.b16 %v449, %v449
        %v456 = vpack.c.b16 %v450, %v450
        %v559 = vunpack.c.l.b16 %v346
        %v560 = vunpack.c.h.b16 %v346
        %v561 = vunpack.c.l.b16 %v347
        %v562 = vunpack.c.h.b16 %v347
        %v563 = vunpack.c.l.b16 %v348
        %v564 = vunpack.c.h.b16 %v348
        %v565 = vunpack.c.l.b16 %v349
        %v566 = vunpack.c.h.b16 %v349
        %v567 = vunpack.c.l.b16 %v350
        %v568 = vunpack.c.h.b16 %v350
        %v569 = vunpack.c.l.b16 %v351
        %v570 = vunpack.c.h.b16 %v351
        %v571 = vunpack.c.l.b16 %v352
        %v572 = vunpack.c.h.b16 %v352
        %v573 = vunpack.c.l.b16 %v353
        %v574 = vunpack.c.h.b16 %v353
        %v575 = vunpack.c.l.b16 %v354
        %v576 = vunpack.c.h.b16 %v354
        %v577 = vunpack.c.l.b16 %v355
        %v578 = vunpack.c.h.b16 %v355
        %v579 = vunpack.c.l.b16 %v356
        %v580 = vunpack.c.h.b16 %v356
        %v581 = vunpack.c.l.b16 %v357
        %v582 = vunpack.c.h.b16 %v357
        %v583 = vunpack.c.l.b16 %v358
        %v584 = vunpack.c.h.b16 %v358
        %v585 = vunpack.c.l.b16 %v359
        %v586 = vunpack.c.h.b16 %v359
        %v587 = vunpack.c.l.b16 %v360
        %v588 = vunpack.c.h.b16 %v360
        %v589 = vunpack.c.l.b16 %v361
        %v590 = vunpack.c.h.b16 %v361
        %v591 = vunpack.c.l.b16 %v362
        %v592 = vunpack.c.h.b16 %v362
        %v593 = vunpack.c.l.b16 %v363
        %v594 = vunpack.c.h.b16 %v363
        %v595 = vunpack.c.l.b16 %v364
        %v596 = vunpack.c.h.b16 %v364
        %v597 = vunpack.c.l.b16 %v365
        %v598 = vunpack.c.h.b16 %v365
        %v599 = vunpack.c.l.b16 %v366
        %v600 = vunpack.c.h.b16 %v366
        %v601 = vunpack.c.l.b16 %v367
        %v602 = vunpack.c.h.b16 %v367
        %v603 = vunpack.c.l.b16 %v368
        %v604 = vunpack.c.h.b16 %v368
        %v605 = vunpack.c.l.b16 %v369
        %v606 = vunpack.c.h.b16 %v369
        %v607 = vunpack.c.l.b16 %v370
        %v608 = vunpack.c.h.b16 %v370
        %v609 = vunpack.c.l.b16 %v371
        %v610 = vunpack.c.h.b16 %v371
        %v611 = vunpack.c.l.b16 %v372
        %v612 = vunpack.c.h.b16 %v372
        %v613 = vunpack.c.l.b16 %v373
        %v614 = vunpack.c.h.b16 %v373
        %v615 = vunpack.c.l.b16 %v374
        %v616 = vunpack.c.h.b16 %v374
        %v617 = vunpack.c.l.b16 %v375
        %v618 = vunpack.c.h.b16 %v375
        %v619 = vunpack.c.l.b16 %v376
        %v620 = vunpack.c.h.b16 %v376
        %v621 = vunpack.c.l.b16 %v377
        %v622 = vunpack.c.h.b16 %v377
        %v623 = vunpack.c.l.b16 %v378
        %v624 = vunpack.c.h.b16 %v378
        %v625 = vunpack.c.l.b16 %v379
        %v626 = vunpack.c.h.b16 %v379
        %v627 = vunpack.c.l.b16 %v380
        %v628 = vunpack.c.h.b16 %v380
        %v629 = vunpack.c.l.b16 %v381
        %v630 = vunpack.c.h.b16 %v381
        %v631 = vunpack.c.l.b16 %v382
        %v632 = vunpack.c.h.b16 %v382
        %v633 = vunpack.c.l.b16 %v383
        %v634 = vunpack.c.h.b16 %v383
        %v635 = vunpack.c.l.b16 %v384
        %v636 = vunpack.c.h.b16 %v384
        %v637 = vunpack.c.l.b16 %v385
        %v638 = vunpack.c.h.b16 %v385
        %v639 = vunpack.c.l.b16 %v386
        %v640 = vunpack.c.h.b16 %v386
        %v641 = vunpack.c.l.b16 %v387
        %v642 = vunpack.c.h.b16 %v387
        %v643 = vunpack.c.l.b16 %v388
        %v644 = vunpack.c.h.b16 %v388
        %v645 = vunpack.c.l.b16 %v389
        %v646 = vunpack.c.h.b16 %v389
        %v647 = vunpack.c.l.b16 %v390
        %v648 = vunpack.c.h.b16 %v390
        %v649 = vunpack.c.l.b16 %v391
        %v650 = vunpack.c.h.b16 %v391
        %v651 = vunpack.c.l.b16 %v392
        %v652 = vunpack.c.h.b16 %v392
        %v653 = vunpack.c.l.b16 %v393
        %v654 = vunpack.c.h.b16 %v393
        %v655 = vunpack.c.l.b16 %v394
        %v656 = vunpack.c.h.b16 %v394
        %v657 = vunpack.c.l.b16 %v395
        %v658 = vunpack.c.h.b16 %v395
        %v659 = vunpack.c.l.b16 %v396
        %v660 = vunpack.c.h.b16 %v396
        %v661 = vunpack.c.l.b16 %v397
        %v662 = vunpack.c.h.b16 %v397
        %v663 = vunpack.c.l.b16 %v398
        %v664 = vunpack.c.h.b16 %v398
        %v665 = vunpack.c.l.b16 %v399
        %v666 = vunpack.c.h.b16 %v399
        %v667 = vunpack.c.l.b16 %v400
        %v668 = vunpack.c.h.b16 %v400
        %v669 = vunpack.c.l.b16 %v401
        %v670 = vunpack.c.h.b16 %v401
        %v671 = vunpack.c.l.b16 %v402
        %v672 = vunpack.c.h.b16 %v402
        %v673 = vunpack.c.l.b16 %v403
        %v674 = vunpack.c.h.b16 %v403
        %v675 = vunpack.c.l.b16 %v404
        %v676 = vunpack.c.h.b16 %v404
        %v677 = vunpack.c.l.b16 %v405
        %v678 = vunpack.c.h.b16 %v405
        %v679 = vunpack.c.l.b16 %v406
        %v680 = vunpack.c.h.b16 %v406
        %v681 = vunpack.c.l.b16 %v407
        %v682 = vunpack.c.h.b16 %v407
        %v683 = vunpack.c.l.b16 %v408
        %v684 = vunpack.c.h.b16 %v408
        %v685 = vunpack.c.l.b16 %v409
        %v686 = vunpack.c.h.b16 %v409
        %v687 = vunpack.c.l.b16 %v410
        %v688 = vunpack.c.h.b16 %v410
        %v689 = vunpack.c.l.b16 %v411
        %v690 = vunpack.c.h.b16 %v411
        %v691 = vunpack.c.l.b16 %v412
        %v692 = vunpack.c.h.b16 %v412
        %v693 = vunpack.c.l.b16 %v413
        %v694 = vunpack.c.h.b16 %v413
        %v695 = vunpack.c.l.b16 %v414
        %v696 = vunpack.c.h.b16 %v414
        %v697 = vunpack.c.l.b16 %v415
        %v698 = vunpack.c.h.b16 %v415
        %v699 = vunpack.c.l.b16 %v416
        %v700 = vunpack.c.h.b16 %v416
        %v701 = vunpack.c.l.b16 %v417
        %v702 = vunpack.c.h.b16 %v417
        %v703 = vunpack.c.l.b16 %v418
        %v704 = vunpack.c.h.b16 %v418
        %v705 = vunpack.c.l.b16 %v419
        %v706 = vunpack.c.h.b16 %v419
        %v707 = vunpack.c.l.b16 %v420
        %v708 = vunpack.c.h.b16 %v420
        %v709 = vunpack.c.l.b16 %v421
        %v710 = vunpack.c.h.b16 %v421
        %v711 = vunpack.c.l.b16 %v422
        %v712 = vunpack.c.h.b16 %v422
        %v713 = vunpack.c.l.b16 %v423
        %v714 = vunpack.c.h.b16 %v423
        %v715 = vunpack.c.l.b16 %v424
        %v716 = vunpack.c.h.b16 %v424
        %v717 = vunpack.c.l.b16 %v425
        %v718 = vunpack.c.h.b16 %v425
        %v719 = vunpack.c.l.b16 %v426
        %v720 = vunpack.c.h.b16 %v426
        %v721 = vunpack.c.l.b16 %v427
        %v722 = vunpack.c.h.b16 %v427
        %v723 = vunpack.c.l.b16 %v428
        %v724 = vunpack.c.h.b16 %v428
        %v725 = vunpack.c.l.b16 %v429
        %v726 = vunpack.c.h.b16 %v429
        %v727 = vunpack.c.l.b16 %v430
        %v728 = vunpack.c.h.b16 %v430
        %v729 = vunpack.c.l.b16 %v431
        %v730 = vunpack.c.h.b16 %v431
        %v731 = vunpack.c.l.b16 %v432
        %v732 = vunpack.c.h.b16 %v432
        %v733 = vunpack.c.l.b16 %v433
        %v734 = vunpack.c.h.b16 %v433
        %v735 = vunpack.c.l.b16 %v434
        %v736 = vunpack.c.h.b16 %v434
        %v737 = vunpack.c.l.b16 %v435
        %v738 = vunpack.c.h.b16 %v435
        %v739 = vunpack.c.l.b16 %v436
        %v740 = vunpack.c.h.b16 %v436
        %v741 = vunpack.c.l.b16 %v437
        %v742 = vunpack.c.h.b16 %v437
        %v743 = vunpack.c.l.b16 %v438
        %v744 = vunpack.c.h.b16 %v438
        %v745 = vunpack.c.l.b16 %v439
        %v746 = vunpack.c.h.b16 %v439
        %v747 = vunpack.c.l.b16 %v440
        %v748 = vunpack.c.h.b16 %v440
        %v749 = vunpack.c.l.b16 %v441
        %v750 = vunpack.c.h.b16 %v441
        %v751 = vpack.c.b16 %v561, %v559
        %v752 = vpack.c.b16 %v562, %v560
        %v753 = vpack.c.b16 %v565, %v563
        %v754 = vpack.c.b16 %v566, %v564
        %v755 = vpack.c.b16 %v569, %v567
        %v756 = vpack.c.b16 %v570, %v568
        %v757 = vpack.c.b16 %v573, %v571
        %v758 = vpack.c.b16 %v574, %v572
        %v759 = vpack.c.b16 %v577, %v575
        %v760 = vpack.c.b16 %v578, %v576
        %v761 = vpack.c.b16 %v581, %v579
        %v762 = vpack.c.b16 %v582, %v580
        %v763 = vpack.c.b16 %v585, %v583
        %v764 = vpack.c.b16 %v586, %v584
        %v765 = vpack.c.b16 %v589, %v587
        %v766 = vpack.c.b16 %v590, %v588
        %v767 = vpack.c.b16 %v593, %v591
        %v768 = vpack.c.b16 %v594, %v592
        %v769 = vpack.c.b16 %v597, %v595
        %v770 = vpack.c.b16 %v598, %v596
        %v771 = vpack.c.b16 %v601, %v599
        %v772 = vpack.c.b16 %v602, %v600
        %v773 = vpack.c.b16 %v605, %v603
        %v774 = vpack.c.b16 %v606, %v604
        %v775 = vpack.c.b16 %v609, %v607
        %v776 = vpack.c.b16 %v610, %v608
        %v777 = vpack.c.b16 %v613, %v611
        %v778 = vpack.c.b16 %v614, %v612
        %v779 = vpack.c.b16 %v617, %v615
        %v780 = vpack.c.b16 %v618, %v616
        %v781 = vpack.c.b16 %v621, %v619
        %v782 = vpack.c.b16 %v622, %v620
        %v783 = vpack.c.b16 %v625, %v623
        %v784 = vpack.c.b16 %v626, %v624
        %v785 = vpack.c.b16 %v629, %v627
        %v786 = vpack.c.b16 %v630, %v628
        %v787 = vpack.c.b16 %v633, %v631
        %v788 = vpack.c.b16 %v634, %v632
        %v789 = vpack.c.b16 %v637, %v635
        %v790 = vpack.c.b16 %v638, %v636
        %v791 = vpack.c.b16 %v641, %v639
        %v792 = vpack.c.b16 %v642, %v640
        %v793 = vpack.c.b16 %v645, %v643
        %v794 = vpack.c.b16 %v646, %v644
        %v795 = vpack.c.b16 %v649, %v647
        %v796 = vpack.c.b16 %v650, %v648
        %v797 = vpack.c.b16 %v653, %v651
        %v798 = vpack.c.b16 %v654, %v652
        %v799 = vpack.c.b16 %v657, %v655
        %v800 = vpack.c.b16 %v658, %v656
        %v801 = vpack.c.b16 %v661, %v659
        %v802 = vpack.c.b16 %v662, %v660
        %v803 = vpack.c.b16 %v665, %v663
        %v804 = vpack.c.b16 %v666, %v664
        %v805 = vpack.c.b16 %v669, %v667
        %v806 = vpack.c.b16 %v670, %v668
        %v807 = vpack.c.b16 %v673, %v671
        %v808 = vpack.c.b16 %v674, %v672
        %v809 = vpack.c.b16 %v677, %v675
        %v810 = vpack.c.b16 %v678, %v676
        %v811 = vpack.c.b16 %v681, %v679
        %v812 = vpack.c.b16 %v682, %v680
        %v813 = vpack.c.b16 %v685, %v683
        %v814 = vpack.c.b16 %v686, %v684
        %v815 = vpack.c.b16 %v689, %v687
        %v816 = vpack.c.b16 %v690, %v688
        %v817 = vpack.c.b16 %v693, %v691
        %v818 = vpack.c.b16 %v694, %v692
        %v819 = vpack.c.b16 %v697, %v695
        %v820 = vpack.c.b16 %v698, %v696
        %v821 = vpack.c.b16 %v701, %v699
        %v822 = vpack.c.b16 %v702, %v700
        %v823 = vpack.c.b16 %v705, %v703
        %v824 = vpack.c.b16 %v706, %v704
        %v825 = vpack.c.b16 %v709, %v707
        %v826 = vpack.c.b16 %v710, %v708
        %v827 = vpack.c.b16 %v713, %v711
        %v828 = vpack.c.b16 %v714, %v712
        %v829 = vpack.c.b16 %v717, %v715
        %v830 = vpack.c.b16 %v718, %v716
        %v831 = vpack.c.b16 %v721, %v719
        %v832 = vpack.c.b16 %v722, %v720
        %v833 = vpack.c.b16 %v725, %v723
        %v834 = vpack.c.b16 %v726, %v724
        %v835 = vpack.c.b16 %v729, %v727
        %v836 = vpack.c.b16 %v730, %v728
        %v837 = vpack.c.b16 %v733, %v731
        %v838 = vpack.c.b16 %v734, %v732
        %v839 = vpack.c.b16 %v737, %v735
        %v840 = vpack.c.b16 %v738, %v736
        %v841 = vpack.c.b16 %v741, %v739
        %v842 = vpack.c.b16 %v742, %v740
        %v843 = vpack.c.b16 %v745, %v743
        %v844 = vpack.c.b16 %v746, %v744
        %v845 = vpack.c.b16 %v749, %v747
        %v846 = vpack.c.b16 %v750, %v748
        %943 = vmatpush.bf16.msra.mxu0 %v765
        %944 = vmatpush.bf16.msra.mxu0 %v763
        %945 = vmatpush.bf16.msra.mxu0 %v761
        %946 = vmatpush.bf16.msra.mxu0 %v759
        %947 = vmatpush.bf16.msra.mxu0 %v757
        %948 = vmatpush.bf16.msra.mxu0 %v755
        %949 = vmatpush.bf16.msra.mxu0 %v753
        %950 = vmatpush.bf16.msra.mxu0 %v751
        %951 = vmatmul.bf16.gmra.mxu0 %v451
        %v952 = vpop.f32.mrf.mxu0
        %v953 = vadd.f32 0.0, %v952
        %v954 = vpop.f32.mrf.mxu0
        %955 = vdwg.mxu0
        %956 = vmatpush.bf16.msra.mxu0 %v781
        %957 = vmatpush.bf16.msra.mxu0 %v779
        %958 = vmatpush.bf16.msra.mxu0 %v777
        %959 = vmatpush.bf16.msra.mxu0 %v775
        %960 = vmatpush.bf16.msra.mxu0 %v773
        %961 = vmatpush.bf16.msra.mxu0 %v771
        %962 = vmatpush.bf16.msra.mxu0 %v769
        %963 = vmatpush.bf16.msra.mxu0 %v767
        %964 = vmatmul.bf16.gmra.mxu0 %v452
        %v965 = vpop.f32.mrf.mxu0
        %v966 = vadd.f32 %v953, %v965
        %v967 = vpop.f32.mrf.mxu0
        %968 = vdwg.mxu0
        %969 = vmatpush.bf16.msra.mxu0 %v797
        %970 = vmatpush.bf16.msra.mxu0 %v795
        %971 = vmatpush.bf16.msra.mxu0 %v793
        %972 = vmatpush.bf16.msra.mxu0 %v791
        %973 = vmatpush.bf16.msra.mxu0 %v789
        %974 = vmatpush.bf16.msra.mxu0 %v787
        %975 = vmatpush.bf16.msra.mxu0 %v785
        %976 = vmatpush.bf16.msra.mxu0 %v783
        %977 = vmatmul.bf16.gmra.mxu0 %v453
        %v978 = vpop.f32.mrf.mxu0
        %v979 = vadd.f32 %v966, %v978
        %v980 = vpop.f32.mrf.mxu0
        %981 = vdwg.mxu0
        %982 = vmatpush.bf16.msra.mxu0 %v813
        %983 = vmatpush.bf16.msra.mxu0 %v811
        %984 = vmatpush.bf16.msra.mxu0 %v809
        %985 = vmatpush.bf16.msra.mxu0 %v807
        %986 = vmatpush.bf16.msra.mxu0 %v805
        %987 = vmatpush.bf16.msra.mxu0 %v803
        %988 = vmatpush.bf16.msra.mxu0 %v801
        %989 = vmatpush.bf16.msra.mxu0 %v799
        %990 = vmatmul.bf16.gmra.mxu0 %v454
        %v991 = vpop.f32.mrf.mxu0
        %v992 = vadd.f32 %v979, %v991
        %v993 = vpop.f32.mrf.mxu0
        %994 = vdwg.mxu0
        %995 = vmatpush.bf16.msra.mxu0 %v829
        %996 = vmatpush.bf16.msra.mxu0 %v827
        %997 = vmatpush.bf16.msra.mxu0 %v825
        %998 = vmatpush.bf16.msra.mxu0 %v823
        %999 = vmatpush.bf16.msra.mxu0 %v821
        %1000 = vmatpush.bf16.msra.mxu0 %v819
        %1001 = vmatpush.bf16.msra.mxu0 %v817
        %1002 = vmatpush.bf16.msra.mxu0 %v815
        %1003 = vmatmul.bf16.gmra.mxu0 %v455
        %v1004 = vpop.f32.mrf.mxu0
        %v1005 = vadd.f32 %v992, %v1004
        %v1006 = vpop.f32.mrf.mxu0
        %1007 = vdwg.mxu0
        %1008 = vmatpush.bf16.msra.mxu0 %v845
        %1009 = vmatpush.bf16.msra.mxu0 %v843
        %1010 = vmatpush.bf16.msra.mxu0 %v841
        %1011 = vmatpush.bf16.msra.mxu0 %v839
        %1012 = vmatpush.bf16.msra.mxu0 %v837
        %1013 = vmatpush.bf16.msra.mxu0 %v835
        %1014 = vmatpush.bf16.msra.mxu0 %v833
        %1015 = vmatpush.bf16.msra.mxu0 %v831
        %1016 = vmatmul.bf16.gmra.mxu0 %v456
        %v1017 = vpop.f32.mrf.mxu0
        %v1018 = vadd.f32 %v1005, %v1017
        %v1019 = vpop.f32.mrf.mxu0
        %1020 = vdwg.mxu0
        %1021 = vmatpush.bf16.msra.mxu0 %v766
        %1022 = vmatpush.bf16.msra.mxu0 %v764
        %1023 = vmatpush.bf16.msra.mxu0 %v762
        %1024 = vmatpush.bf16.msra.mxu0 %v760
        %1025 = vmatpush.bf16.msra.mxu0 %v758
        %1026 = vmatpush.bf16.msra.mxu0 %v756
        %1027 = vmatpush.bf16.msra.mxu0 %v754
        %1028 = vmatpush.bf16.msra.mxu0 %v752
        %1029 = vmatmul.bf16.gmra.mxu0 %v451
        %v1030 = vpop.f32.mrf.mxu0
        %v1031 = vadd.f32 0.0, %v1030
        %v1032 = vpop.f32.mrf.mxu0
        %1033 = vdwg.mxu0
        %1034 = vmatpush.bf16.msra.mxu0 %v782
        %1035 = vmatpush.bf16.msra.mxu0 %v780
        %1036 = vmatpush.bf16.msra.mxu0 %v778
        %1037 = vmatpush.bf16.msra.mxu0 %v776
        %1038 = vmatpush.bf16.msra.mxu0 %v774
        %1039 = vmatpush.bf16.msra.mxu0 %v772
        %1040 = vmatpush.bf16.msra.mxu0 %v770
        %1041 = vmatpush.bf16.msra.mxu0 %v768
        %1042 = vmatmul.bf16.gmra.mxu0 %v452
        %v1043 = vpop.f32.mrf.mxu0
        %v1044 = vadd.f32 %v1031, %v1043
        %v1045 = vpop.f32.mrf.mxu0
        %1046 = vdwg.mxu0
        %1047 = vmatpush.bf16.msra.mxu0 %v798
        %1048 = vmatpush.bf16.msra.mxu0 %v796
        %1049 = vmatpush.bf16.msra.mxu0 %v794
        %1050 = vmatpush.bf16.msra.mxu0 %v792
        %1051 = vmatpush.bf16.msra.mxu0 %v790
        %1052 = vmatpush.bf16.msra.mxu0 %v788
        %1053 = vmatpush.bf16.msra.mxu0 %v786
        %1054 = vmatpush.bf16.msra.mxu0 %v784
        %1055 = vmatmul.bf16.gmra.mxu0 %v453
        %v1056 = vpop.f32.mrf.mxu0
        %v1057 = vadd.f32 %v1044, %v1056
        %v1058 = vpop.f32.mrf.mxu0
        %1059 = vdwg.mxu0
        %1060 = vmatpush.bf16.msra.mxu0 %v814
        %1061 = vmatpush.bf16.msra.mxu0 %v812
        %1062 = vmatpush.bf16.msra.mxu0 %v810
        %1063 = vmatpush.bf16.msra.mxu0 %v808
        %1064 = vmatpush.bf16.msra.mxu0 %v806
        %1065 = vmatpush.bf16.msra.mxu0 %v804
        %1066 = vmatpush.bf16.msra.mxu0 %v802
        %1067 = vmatpush.bf16.msra.mxu0 %v800
        %1068 = vmatmul.bf16.gmra.mxu0 %v454
        %v1069 = vpop.f32.mrf.mxu0
        %v1070 = vadd.f32 %v1057, %v1069
        %v1071 = vpop.f32.mrf.mxu0
        %1072 = vdwg.mxu0
        %1073 = vmatpush.bf16.msra.mxu0 %v830
        %1074 = vmatpush.bf16.msra.mxu0 %v828
        %1075 = vmatpush.bf16.msra.mxu0 %v826
        %1076 = vmatpush.bf16.msra.mxu0 %v824
        %1077 = vmatpush.bf16.msra.mxu0 %v822
        %1078 = vmatpush.bf16.msra.mxu0 %v820
        %1079 = vmatpush.bf16.msra.mxu0 %v818
        %1080 = vmatpush.bf16.msra.mxu0 %v816
        %1081 = vmatmul.bf16.gmra.mxu0 %v455
        %v1082 = vpop.f32.mrf.mxu0
        %v1083 = vadd.f32 %v1070, %v1082
        %v1084 = vpop.f32.mrf.mxu0
        %1085 = vdwg.mxu0
        %1086 = vmatpush.bf16.msra.mxu0 %v846
        %1087 = vmatpush.bf16.msra.mxu0 %v844
        %1088 = vmatpush.bf16.msra.mxu0 %v842
        %1089 = vmatpush.bf16.msra.mxu0 %v840
        %1090 = vmatpush.bf16.msra.mxu0 %v838
        %1091 = vmatpush.bf16.msra.mxu0 %v836
        %1092 = vmatpush.bf16.msra.mxu0 %v834
        %1093 = vmatpush.bf16.msra.mxu0 %v832
        %1094 = vmatmul.bf16.gmra.mxu0 %v456
        %v1095 = vpop.f32.mrf.mxu0
        %v1096 = vadd.f32 %v1083, %v1095
        %v1097 = vpop.f32.mrf.mxu0
        %1098 = vdwg.mxu0
        %v1099 = vadd.f32 %v341, %v1018
        %v1100 = vadd.f32 %v342, %v1096
        %1101 = vst [vmem:[%s333] sm:$0xff] %v1099
        %1102 = vst [vmem:[%s333 + $0x8] sm:$0xff] %v1100
        %p1103 = scmp.eq.s32.totalorder %s26, 8
        // Predicated region
        $region53: #{bn_layer_forward.10} parent=35 // pred_check
          %p1104 = pneg %p1103
        $region54: #{bn_layer_forward.10} parent=35 // pred_check_branch
          %1106 = sbr.rel (%p1104) target = $region56
        $region55: #{bn_layer_forward.10} parent=35 // pred_region
          %v1107 = vld [vmem:[%s333] sm:$0xff]
          %v1108 = vld [vmem:[%s333 + $0x8] sm:$0xff]
          %v1109 = vrot.slane %v1107, 4
          %v1110 = vadd.f32 %v1107, %v1109
          %v1111 = vrot.slane %v1110, 2
          %v1112 = vadd.f32 %v1110, %v1111
          %v1113 = vrot.slane %v1112, 1
          %v1114 = vadd.f32 %v1112, %v1113
          %v1115 = vrot.slane %v1108, 4
          %v1116 = vadd.f32 %v1108, %v1115
          %v1117 = vrot.slane %v1116, 2
          %v1118 = vadd.f32 %v1116, %v1117
          %v1119 = vrot.slane %v1118, 1
          %v1120 = vadd.f32 %v1118, %v1119
          %v1121 = vmul.f32 %v1107, %v1107
          %v1122 = vmul.f32 %v1108, %v1108
          %v1123 = vrot.slane %v1121, 4
          %v1124 = vadd.f32 %v1121, %v1123
          %v1125 = vrot.slane %v1124, 2
          %v1126 = vadd.f32 %v1124, %v1125
          %v1127 = vrot.slane %v1126, 1
          %v1128 = vadd.f32 %v1126, %v1127
          %v1129 = vrot.slane %v1122, 4
          %v1130 = vadd.f32 %v1122, %v1129
          %v1131 = vrot.slane %v1130, 2
          %v1132 = vadd.f32 %v1130, %v1131
          %v1133 = vrot.slane %v1132, 1
          %v1134 = vadd.f32 %v1132, %v1133
          %v1135 = vmul.f32 %v1114, 0.125
          %v1136 = vmul.f32 %v1120, 0.125
          %v1137 = vmul.f32 %v1128, 0.125
          %v1138 = vmul.f32 %v1134, 0.125
          %v1139 = vmul.f32 %v1135, %v1135
          %v1140 = vmul.f32 %v1136, %v1136
          %v1141 = vsub.f32 %v1137, %v1139
          %v1142 = vsub.f32 %v1138, %v1140
          %v1143 = vsub.f32 %v1107, %v1135
          %v1144 = vsub.f32 %v1108, %v1136
          %v1145 = vadd.f32 %v1141, 1e-05
          %v1146 = vadd.f32 %v1142, 1e-05
          %v1147 = vrsqrt.pop %v1145
          %v1148 = vmul.f32 %v1147, %v1145
          %v1149 = vmul.f32 %v1148, %v1147
          %v1150 = vmul.f32 0.5, %v1149
          %v1151 = vsub.f32 1.5, %v1150
          %v1152 = vmul.f32 %v1147, %v1151
          %vm1153 = vweird.f32 %v1145
          %vm1154 = vweird.f32 %v1147
          %vm1155 = vmor %vm1153, %vm1154
          %v1156 = vsel %vm1155, %v1147, %v1152
          %v1157 = vrsqrt.pop %v1146
          %v1158 = vmul.f32 %v1157, %v1146
          %v1159 = vmul.f32 %v1158, %v1157
          %v1160 = vmul.f32 0.5, %v1159
          %v1161 = vsub.f32 1.5, %v1160
          %v1162 = vmul.f32 %v1157, %v1161
          %vm1163 = vweird.f32 %v1146
          %vm1164 = vweird.f32 %v1157
          %vm1165 = vmor %vm1163, %vm1164
          %v1166 = vsel %vm1165, %v1157, %v1162
          %v1167 = vmul.f32 %v1143, %v1156
          %v1168 = vmul.f32 %v1144, %v1166
          %v1169 = vld [vmem:[%s270] sm:$0x3]
          %v1171 = vperm.slane %v1169, 0
          %v1172 = vperm.slane %v1169, 1
          %v1175 = vmul.f32 %v1167, %v1171
          %v1176 = vmul.f32 %v1168, %v1172
          %v1177 = vld [vmem:[%s280] sm:$0x3]
          %v1179 = vperm.slane %v1177, 0
          %v1180 = vperm.slane %v1177, 1
          %v1183 = vadd.f32 %v1175, %v1179
          %v1184 = vadd.f32 %v1176, %v1180
          %v1185 = vmax.f32 %v1183, 0.0
          %v1186 = vmax.f32 %v1184, 0.0
          %1187 = vst [vmem:[%s333] sm:$0xff] %v1185
          %1188 = vst [vmem:[%s333 + $0x8] sm:$0xff] %v1186
        $region56: #{bn_layer_forward.10} parent=35 // pred_fallthru
          _
        %s1189 = smul.u32 2, %s25
        %p1190 = scmp.lt.s32.totalorder %s1189, 3
        %s1191 = scalar_select %p1190, %s1189, 3
        %s1192 = smul.addr %s1191, 8
        %s1193 = scalar_lea.vmem %s4, %s1192
        // Predicated region
        $region57: #{bn_layer_forward.10} parent=35 // pred_check
          %p1194 = pneg %p157
        $region58: #{bn_layer_forward.10} parent=35 // pred_check_branch
          %1196 = sbr.rel (%p1194) target = $region60
        $region59: #{bn_layer_forward.10} parent=35 // pred_region
          %s1197 = smul.u32 2, %s25
        $region60: #{bn_layer_forward.10} parent=35 // pred_fallthru
          _
      $region36: #{bn_layer_forward.10} parent=5 // pred_fallthru
        _
      %p1198 = scmp.le.s32.totalorder 2, %s16
      // Predicated region
      $region61: #{bn_layer_forward.10} parent=5 // pred_check
        %p1199 = pneg %p1198
      $region62: #{bn_layer_forward.10} parent=5 // pred_check_branch
        %1201 = sbr.rel (%p1199) target = $region64
      $region63: #{bn_layer_forward.10} parent=5 // pred_region
        %s1202 = ssub.s32 %s16, 2
        // Predicated region
        $region65: #{bn_layer_forward.10} parent=63 // pred_check
          %p1203 = pneg %p163
        $region66: #{bn_layer_forward.10} parent=63 // pred_check_branch
          %1205 = sbr.rel (%p1203) target = $region68
        $region67: #{bn_layer_forward.10} parent=63 // pred_region
          %s1206 = smul.u32 2, %s27
          %p1207 = scmp.lt.s32.totalorder %s1206, 3
          %s1208 = scalar_select %p1207, %s1206, 3
          %s1209 = smul.addr %s1208, 8
          %s1210 = scalar_lea.vmem %s4, %s1209
        $region68: #{bn_layer_forward.10} parent=63 // pred_fallthru
          _
      $region64: #{bn_layer_forward.10} parent=5 // pred_fallthru
        _
    $region6: #{bn_layer_forward.10} parent=1 // loop_footer
      %s20 = sadd.s32 1, %s16
    $region7: #{bn_layer_forward.10} parent=1 // loop_footer_branch
      %15 = sbr.rel target = $region3
    $region8: #{bn_layer_forward.10} parent=1 // loop_exit
      _
    %1211 = vsyncpa [#allocation3], 1
    %s1212 = scalar_lea.sflag [#allocation3], 1
    %1213 = vsyncpa %s1212, 1
    %1214 = vsyncpa [#allocation5], 1
    %s1215 = scalar_lea.sflag [#allocation5], 1
    %1216 = vsyncpa %s1215, 1

// kernel: bn_layer_forward.9
$region0: #{bn_layer_forward.9}
  #allocation0 [shape = 'u32[]', space=smem, size = 0x4, offset = 0x4, fixed_abs, tag = 'smem constant byte address 0x4 - core index']
  #allocation1 [shape = 'u32[72,128]{1,0:T(1,128)}', space=vmem, size = 0x9000, scoped, tag = 'internal scratch']
  %s0 = inlined_call_operand.vmem [shape: bf16[1,8,768], index: 0, kind: input, shape index: {}]
  %s1 = inlined_call_operand.hbm [shape: bf16[1,768,512], index: 1, kind: input, shape index: {}]
  %s2 = inlined_call_operand.hbm [shape: f32[1,512], index: 2, kind: input, shape index: {}]
  %s3 = inlined_call_operand.hbm [shape: f32[1,512], index: 3, kind: input, shape index: {}]
  %s4 = inlined_call_operand.vmem [shape: f32[8,512], index: 4, kind: output, shape index: {}]
  %s5 = sld [smem:[#allocation0]]
  $region69: #{bn_layer_forward.9} parent=0
    _
  %s7 = ssub.s32 1, %s5
  %s8 = scalar_select 0, %s7, %s5
  $region1: #{bn_layer_forward.9} parent=0
    #allocation2 [shape = 'u8[786432]{0}', space=vmem, size = 0xc0000, scoped, tag = 'input window, operand 1']
    #allocation3 [shape = 's32[2]{0}', space=sflag, size = 0x8, scoped, tag = 'scoped memory for bn_layer_forward.9']
    #allocation4 [shape = 'u8[2048]{0}', space=vmem, size = 0x800, scoped, tag = 'input window, operand 2']
    #allocation5 [shape = 's32[2]{0}', space=sflag, size = 0x8, scoped, tag = 'scoped memory for bn_layer_forward.9']
    #allocation6 [shape = 'u8[2048]{0}', space=vmem, size = 0x800, scoped, tag = 'input window, operand 3']
    %9 = vsyncpa [#allocation3], 0
    %s10 = scalar_lea.sflag [#allocation3], 1
    %11 = vsyncpa %s10, 0
    %12 = vsyncpa [#allocation5], 0
    %s13 = scalar_lea.sflag [#allocation5], 1
    %14 = vsyncpa %s13, 0
    loop: start=0, step=1, limit=4
    $region2: #{bn_layer_forward.9} parent=1 // loop_pre_header
      _
    $region3: #{bn_layer_forward.9} parent=1 // loop_header
      %s16 = sphi 0, %s20
      %p17 = scmp.ge.s32.totalorder %s16, 4
      %s23 = sphi 0, %s35
      %s24 = sphi 0, %s31
      %s25 = sphi 0, %s23
      %s26 = sphi 0, %s24
      %s27 = sphi 0, %s25
      %s28 = sphi 0, %s26
      %s38 = sphi 0, %s40
      %s41 = sphi 0, %s38
      %s42 = sphi 0, %s41
      %s58 = sphi 0, %s42
      %s66 = sphi 0, %s68
      %s69 = sphi 0, %s66
      %s70 = sphi 0, %s69
      %s86 = sphi 0, %s70
      %s92 = sphi 0, %s94
      %s95 = sphi 0, %s92
      %s96 = sphi 0, %s95
      %s112 = sphi 0, %s96
      %s118 = sphi 0, %s120
      %s121 = sphi 0, %s118
      %s122 = sphi 0, %s121
      %s138 = sphi 0, %s122
      %s144 = sphi 0, %s146
      %s147 = sphi 0, %s144
      %s148 = sphi 0, %s147
      %s164 = sphi 0, %s148
    $region4: #{bn_layer_forward.9} parent=1 // loop_header_branch
      %19 = sbr.rel (%p17) target = $region8
    $region5: #{bn_layer_forward.9} parent=1 // loop_body
      %s21 = ssub.s32 %s16, 1
      %s22 = ssub.s32 %s16, 2
      %s29 = sadd.s32 1, %s24
      %p30 = scmp.ge.s32.totalorder %s29, 1
      %s31 = scalar_select %p30, 0, %s29
      %s32 = sadd.s32 1, %s23
      %s33 = scalar_select %p30, %s32, %s23
      %p34 = scmp.ge.s32.totalorder %s33, 2
      %s35 = scalar_select %p34, 0, %s33
      %s36 = ssub.s32 %s24, %s31
      %p37 = scmp.eq.s32.totalorder %s36, 0
      %s39 = sadd.s32 %s38, 1
      %s40 = scalar_select %p37, %s38, %s39
      %p43 = pneg %p37
      %p44 = scmp.eq.s32.totalorder %s16, 1
      %p45 = por %p43, %p44
      %p46 = scmp.ne.s32.totalorder %s38, %s41
      %p47 = scmp.eq.s32.totalorder %s16, 0
      %p48 = por %p46, %p47
      %p49 = scmp.ne.s32.totalorder %s38, %s41
      %p50 = scmp.eq.s32.totalorder %s21, 1
      %p51 = por %p49, %p50
      %p52 = scmp.ne.s32.totalorder %s41, %s42
      %p53 = scmp.eq.s32.totalorder %s21, 0
      %p54 = por %p52, %p53
      %p55 = scmp.ne.s32.totalorder %s41, %s42
      %p56 = scmp.eq.s32.totalorder %s22, 1
      %p57 = por %p55, %p56
      %p59 = scmp.ne.s32.totalorder %s42, %s58
      %p60 = scmp.eq.s32.totalorder %s22, 0
      %p61 = por %p59, %p60
      %s62 = ssub.s32 %s24, %s31
      %s63 = ssub.s32 %s23, %s35
      %s64 = sor.u32 %s62, %s63
      %p65 = scmp.eq.s32.totalorder %s64, 0
      %s67 = sadd.s32 %s66, 1
      %s68 = scalar_select %p65, %s66, %s67
      %p71 = pneg %p65
      %p72 = scmp.eq.s32.totalorder %s16, 1
      %p73 = por %p71, %p72
      %p74 = scmp.ne.s32.totalorder %s66, %s69
      %p75 = scmp.eq.s32.totalorder %s16, 0
      %p76 = por %p74, %p75
      %p77 = scmp.ne.s32.totalorder %s66, %s69
      %p78 = scmp.eq.s32.totalorder %s21, 1
      %p79 = por %p77, %p78
      %p80 = scmp.ne.s32.totalorder %s69, %s70
      %p81 = scmp.eq.s32.totalorder %s21, 0
      %p82 = por %p80, %p81
      %p83 = scmp.ne.s32.totalorder %s69, %s70
      %p84 = scmp.eq.s32.totalorder %s22, 1
      %p85 = por %p83, %p84
      %p87 = scmp.ne.s32.totalorder %s70, %s86
      %p88 = scmp.eq.s32.totalorder %s22, 0
      %p89 = por %p87, %p88
      %s90 = ssub.s32 %s23, %s35
      %p91 = scmp.eq.s32.totalorder %s90, 0
      %s93 = sadd.s32 %s92, 1
      %s94 = scalar_select %p91, %s92, %s93
      %p97 = pneg %p91
      %p98 = scmp.eq.s32.totalorder %s16, 1
      %p99 = por %p97, %p98
      %p100 = scmp.ne.s32.totalorder %s92, %s95
      %p101 = scmp.eq.s32.totalorder %s16, 0
      %p102 = por %p100, %p101
      %p103 = scmp.ne.s32.totalorder %s92, %s95
      %p104 = scmp.eq.s32.totalorder %s21, 1
      %p105 = por %p103, %p104
      %p106 = scmp.ne.s32.totalorder %s95, %s96
      %p107 = scmp.eq.s32.totalorder %s21, 0
      %p108 = por %p106, %p107
      %p109 = scmp.ne.s32.totalorder %s95, %s96
      %p110 = scmp.eq.s32.totalorder %s22, 1
      %p111 = por %p109, %p110
      %p113 = scmp.ne.s32.totalorder %s96, %s112
      %p114 = scmp.eq.s32.totalorder %s22, 0
      %p115 = por %p113, %p114
      %s116 = ssub.s32 %s23, %s35
      %p117 = scmp.eq.s32.totalorder %s116, 0
      %s119 = sadd.s32 %s118, 1
      %s120 = scalar_select %p117, %s118, %s119
      %p123 = pneg %p117
      %p124 = scmp.eq.s32.totalorder %s16, 1
      %p125 = por %p123, %p124
      %p126 = scmp.ne.s32.totalorder %s118, %s121
      %p127 = scmp.eq.s32.totalorder %s16, 0
      %p128 = por %p126, %p127
      %p129 = scmp.ne.s32.totalorder %s118, %s121
      %p130 = scmp.eq.s32.totalorder %s21, 1
      %p131 = por %p129, %p130
      %p132 = scmp.ne.s32.totalorder %s121, %s122
      %p133 = scmp.eq.s32.totalorder %s21, 0
      %p134 = por %p132, %p133
      %p135 = scmp.ne.s32.totalorder %s121, %s122
      %p136 = scmp.eq.s32.totalorder %s22, 1
      %p137 = por %p135, %p136
      %p139 = scmp.ne.s32.totalorder %s122, %s138
      %p140 = scmp.eq.s32.totalorder %s22, 0
      %p141 = por %p139, %p140
      %s142 = ssub.s32 %s23, %s35
      %p143 = scmp.eq.s32.totalorder %s142, 0
      %s145 = sadd.s32 %s144, 1
      %s146 = scalar_select %p143, %s144, %s145
      %p149 = pneg %p143
      %p150 = scmp.eq.s32.totalorder %s16, 1
      %p151 = por %p149, %p150
      %p152 = scmp.ne.s32.totalorder %s144, %s147
      %p153 = scmp.eq.s32.totalorder %s16, 0
      %p154 = por %p152, %p153
      %p155 = scmp.ne.s32.totalorder %s144, %s147
      %p156 = scmp.eq.s32.totalorder %s21, 1
      %p157 = por %p155, %p156
      %p158 = scmp.ne.s32.totalorder %s147, %s148
      %p159 = scmp.eq.s32.totalorder %s21, 0
      %p160 = por %p158, %p159
      %p161 = scmp.ne.s32.totalorder %s147, %s148
      %p162 = scmp.eq.s32.totalorder %s22, 1
      %p163 = por %p161, %p162
      %p165 = scmp.ne.s32.totalorder %s148, %s164
      %p166 = scmp.eq.s32.totalorder %s22, 0
      %p167 = por %p165, %p166
      %p168 = scmp.le.s32.totalorder 1, %s16
      %p169 = scmp.lt.s32.totalorder %s16, 3
      %p170 = pnand %p168, %p169
      %p171 = pneg %p170
      // Predicated region
      $region9: #{bn_layer_forward.9} parent=5 // pred_check
        _
      $region10: #{bn_layer_forward.9} parent=5 // pred_check_branch
        %173 = sbr.rel (%p170) target = $region12
      $region11: #{bn_layer_forward.9} parent=5 // pred_region
        %s174 = ssub.s32 %s16, 1
        // Predicated region
        $region13: #{bn_layer_forward.9} parent=11 // pred_check
          %p175 = pneg %p54
        $region14: #{bn_layer_forward.9} parent=11 // pred_check_branch
          %177 = sbr.rel (%p175) target = $region16
        $region15: #{bn_layer_forward.9} parent=11 // pred_region
          %p178 = scmp.lt.s32.totalorder %s26, 0
          %s179 = scalar_select %p178, %s26, 0
          %s180 = smul.addr %s179, 6
          %s181 = smul.addr %s180, 4
          %s182 = scalar_lea.vmem %s0, %s181
        $region16: #{bn_layer_forward.9} parent=11 // pred_fallthru
          _
      $region12: #{bn_layer_forward.9} parent=5 // pred_fallthru
        _
      %p183 = scmp.lt.s32.totalorder %s16, 2
      // Predicated region
      $region17: #{bn_layer_forward.9} parent=5 // pred_check
        %p184 = pneg %p183
      $region18: #{bn_layer_forward.9} parent=5 // pred_check_branch
        %186 = sbr.rel (%p184) target = $region20
      $region19: #{bn_layer_forward.9} parent=5 // pred_region
        // Predicated region
        $region21: #{bn_layer_forward.9} parent=19 // pred_check
          %p187 = pneg %p76
        $region22: #{bn_layer_forward.9} parent=19 // pred_check_branch
          %189 = sbr.rel (%p187) target = $region24
        $region23: #{bn_layer_forward.9} parent=19 // pred_region
          %s190 = sand.u32 %s66, 1
          %s191 = scalar_lea.sflag [#allocation3], %s190
          %s192 = sand.u32 %s66, 1
          %s193 = smul.addr %s192, 768
          %s194 = scalar_lea.vmem [#allocation2], %s193
          %s195 = smul.u32 2, %s23
          %197 = vsyncadd %s191, 0
          %s198 = smul.addr %s24, 384
          %s199 = sadd.s32 %s195, %s198
          %s200 = smul.addr %s199, 4
          %s201 = scalar_lea.hbm %s1, %s200
          %s202 = sshll.u32 %s201, 4
          %s203 = int_to_ptr.hbm [resolvable:$true] %s202
          %s204 = sshll.u32 %s194, 4
          %s205 = int_to_ptr.vmem [resolvable:$true] %s204
          %210 = dma.hbm_to_vmem [thread:$0]  %s203, 12288, %s205, %s191, 256, 128, 8
        $region24: #{bn_layer_forward.9} parent=19 // pred_fallthru
          _
        // Predicated region
        $region25: #{bn_layer_forward.9} parent=19 // pred_check
          %p211 = pneg %p102
        $region26: #{bn_layer_forward.9} parent=19 // pred_check_branch
          %213 = sbr.rel (%p211) target = $region28
        $region27: #{bn_layer_forward.9} parent=19 // pred_region
          %s214 = sand.u32 %s16, 1
          %s215 = scalar_lea.sflag [#allocation5], %s214
          %s216 = sand.u32 %s92, 1
          %s217 = smul.addr %s216, 2
          %s218 = scalar_lea.vmem [#allocation4], %s217
          %s219 = smul.u32 2, %s23
          %221 = vsyncadd %s215, 0
          %s222 = scalar_lea.hbm %s2, %s219
          %s224 = sshll.u32 %s222, 4
          %s225 = int_to_ptr.hbm [resolvable:$true] %s224
          %s226 = sshll.u32 %s218, 4
          %s227 = int_to_ptr.vmem [resolvable:$true] %s226
          %229 = dma.hbm_to_vmem [thread:$0]  %s225, 32, %s227, %s215
        $region28: #{bn_layer_forward.9} parent=19 // pred_fallthru
          _
        // Predicated region
        $region29: #{bn_layer_forward.9} parent=19 // pred_check
          %p230 = pneg %p128
        $region30: #{bn_layer_forward.9} parent=19 // pred_check_branch
          %232 = sbr.rel (%p230) target = $region32
        $region31: #{bn_layer_forward.9} parent=19 // pred_region
          %s233 = sand.u32 %s16, 1
          %s234 = scalar_lea.sflag [#allocation5], %s233
          %s235 = sand.u32 %s118, 1
          %s236 = smul.addr %s235, 2
          %s237 = scalar_lea.vmem [#allocation6], %s236
          %s238 = smul.u32 2, %s23
          %240 = vsyncadd %s234, 0
          %s241 = scalar_lea.hbm %s3, %s238
          %s243 = sshll.u32 %s241, 4
          %s244 = int_to_ptr.hbm [resolvable:$true] %s243
          %s245 = sshll.u32 %s237, 4
          %s246 = int_to_ptr.vmem [resolvable:$true] %s245
          %248 = dma.hbm_to_vmem [thread:$0]  %s244, 32, %s246, %s234
        $region32: #{bn_layer_forward.9} parent=19 // pred_fallthru
          _
      $region20: #{bn_layer_forward.9} parent=5 // pred_fallthru
        _
      %p249 = scmp.le.s32.totalorder 1, %s16
      %p250 = scmp.lt.s32.totalorder %s16, 3
      %p251 = pnand %p249, %p250
      %p252 = pneg %p251
      // Predicated region
      $region33: #{bn_layer_forward.9} parent=5 // pred_check
        _
      $region34: #{bn_layer_forward.9} parent=5 // pred_check_branch
        %254 = sbr.rel (%p251) target = $region36
      $region35: #{bn_layer_forward.9} parent=5 // pred_region
        %s255 = ssub.s32 %s16, 1
        %s256 = sand.u32 %s69, 1
        %s257 = scalar_lea.sflag [#allocation3], %s256
        %s258 = sand.u32 %s69, 1
        %s259 = smul.addr %s258, 768
        %s260 = scalar_lea.vmem [#allocation2], %s259
        // Predicated region
        $region37: #{bn_layer_forward.9} parent=35 // pred_check
          %p261 = pneg %p82
        $region38: #{bn_layer_forward.9} parent=35 // pred_check_branch
          %263 = sbr.rel (%p261) target = $region40
        $region39: #{bn_layer_forward.9} parent=35 // pred_region
          %265 = dma.done %s257, 12288
        $region40: #{bn_layer_forward.9} parent=35 // pred_fallthru
          _
        %s266 = sand.u32 %s21, 1
        %s267 = scalar_lea.sflag [#allocation5], %s266
        %s268 = sand.u32 %s95, 1
        %s269 = smul.addr %s268, 2
        %s270 = scalar_lea.vmem [#allocation4], %s269
        // Predicated region
        $region41: #{bn_layer_forward.9} parent=35 // pred_check
          %p271 = pneg %p108
        $region42: #{bn_layer_forward.9} parent=35 // pred_check_branch
          %273 = sbr.rel (%p271) target = $region44
        $region43: #{bn_layer_forward.9} parent=35 // pred_region
          %275 = dma.done %s267, 32
        $region44: #{bn_layer_forward.9} parent=35 // pred_fallthru
          _
        %s276 = sand.u32 %s21, 1
        %s277 = scalar_lea.sflag [#allocation5], %s276
        %s278 = sand.u32 %s121, 1
        %s279 = smul.addr %s278, 2
        %s280 = scalar_lea.vmem [#allocation6], %s279
        // Predicated region
        $region45: #{bn_layer_forward.9} parent=35 // pred_check
          %p281 = pneg %p134
        $region46: #{bn_layer_forward.9} parent=35 // pred_check_branch
          %283 = sbr.rel (%p281) target = $region48
        $region47: #{bn_layer_forward.9} parent=35 // pred_region
          %285 = dma.done %s277, 32
        $region48: #{bn_layer_forward.9} parent=35 // pred_fallthru
          _
        %p286 = scmp.lt.s32.totalorder %s26, 0
        %s287 = scalar_select %p286, %s26, 0
        %s288 = smul.addr %s287, 6
        %s289 = smul.addr %s288, 4
        %s290 = scalar_lea.vmem %s0, %s289
        %p291 = pneg %p54
        %p292 = pneg %p51
        %s293 = sand.u32 %s69, 1
        %s294 = scalar_lea.sflag [#allocation3], %s293
        %s295 = sand.u32 %s69, 1
        %s296 = smul.addr %s295, 768
        %s297 = scalar_lea.vmem [#allocation2], %s296
        %p298 = pneg %p82
        %p299 = pneg %p79
        %s300 = sand.u32 %s21, 1
        %s301 = scalar_lea.sflag [#allocation5], %s300
        %s302 = sand.u32 %s95, 1
        %s303 = smul.addr %s302, 2
        %s304 = scalar_lea.vmem [#allocation4], %s303
        %p305 = pneg %p108
        %p306 = pneg %p105
        %s307 = sand.u32 %s21, 1
        %s308 = scalar_lea.sflag [#allocation5], %s307
        %s309 = sand.u32 %s121, 1
        %s310 = smul.addr %s309, 2
        %s311 = scalar_lea.vmem [#allocation6], %s310
        %p312 = pneg %p134
        %p313 = pneg %p131
        %p314 = pneg %p160
        %p315 = pneg %p157
        %s316 = smul.u32 2, %s25
        %p317 = scmp.lt.s32.totalorder %s316, 3
        %s318 = scalar_select %p317, %s316, 3
        %s319 = smul.addr %s318, 8
        %s320 = scalar_lea.vmem %s4, %s319
        %p321 = scmp.lt.s32.totalorder %s26, 0
        %s322 = scalar_select %p321, %s26, 0
        %s323 = smul.addr %s322, 6
        %s324 = smul.addr %s323, 4
        %s325 = scalar_lea.vmem %s0, %s324
        %s326 = smul.u32 2, %s25
        %s327 = smul.u32 2, %s25
        %s328 = smul.u32 2, %s25
        %s329 = smul.u32 2, %s25
        %p330 = scmp.lt.s32.totalorder %s329, 3
        %s331 = scalar_select %p330, %s329, 3
        %s332 = smul.addr %s331, 8
        %s333 = scalar_lea.vmem %s4, %s332
        %s334 = smul.u32 2, %s25
        %p335 = scmp.eq.s32.totalorder %s26, 0
        // Predicated region
        $region49: #{bn_layer_forward.9} parent=35 // pred_check
          %p336 = pneg %p335
        $region50: #{bn_layer_forward.9} parent=35 // pred_check_branch
          %338 = sbr.rel (%p336) target = $region52
        $region51: #{bn_layer_forward.9} parent=35 // pred_region
          %339 = vst [vmem:[%s333] sm:$0xff] 0.0
          %340 = vst [vmem:[%s333 + $0x8] sm:$0xff] 0.0
        $region52: #{bn_layer_forward.9} parent=35 // pred_fallthru
          _
        %v341 = vld [vmem:[%s333] sm:$0xff]
        %v342 = vld [vmem:[%s333 + $0x8] sm:$0xff]
        %v343 = vld [vmem:[%s325] sm:$0xff]
        %v344 = vld [vmem:[%s325 + $0x8] sm:$0xff]
        %v345 = vld [vmem:[%s325 + $0x10] sm:$0xff]
        %v346 = vld [vmem:[%s260] sm:$0xff]
        %v347 = vld [vmem:[%s260 + $0x8] sm:$0xff]
        %v348 = vld [vmem:[%s260 + $0x10] sm:$0xff]
        %v349 = vld [vmem:[%s260 + $0x18] sm:$0xff]
        %v350 = vld [vmem:[%s260 + $0x20] sm:$0xff]
        %v351 = vld [vmem:[%s260 + $0x28] sm:$0xff]
        %v352 = vld [vmem:[%s260 + $0x30] sm:$0xff]
        %v353 = vld [vmem:[%s260 + $0x38] sm:$0xff]
        %v354 = vld [vmem:[%s260 + $0x40] sm:$0xff]
        %v355 = vld [vmem:[%s260 + $0x48] sm:$0xff]
        %v356 = vld [vmem:[%s260 + $0x50] sm:$0xff]
        %v357 = vld [vmem:[%s260 + $0x58] sm:$0xff]
        %v358 = vld [vmem:[%s260 + $0x60] sm:$0xff]
        %v359 = vld [vmem:[%s260 + $0x68] sm:$0xff]
        %v360 = vld [vmem:[%s260 + $0x70] sm:$0xff]
        %v361 = vld [vmem:[%s260 + $0x78] sm:$0xff]
        %v362 = vld [vmem:[%s260 + $0x80] sm:$0xff]
        %v363 = vld [vmem:[%s260 + $0x88] sm:$0xff]
        %v364 = vld [vmem:[%s260 + $0x90] sm:$0xff]
        %v365 = vld [vmem:[%s260 + $0x98] sm:$0xff]
        %v366 = vld [vmem:[%s260 + $0xa0] sm:$0xff]
        %v367 = vld [vmem:[%s260 + $0xa8] sm:$0xff]
        %v368 = vld [vmem:[%s260 + $0xb0] sm:$0xff]
        %v369 = vld [vmem:[%s260 + $0xb8] sm:$0xff]
        %v370 = vld [vmem:[%s260 + $0xc0] sm:$0xff]
        %v371 = vld [vmem:[%s260 + $0xc8] sm:$0xff]
        %v372 = vld [vmem:[%s260 + $0xd0] sm:$0xff]
        %v373 = vld [vmem:[%s260 + $0xd8] sm:$0xff]
        %v374 = vld [vmem:[%s260 + $0xe0] sm:$0xff]
        %v375 = vld [vmem:[%s260 + $0xe8] sm:$0xff]
        %v376 = vld [vmem:[%s260 + $0xf0] sm:$0xff]
        %v377 = vld [vmem:[%s260 + $0xf8] sm:$0xff]
        %v378 = vld [vmem:[%s260 + $0x100] sm:$0xff]
        %v379 = vld [vmem:[%s260 + $0x108] sm:$0xff]
        %v380 = vld [vmem:[%s260 + $0x110] sm:$0xff]
        %v381 = vld [vmem:[%s260 + $0x118] sm:$0xff]
        %v382 = vld [vmem:[%s260 + $0x120] sm:$0xff]
        %v383 = vld [vmem:[%s260 + $0x128] sm:$0xff]
        %v384 = vld [vmem:[%s260 + $0x130] sm:$0xff]
        %v385 = vld [vmem:[%s260 + $0x138] sm:$0xff]
        %v386 = vld [vmem:[%s260 + $0x140] sm:$0xff]
        %v387 = vld [vmem:[%s260 + $0x148] sm:$0xff]
        %v388 = vld [vmem:[%s260 + $0x150] sm:$0xff]
        %v389 = vld [vmem:[%s260 + $0x158] sm:$0xff]
        %v390 = vld [vmem:[%s260 + $0x160] sm:$0xff]
        %v391 = vld [vmem:[%s260 + $0x168] sm:$0xff]
        %v392 = vld [vmem:[%s260 + $0x170] sm:$0xff]
        %v393 = vld [vmem:[%s260 + $0x178] sm:$0xff]
        %v394 = vld [vmem:[%s260 + $0x180] sm:$0xff]
        %v395 = vld [vmem:[%s260 + $0x188] sm:$0xff]
        %v396 = vld [vmem:[%s260 + $0x190] sm:$0xff]
        %v397 = vld [vmem:[%s260 + $0x198] sm:$0xff]
        %v398 = vld [vmem:[%s260 + $0x1a0] sm:$0xff]
        %v399 = vld [vmem:[%s260 + $0x1a8] sm:$0xff]
        %v400 = vld [vmem:[%s260 + $0x1b0] sm:$0xff]
        %v401 = vld [vmem:[%s260 + $0x1b8] sm:$0xff]
        %v402 = vld [vmem:[%s260 + $0x1c0] sm:$0xff]
        %v403 = vld [vmem:[%s260 + $0x1c8] sm:$0xff]
        %v404 = vld [vmem:[%s260 + $0x1d0] sm:$0xff]
        %v405 = vld [vmem:[%s260 + $0x1d8] sm:$0xff]
        %v406 = vld [vmem:[%s260 + $0x1e0] sm:$0xff]
        %v407 = vld [vmem:[%s260 + $0x1e8] sm:$0xff]
        %v408 = vld [vmem:[%s260 + $0x1f0] sm:$0xff]
        %v409 = vld [vmem:[%s260 + $0x1f8] sm:$0xff]
        %v410 = vld [vmem:[%s260 + $0x200] sm:$0xff]
        %v411 = vld [vmem:[%s260 + $0x208] sm:$0xff]
        %v412 = vld [vmem:[%s260 + $0x210] sm:$0xff]
        %v413 = vld [vmem:[%s260 + $0x218] sm:$0xff]
        %v414 = vld [vmem:[%s260 + $0x220] sm:$0xff]
        %v415 = vld [vmem:[%s260 + $0x228] sm:$0xff]
        %v416 = vld [vmem:[%s260 + $0x230] sm:$0xff]
        %v417 = vld [vmem:[%s260 + $0x238] sm:$0xff]
        %v418 = vld [vmem:[%s260 + $0x240] sm:$0xff]
        %v419 = vld [vmem:[%s260 + $0x248] sm:$0xff]
        %v420 = vld [vmem:[%s260 + $0x250] sm:$0xff]
        %v421 = vld [vmem:[%s260 + $0x258] sm:$0xff]
        %v422 = vld [vmem:[%s260 + $0x260] sm:$0xff]
        %v423 = vld [vmem:[%s260 + $0x268] sm:$0xff]
        %v424 = vld [vmem:[%s260 + $0x270] sm:$0xff]
        %v425 = vld [vmem:[%s260 + $0x278] sm:$0xff]
        %v426 = vld [vmem:[%s260 + $0x280] sm:$0xff]
        %v427 = vld [vmem:[%s260 + $0x288] sm:$0xff]
        %v428 = vld [vmem:[%s260 + $0x290] sm:$0xff]
        %v429 = vld [vmem:[%s260 + $0x298] sm:$0xff]
        %v430 = vld [vmem:[%s260 + $0x2a0] sm:$0xff]
        %v431 = vld [vmem:[%s260 + $0x2a8] sm:$0xff]
        %v432 = vld [vmem:[%s260 + $0x2b0] sm:$0xff]
        %v433 = vld [vmem:[%s260 + $0x2b8] sm:$0xff]
        %v434 = vld [vmem:[%s260 + $0x2c0] sm:$0xff]
        %v435 = vld [vmem:[%s260 + $0x2c8] sm:$0xff]
        %v436 = vld [vmem:[%s260 + $0x2d0] sm:$0xff]
        %v437 = vld [vmem:[%s260 + $0x2d8] sm:$0xff]
        %v438 = vld [vmem:[%s260 + $0x2e0] sm:$0xff]
        %v439 = vld [vmem:[%s260 + $0x2e8] sm:$0xff]
        %v440 = vld [vmem:[%s260 + $0x2f0] sm:$0xff]
        %v441 = vld [vmem:[%s260 + $0x2f8] sm:$0xff]
        %v445 = vunpack.c.l.b16 %v343
        %v446 = vunpack.c.h.b16 %v343
        %v447 = vunpack.c.l.b16 %v344
        %v448 = vunpack.c.h.b16 %v344
        %v449 = vunpack.c.l.b16 %v345
        %v450 = vunpack.c.h.b16 %v345
        %v451 = vpack.c.b16 %v445, %v445
        %v452 = vpack.c.b16 %v446, %v446
        %v453 = vpack.c.b16 %v447, %v447
        %v454 = vpack.c.b16 %v448, %v448
        %v455 = vpack.c.b16 %v449, %v449
        %v456 = vpack.c.b16 %v450, %v450
        %v559 = vunpack.c.l.b16 %v346
        %v560 = vunpack.c.h.b16 %v346
        %v561 = vunpack.c.l.b16 %v347
        %v562 = vunpack.c.h.b16 %v347
        %v563 = vunpack.c.l.b16 %v348
        %v564 = vunpack.c.h.b16 %v348
        %v565 = vunpack.c.l.b16 %v349
        %v566 = vunpack.c.h.b16 %v349
        %v567 = vunpack.c.l.b16 %v350
        %v568 = vunpack.c.h.b16 %v350
        %v569 = vunpack.c.l.b16 %v351
        %v570 = vunpack.c.h.b16 %v351
        %v571 = vunpack.c.l.b16 %v352
        %v572 = vunpack.c.h.b16 %v352
        %v573 = vunpack.c.l.b16 %v353
        %v574 = vunpack.c.h.b16 %v353
        %v575 = vunpack.c.l.b16 %v354
        %v576 = vunpack.c.h.b16 %v354
        %v577 = vunpack.c.l.b16 %v355
        %v578 = vunpack.c.h.b16 %v355
        %v579 = vunpack.c.l.b16 %v356
        %v580 = vunpack.c.h.b16 %v356
        %v581 = vunpack.c.l.b16 %v357
        %v582 = vunpack.c.h.b16 %v357
        %v583 = vunpack.c.l.b16 %v358
        %v584 = vunpack.c.h.b16 %v358
        %v585 = vunpack.c.l.b16 %v359
        %v586 = vunpack.c.h.b16 %v359
        %v587 = vunpack.c.l.b16 %v360
        %v588 = vunpack.c.h.b16 %v360
        %v589 = vunpack.c.l.b16 %v361
        %v590 = vunpack.c.h.b16 %v361
        %v591 = vunpack.c.l.b16 %v362
        %v592 = vunpack.c.h.b16 %v362
        %v593 = vunpack.c.l.b16 %v363
        %v594 = vunpack.c.h.b16 %v363
        %v595 = vunpack.c.l.b16 %v364
        %v596 = vunpack.c.h.b16 %v364
        %v597 = vunpack.c.l.b16 %v365
        %v598 = vunpack.c.h.b16 %v365
        %v599 = vunpack.c.l.b16 %v366
        %v600 = vunpack.c.h.b16 %v366
        %v601 = vunpack.c.l.b16 %v367
        %v602 = vunpack.c.h.b16 %v367
        %v603 = vunpack.c.l.b16 %v368
        %v604 = vunpack.c.h.b16 %v368
        %v605 = vunpack.c.l.b16 %v369
        %v606 = vunpack.c.h.b16 %v369
        %v607 = vunpack.c.l.b16 %v370
        %v608 = vunpack.c.h.b16 %v370
        %v609 = vunpack.c.l.b16 %v371
        %v610 = vunpack.c.h.b16 %v371
        %v611 = vunpack.c.l.b16 %v372
        %v612 = vunpack.c.h.b16 %v372
        %v613 = vunpack.c.l.b16 %v373
        %v614 = vunpack.c.h.b16 %v373
        %v615 = vunpack.c.l.b16 %v374
        %v616 = vunpack.c.h.b16 %v374
        %v617 = vunpack.c.l.b16 %v375
        %v618 = vunpack.c.h.b16 %v375
        %v619 = vunpack.c.l.b16 %v376
        %v620 = vunpack.c.h.b16 %v376
        %v621 = vunpack.c.l.b16 %v377
        %v622 = vunpack.c.h.b16 %v377
        %v623 = vunpack.c.l.b16 %v378
        %v624 = vunpack.c.h.b16 %v378
        %v625 = vunpack.c.l.b16 %v379
        %v626 = vunpack.c.h.b16 %v379
        %v627 = vunpack.c.l.b16 %v380
        %v628 = vunpack.c.h.b16 %v380
        %v629 = vunpack.c.l.b16 %v381
        %v630 = vunpack.c.h.b16 %v381
        %v631 = vunpack.c.l.b16 %v382
        %v632 = vunpack.c.h.b16 %v382
        %v633 = vunpack.c.l.b16 %v383
        %v634 = vunpack.c.h.b16 %v383
        %v635 = vunpack.c.l.b16 %v384
        %v636 = vunpack.c.h.b16 %v384
        %v637 = vunpack.c.l.b16 %v385
        %v638 = vunpack.c.h.b16 %v385
        %v639 = vunpack.c.l.b16 %v386
        %v640 = vunpack.c.h.b16 %v386
        %v641 = vunpack.c.l.b16 %v387
        %v642 = vunpack.c.h.b16 %v387
        %v643 = vunpack.c.l.b16 %v388
        %v644 = vunpack.c.h.b16 %v388
        %v645 = vunpack.c.l.b16 %v389
        %v646 = vunpack.c.h.b16 %v389
        %v647 = vunpack.c.l.b16 %v390
        %v648 = vunpack.c.h.b16 %v390
        %v649 = vunpack.c.l.b16 %v391
        %v650 = vunpack.c.h.b16 %v391
        %v651 = vunpack.c.l.b16 %v392
        %v652 = vunpack.c.h.b16 %v392
        %v653 = vunpack.c.l.b16 %v393
        %v654 = vunpack.c.h.b16 %v393
        %v655 = vunpack.c.l.b16 %v394
        %v656 = vunpack.c.h.b16 %v394
        %v657 = vunpack.c.l.b16 %v395
        %v658 = vunpack.c.h.b16 %v395
        %v659 = vunpack.c.l.b16 %v396
        %v660 = vunpack.c.h.b16 %v396
        %v661 = vunpack.c.l.b16 %v397
        %v662 = vunpack.c.h.b16 %v397
        %v663 = vunpack.c.l.b16 %v398
        %v664 = vunpack.c.h.b16 %v398
        %v665 = vunpack.c.l.b16 %v399
        %v666 = vunpack.c.h.b16 %v399
        %v667 = vunpack.c.l.b16 %v400
        %v668 = vunpack.c.h.b16 %v400
        %v669 = vunpack.c.l.b16 %v401
        %v670 = vunpack.c.h.b16 %v401
        %v671 = vunpack.c.l.b16 %v402
        %v672 = vunpack.c.h.b16 %v402
        %v673 = vunpack.c.l.b16 %v403
        %v674 = vunpack.c.h.b16 %v403
        %v675 = vunpack.c.l.b16 %v404
        %v676 = vunpack.c.h.b16 %v404
        %v677 = vunpack.c.l.b16 %v405
        %v678 = vunpack.c.h.b16 %v405
        %v679 = vunpack.c.l.b16 %v406
        %v680 = vunpack.c.h.b16 %v406
        %v681 = vunpack.c.l.b16 %v407
        %v682 = vunpack.c.h.b16 %v407
        %v683 = vunpack.c.l.b16 %v408
        %v684 = vunpack.c.h.b16 %v408
        %v685 = vunpack.c.l.b16 %v409
        %v686 = vunpack.c.h.b16 %v409
        %v687 = vunpack.c.l.b16 %v410
        %v688 = vunpack.c.h.b16 %v410
        %v689 = vunpack.c.l.b16 %v411
        %v690 = vunpack.c.h.b16 %v411
        %v691 = vunpack.c.l.b16 %v412
        %v692 = vunpack.c.h.b16 %v412
        %v693 = vunpack.c.l.b16 %v413
        %v694 = vunpack.c.h.b16 %v413
        %v695 = vunpack.c.l.b16 %v414
        %v696 = vunpack.c.h.b16 %v414
        %v697 = vunpack.c.l.b16 %v415
        %v698 = vunpack.c.h.b16 %v415
        %v699 = vunpack.c.l.b16 %v416
        %v700 = vunpack.c.h.b16 %v416
        %v701 = vunpack.c.l.b16 %v417
        %v702 = vunpack.c.h.b16 %v417
        %v703 = vunpack.c.l.b16 %v418
        %v704 = vunpack.c.h.b16 %v418
        %v705 = vunpack.c.l.b16 %v419
        %v706 = vunpack.c.h.b16 %v419
        %v707 = vunpack.c.l.b16 %v420
        %v708 = vunpack.c.h.b16 %v420
        %v709 = vunpack.c.l.b16 %v421
        %v710 = vunpack.c.h.b16 %v421
        %v711 = vunpack.c.l.b16 %v422
        %v712 = vunpack.c.h.b16 %v422
        %v713 = vunpack.c.l.b16 %v423
        %v714 = vunpack.c.h.b16 %v423
        %v715 = vunpack.c.l.b16 %v424
        %v716 = vunpack.c.h.b16 %v424
        %v717 = vunpack.c.l.b16 %v425
        %v718 = vunpack.c.h.b16 %v425
        %v719 = vunpack.c.l.b16 %v426
        %v720 = vunpack.c.h.b16 %v426
        %v721 = vunpack.c.l.b16 %v427
        %v722 = vunpack.c.h.b16 %v427
        %v723 = vunpack.c.l.b16 %v428
        %v724 = vunpack.c.h.b16 %v428
        %v725 = vunpack.c.l.b16 %v429
        %v726 = vunpack.c.h.b16 %v429
        %v727 = vunpack.c.l.b16 %v430
        %v728 = vunpack.c.h.b16 %v430
        %v729 = vunpack.c.l.b16 %v431
        %v730 = vunpack.c.h.b16 %v431
        %v731 = vunpack.c.l.b16 %v432
        %v732 = vunpack.c.h.b16 %v432
        %v733 = vunpack.c.l.b16 %v433
        %v734 = vunpack.c.h.b16 %v433
        %v735 = vunpack.c.l.b16 %v434
        %v736 = vunpack.c.h.b16 %v434
        %v737 = vunpack.c.l.b16 %v435
        %v738 = vunpack.c.h.b16 %v435
        %v739 = vunpack.c.l.b16 %v436
        %v740 = vunpack.c.h.b16 %v436
        %v741 = vunpack.c.l.b16 %v437
        %v742 = vunpack.c.h.b16 %v437
        %v743 = vunpack.c.l.b16 %v438
        %v744 = vunpack.c.h.b16 %v438
        %v745 = vunpack.c.l.b16 %v439
        %v746 = vunpack.c.h.b16 %v439
        %v747 = vunpack.c.l.b16 %v440
        %v748 = vunpack.c.h.b16 %v440
        %v749 = vunpack.c.l.b16 %v441
        %v750 = vunpack.c.h.b16 %v441
        %v751 = vpack.c.b16 %v561, %v559
        %v752 = vpack.c.b16 %v562, %v560
        %v753 = vpack.c.b16 %v565, %v563
        %v754 = vpack.c.b16 %v566, %v564
        %v755 = vpack.c.b16 %v569, %v567
        %v756 = vpack.c.b16 %v570, %v568
        %v757 = vpack.c.b16 %v573, %v571
        %v758 = vpack.c.b16 %v574, %v572
        %v759 = vpack.c.b16 %v577, %v575
        %v760 = vpack.c.b16 %v578, %v576
        %v761 = vpack.c.b16 %v581, %v579
        %v762 = vpack.c.b16 %v582, %v580
        %v763 = vpack.c.b16 %v585, %v583
        %v764 = vpack.c.b16 %v586, %v584
        %v765 = vpack.c.b16 %v589, %v587
        %v766 = vpack.c.b16 %v590, %v588
        %v767 = vpack.c.b16 %v593, %v591
        %v768 = vpack.c.b16 %v594, %v592
        %v769 = vpack.c.b16 %v597, %v595
        %v770 = vpack.c.b16 %v598, %v596
        %v771 = vpack.c.b16 %v601, %v599
        %v772 = vpack.c.b16 %v602, %v600
        %v773 = vpack.c.b16 %v605, %v603
        %v774 = vpack.c.b16 %v606, %v604
        %v775 = vpack.c.b16 %v609, %v607
        %v776 = vpack.c.b16 %v610, %v608
        %v777 = vpack.c.b16 %v613, %v611
        %v778 = vpack.c.b16 %v614, %v612
        %v779 = vpack.c.b16 %v617, %v615
        %v780 = vpack.c.b16 %v618, %v616
        %v781 = vpack.c.b16 %v621, %v619
        %v782 = vpack.c.b16 %v622, %v620
        %v783 = vpack.c.b16 %v625, %v623
        %v784 = vpack.c.b16 %v626, %v624
        %v785 = vpack.c.b16 %v629, %v627
        %v786 = vpack.c.b16 %v630, %v628
        %v787 = vpack.c.b16 %v633, %v631
        %v788 = vpack.c.b16 %v634, %v632
        %v789 = vpack.c.b16 %v637, %v635
        %v790 = vpack.c.b16 %v638, %v636
        %v791 = vpack.c.b16 %v641, %v639
        %v792 = vpack.c.b16 %v642, %v640
        %v793 = vpack.c.b16 %v645, %v643
        %v794 = vpack.c.b16 %v646, %v644
        %v795 = vpack.c.b16 %v649, %v647
        %v796 = vpack.c.b16 %v650, %v648
        %v797 = vpack.c.b16 %v653, %v651
        %v798 = vpack.c.b16 %v654, %v652
        %v799 = vpack.c.b16 %v657, %v655
        %v800 = vpack.c.b16 %v658, %v656
        %v801 = vpack.c.b16 %v661, %v659
        %v802 = vpack.c.b16 %v662, %v660
        %v803 = vpack.c.b16 %v665, %v663
        %v804 = vpack.c.b16 %v666, %v664
        %v805 = vpack.c.b16 %v669, %v667
        %v806 = vpack.c.b16 %v670, %v668
        %v807 = vpack.c.b16 %v673, %v671
        %v808 = vpack.c.b16 %v674, %v672
        %v809 = vpack.c.b16 %v677, %v675
        %v810 = vpack.c.b16 %v678, %v676
        %v811 = vpack.c.b16 %v681, %v679
        %v812 = vpack.c.b16 %v682, %v680
        %v813 = vpack.c.b16 %v685, %v683
        %v814 = vpack.c.b16 %v686, %v684
        %v815 = vpack.c.b16 %v689, %v687
        %v816 = vpack.c.b16 %v690, %v688
        %v817 = vpack.c.b16 %v693, %v691
        %v818 = vpack.c.b16 %v694, %v692
        %v819 = vpack.c.b16 %v697, %v695
        %v820 = vpack.c.b16 %v698, %v696
        %v821 = vpack.c.b16 %v701, %v699
        %v822 = vpack.c.b16 %v702, %v700
        %v823 = vpack.c.b16 %v705, %v703
        %v824 = vpack.c.b16 %v706, %v704
        %v825 = vpack.c.b16 %v709, %v707
        %v826 = vpack.c.b16 %v710, %v708
        %v827 = vpack.c.b16 %v713, %v711
        %v828 = vpack.c.b16 %v714, %v712
        %v829 = vpack.c.b16 %v717, %v715
        %v830 = vpack.c.b16 %v718, %v716
        %v831 = vpack.c.b16 %v721, %v719
        %v832 = vpack.c.b16 %v722, %v720
        %v833 = vpack.c.b16 %v725, %v723
        %v834 = vpack.c.b16 %v726, %v724
        %v835 = vpack.c.b16 %v729, %v727
        %v836 = vpack.c.b16 %v730, %v728
        %v837 = vpack.c.b16 %v733, %v731
        %v838 = vpack.c.b16 %v734, %v732
        %v839 = vpack.c.b16 %v737, %v735
        %v840 = vpack.c.b16 %v738, %v736
        %v841 = vpack.c.b16 %v741, %v739
        %v842 = vpack.c.b16 %v742, %v740
        %v843 = vpack.c.b16 %v745, %v743
        %v844 = vpack.c.b16 %v746, %v744
        %v845 = vpack.c.b16 %v749, %v747
        %v846 = vpack.c.b16 %v750, %v748
        %943 = vmatpush.bf16.msra.mxu0 %v765
        %944 = vmatpush.bf16.msra.mxu0 %v763
        %945 = vmatpush.bf16.msra.mxu0 %v761
        %946 = vmatpush.bf16.msra.mxu0 %v759
        %947 = vmatpush.bf16.msra.mxu0 %v757
        %948 = vmatpush.bf16.msra.mxu0 %v755
        %949 = vmatpush.bf16.msra.mxu0 %v753
        %950 = vmatpush.bf16.msra.mxu0 %v751
        %951 = vmatmul.bf16.gmra.mxu0 %v451
        %v952 = vpop.f32.mrf.mxu0
        %v953 = vadd.f32 0.0, %v952
        %v954 = vpop.f32.mrf.mxu0
        %955 = vdwg.mxu0
        %956 = vmatpush.bf16.msra.mxu0 %v781
        %957 = vmatpush.bf16.msra.mxu0 %v779
        %958 = vmatpush.bf16.msra.mxu0 %v777
        %959 = vmatpush.bf16.msra.mxu0 %v775
        %960 = vmatpush.bf16.msra.mxu0 %v773
        %961 = vmatpush.bf16.msra.mxu0 %v771
        %962 = vmatpush.bf16.msra.mxu0 %v769
        %963 = vmatpush.bf16.msra.mxu0 %v767
        %964 = vmatmul.bf16.gmra.mxu0 %v452
        %v965 = vpop.f32.mrf.mxu0
        %v966 = vadd.f32 %v953, %v965
        %v967 = vpop.f32.mrf.mxu0
        %968 = vdwg.mxu0
        %969 = vmatpush.bf16.msra.mxu0 %v797
        %970 = vmatpush.bf16.msra.mxu0 %v795
        %971 = vmatpush.bf16.msra.mxu0 %v793
        %972 = vmatpush.bf16.msra.mxu0 %v791
        %973 = vmatpush.bf16.msra.mxu0 %v789
        %974 = vmatpush.bf16.msra.mxu0 %v787
        %975 = vmatpush.bf16.msra.mxu0 %v785
        %976 = vmatpush.bf16.msra.mxu0 %v783
        %977 = vmatmul.bf16.gmra.mxu0 %v453
        %v978 = vpop.f32.mrf.mxu0
        %v979 = vadd.f32 %v966, %v978
        %v980 = vpop.f32.mrf.mxu0
        %981 = vdwg.mxu0
        %982 = vmatpush.bf16.msra.mxu0 %v813
        %983 = vmatpush.bf16.msra.mxu0 %v811
        %984 = vmatpush.bf16.msra.mxu0 %v809
        %985 = vmatpush.bf16.msra.mxu0 %v807
        %986 = vmatpush.bf16.msra.mxu0 %v805
        %987 = vmatpush.bf16.msra.mxu0 %v803
        %988 = vmatpush.bf16.msra.mxu0 %v801
        %989 = vmatpush.bf16.msra.mxu0 %v799
        %990 = vmatmul.bf16.gmra.mxu0 %v454
        %v991 = vpop.f32.mrf.mxu0
        %v992 = vadd.f32 %v979, %v991
        %v993 = vpop.f32.mrf.mxu0
        %994 = vdwg.mxu0
        %995 = vmatpush.bf16.msra.mxu0 %v829
        %996 = vmatpush.bf16.msra.mxu0 %v827
        %997 = vmatpush.bf16.msra.mxu0 %v825
        %998 = vmatpush.bf16.msra.mxu0 %v823
        %999 = vmatpush.bf16.msra.mxu0 %v821
        %1000 = vmatpush.bf16.msra.mxu0 %v819
        %1001 = vmatpush.bf16.msra.mxu0 %v817
        %1002 = vmatpush.bf16.msra.mxu0 %v815
        %1003 = vmatmul.bf16.gmra.mxu0 %v455
        %v1004 = vpop.f32.mrf.mxu0
        %v1005 = vadd.f32 %v992, %v1004
        %v1006 = vpop.f32.mrf.mxu0
        %1007 = vdwg.mxu0
        %1008 = vmatpush.bf16.msra.mxu0 %v845
        %1009 = vmatpush.bf16.msra.mxu0 %v843
        %1010 = vmatpush.bf16.msra.mxu0 %v841
        %1011 = vmatpush.bf16.msra.mxu0 %v839
        %1012 = vmatpush.bf16.msra.mxu0 %v837
        %1013 = vmatpush.bf16.msra.mxu0 %v835
        %1014 = vmatpush.bf16.msra.mxu0 %v833
        %1015 = vmatpush.bf16.msra.mxu0 %v831
        %1016 = vmatmul.bf16.gmra.mxu0 %v456
        %v1017 = vpop.f32.mrf.mxu0
        %v1018 = vadd.f32 %v1005, %v1017
        %v1019 = vpop.f32.mrf.mxu0
        %1020 = vdwg.mxu0
        %1021 = vmatpush.bf16.msra.mxu0 %v766
        %1022 = vmatpush.bf16.msra.mxu0 %v764
        %1023 = vmatpush.bf16.msra.mxu0 %v762
        %1024 = vmatpush.bf16.msra.mxu0 %v760
        %1025 = vmatpush.bf16.msra.mxu0 %v758
        %1026 = vmatpush.bf16.msra.mxu0 %v756
        %1027 = vmatpush.bf16.msra.mxu0 %v754
        %1028 = vmatpush.bf16.msra.mxu0 %v752
        %1029 = vmatmul.bf16.gmra.mxu0 %v451
        %v1030 = vpop.f32.mrf.mxu0
        %v1031 = vadd.f32 0.0, %v1030
        %v1032 = vpop.f32.mrf.mxu0
        %1033 = vdwg.mxu0
        %1034 = vmatpush.bf16.msra.mxu0 %v782
        %1035 = vmatpush.bf16.msra.mxu0 %v780
        %1036 = vmatpush.bf16.msra.mxu0 %v778
        %1037 = vmatpush.bf16.msra.mxu0 %v776
        %1038 = vmatpush.bf16.msra.mxu0 %v774
        %1039 = vmatpush.bf16.msra.mxu0 %v772
        %1040 = vmatpush.bf16.msra.mxu0 %v770
        %1041 = vmatpush.bf16.msra.mxu0 %v768
        %1042 = vmatmul.bf16.gmra.mxu0 %v452
        %v1043 = vpop.f32.mrf.mxu0
        %v1044 = vadd.f32 %v1031, %v1043
        %v1045 = vpop.f32.mrf.mxu0
        %1046 = vdwg.mxu0
        %1047 = vmatpush.bf16.msra.mxu0 %v798
        %1048 = vmatpush.bf16.msra.mxu0 %v796
        %1049 = vmatpush.bf16.msra.mxu0 %v794
        %1050 = vmatpush.bf16.msra.mxu0 %v792
        %1051 = vmatpush.bf16.msra.mxu0 %v790
        %1052 = vmatpush.bf16.msra.mxu0 %v788
        %1053 = vmatpush.bf16.msra.mxu0 %v786
        %1054 = vmatpush.bf16.msra.mxu0 %v784
        %1055 = vmatmul.bf16.gmra.mxu0 %v453
        %v1056 = vpop.f32.mrf.mxu0
        %v1057 = vadd.f32 %v1044, %v1056
        %v1058 = vpop.f32.mrf.mxu0
        %1059 = vdwg.mxu0
        %1060 = vmatpush.bf16.msra.mxu0 %v814
        %1061 = vmatpush.bf16.msra.mxu0 %v812
        %1062 = vmatpush.bf16.msra.mxu0 %v810
        %1063 = vmatpush.bf16.msra.mxu0 %v808
        %1064 = vmatpush.bf16.msra.mxu0 %v806
        %1065 = vmatpush.bf16.msra.mxu0 %v804
        %1066 = vmatpush.bf16.msra.mxu0 %v802
        %1067 = vmatpush.bf16.msra.mxu0 %v800
        %1068 = vmatmul.bf16.gmra.mxu0 %v454
        %v1069 = vpop.f32.mrf.mxu0
        %v1070 = vadd.f32 %v1057, %v1069
        %v1071 = vpop.f32.mrf.mxu0
        %1072 = vdwg.mxu0
        %1073 = vmatpush.bf16.msra.mxu0 %v830
        %1074 = vmatpush.bf16.msra.mxu0 %v828
        %1075 = vmatpush.bf16.msra.mxu0 %v826
        %1076 = vmatpush.bf16.msra.mxu0 %v824
        %1077 = vmatpush.bf16.msra.mxu0 %v822
        %1078 = vmatpush.bf16.msra.mxu0 %v820
        %1079 = vmatpush.bf16.msra.mxu0 %v818
        %1080 = vmatpush.bf16.msra.mxu0 %v816
        %1081 = vmatmul.bf16.gmra.mxu0 %v455
        %v1082 = vpop.f32.mrf.mxu0
        %v1083 = vadd.f32 %v1070, %v1082
        %v1084 = vpop.f32.mrf.mxu0
        %1085 = vdwg.mxu0
        %1086 = vmatpush.bf16.msra.mxu0 %v846
        %1087 = vmatpush.bf16.msra.mxu0 %v844
        %1088 = vmatpush.bf16.msra.mxu0 %v842
        %1089 = vmatpush.bf16.msra.mxu0 %v840
        %1090 = vmatpush.bf16.msra.mxu0 %v838
        %1091 = vmatpush.bf16.msra.mxu0 %v836
        %1092 = vmatpush.bf16.msra.mxu0 %v834
        %1093 = vmatpush.bf16.msra.mxu0 %v832
        %1094 = vmatmul.bf16.gmra.mxu0 %v456
        %v1095 = vpop.f32.mrf.mxu0
        %v1096 = vadd.f32 %v1083, %v1095
        %v1097 = vpop.f32.mrf.mxu0
        %1098 = vdwg.mxu0
        %v1099 = vadd.f32 %v341, %v1018
        %v1100 = vadd.f32 %v342, %v1096
        %1101 = vst [vmem:[%s333] sm:$0xff] %v1099
        %1102 = vst [vmem:[%s333 + $0x8] sm:$0xff] %v1100
        // Predicated region
        $region53: #{bn_layer_forward.9} parent=35 // pred_check
          %p1103 = pneg %p335
        $region54: #{bn_layer_forward.9} parent=35 // pred_check_branch
          %1105 = sbr.rel (%p1103) target = $region56
        $region55: #{bn_layer_forward.9} parent=35 // pred_region
          %v1106 = vld [vmem:[%s333] sm:$0xff]
          %v1107 = vld [vmem:[%s333 + $0x8] sm:$0xff]
          %v1108 = vrot.slane %v1106, 4
          %v1109 = vadd.f32 %v1106, %v1108
          %v1110 = vrot.slane %v1109, 2
          %v1111 = vadd.f32 %v1109, %v1110
          %v1112 = vrot.slane %v1111, 1
          %v1113 = vadd.f32 %v1111, %v1112
          %v1114 = vrot.slane %v1107, 4
          %v1115 = vadd.f32 %v1107, %v1114
          %v1116 = vrot.slane %v1115, 2
          %v1117 = vadd.f32 %v1115, %v1116
          %v1118 = vrot.slane %v1117, 1
          %v1119 = vadd.f32 %v1117, %v1118
          %v1120 = vmul.f32 %v1106, %v1106
          %v1121 = vmul.f32 %v1107, %v1107
          %v1122 = vrot.slane %v1120, 4
          %v1123 = vadd.f32 %v1120, %v1122
          %v1124 = vrot.slane %v1123, 2
          %v1125 = vadd.f32 %v1123, %v1124
          %v1126 = vrot.slane %v1125, 1
          %v1127 = vadd.f32 %v1125, %v1126
          %v1128 = vrot.slane %v1121, 4
          %v1129 = vadd.f32 %v1121, %v1128
          %v1130 = vrot.slane %v1129, 2
          %v1131 = vadd.f32 %v1129, %v1130
          %v1132 = vrot.slane %v1131, 1
          %v1133 = vadd.f32 %v1131, %v1132
          %v1134 = vmul.f32 %v1113, 0.125
          %v1135 = vmul.f32 %v1119, 0.125
          %v1136 = vmul.f32 %v1127, 0.125
          %v1137 = vmul.f32 %v1133, 0.125
          %v1138 = vmul.f32 %v1134, %v1134
          %v1139 = vmul.f32 %v1135, %v1135
          %v1140 = vsub.f32 %v1136, %v1138
          %v1141 = vsub.f32 %v1137, %v1139
          %v1142 = vsub.f32 %v1106, %v1134
          %v1143 = vsub.f32 %v1107, %v1135
          %v1144 = vadd.f32 %v1140, 1e-05
          %v1145 = vadd.f32 %v1141, 1e-05
          %v1146 = vrsqrt.pop %v1144
          %v1147 = vmul.f32 %v1146, %v1144
          %v1148 = vmul.f32 %v1147, %v1146
          %v1149 = vmul.f32 0.5, %v1148
          %v1150 = vsub.f32 1.5, %v1149
          %v1151 = vmul.f32 %v1146, %v1150
          %vm1152 = vweird.f32 %v1144
          %vm1153 = vweird.f32 %v1146
          %vm1154 = vmor %vm1152, %vm1153
          %v1155 = vsel %vm1154, %v1146, %v1151
          %v1156 = vrsqrt.pop %v1145
          %v1157 = vmul.f32 %v1156, %v1145
          %v1158 = vmul.f32 %v1157, %v1156
          %v1159 = vmul.f32 0.5, %v1158
          %v1160 = vsub.f32 1.5, %v1159
          %v1161 = vmul.f32 %v1156, %v1160
          %vm1162 = vweird.f32 %v1145
          %vm1163 = vweird.f32 %v1156
          %vm1164 = vmor %vm1162, %vm1163
          %v1165 = vsel %vm1164, %v1156, %v1161
          %v1166 = vmul.f32 %v1142, %v1155
          %v1167 = vmul.f32 %v1143, %v1165
          %v1168 = vld [vmem:[%s270] sm:$0x3]
          %v1170 = vperm.slane %v1168, 0
          %v1171 = vperm.slane %v1168, 1
          %v1174 = vmul.f32 %v1166, %v1170
          %v1175 = vmul.f32 %v1167, %v1171
          %v1176 = vld [vmem:[%s280] sm:$0x3]
          %v1178 = vperm.slane %v1176, 0
          %v1179 = vperm.slane %v1176, 1
          %v1182 = vadd.f32 %v1174, %v1178
          %v1183 = vadd.f32 %v1175, %v1179
          %1184 = vst [vmem:[%s333] sm:$0xff] %v1182
          %1185 = vst [vmem:[%s333 + $0x8] sm:$0xff] %v1183
        $region56: #{bn_layer_forward.9} parent=35 // pred_fallthru
          _
        %s1186 = smul.u32 2, %s25
        %p1187 = scmp.lt.s32.totalorder %s1186, 3
        %s1188 = scalar_select %p1187, %s1186, 3
        %s1189 = smul.addr %s1188, 8
        %s1190 = scalar_lea.vmem %s4, %s1189
        // Predicated region
        $region57: #{bn_layer_forward.9} parent=35 // pred_check
          %p1191 = pneg %p157
        $region58: #{bn_layer_forward.9} parent=35 // pred_check_branch
          %1193 = sbr.rel (%p1191) target = $region60
        $region59: #{bn_layer_forward.9} parent=35 // pred_region
          %s1194 = smul.u32 2, %s25
        $region60: #{bn_layer_forward.9} parent=35 // pred_fallthru
          _
      $region36: #{bn_layer_forward.9} parent=5 // pred_fallthru
        _
      %p1195 = scmp.le.s32.totalorder 2, %s16
      // Predicated region
      $region61: #{bn_layer_forward.9} parent=5 // pred_check
        %p1196 = pneg %p1195
      $region62: #{bn_layer_forward.9} parent=5 // pred_check_branch
        %1198 = sbr.rel (%p1196) target = $region64
      $region63: #{bn_layer_forward.9} parent=5 // pred_region
        %s1199 = ssub.s32 %s16, 2
        // Predicated region
        $region65: #{bn_layer_forward.9} parent=63 // pred_check
          %p1200 = pneg %p163
        $region66: #{bn_layer_forward.9} parent=63 // pred_check_branch
          %1202 = sbr.rel (%p1200) target = $region68
        $region67: #{bn_layer_forward.9} parent=63 // pred_region
          %s1203 = smul.u32 2, %s27
          %p1204 = scmp.lt.s32.totalorder %s1203, 3
          %s1205 = scalar_select %p1204, %s1203, 3
          %s1206 = smul.addr %s1205, 8
          %s1207 = scalar_lea.vmem %s4, %s1206
        $region68: #{bn_layer_forward.9} parent=63 // pred_fallthru
          _
      $region64: #{bn_layer_forward.9} parent=5 // pred_fallthru
        _
    $region6: #{bn_layer_forward.9} parent=1 // loop_footer
      %s20 = sadd.s32 1, %s16
    $region7: #{bn_layer_forward.9} parent=1 // loop_footer_branch
      %15 = sbr.rel target = $region3
    $region8: #{bn_layer_forward.9} parent=1 // loop_exit
      _
    %1208 = vsyncpa [#allocation3], 1
    %s1209 = scalar_lea.sflag [#allocation3], 1
    %1210 = vsyncpa %s1209, 1
    %1211 = vsyncpa [#allocation5], 1
    %s1212 = scalar_lea.sflag [#allocation5], 1
    %1213 = vsyncpa %s1212, 1

// kernel: bn_layer_forward.11
$region0: #{bn_layer_forward.11}
  #allocation0 [shape = 'u32[]', space=smem, size = 0x4, offset = 0x4, fixed_abs, tag = 'smem constant byte address 0x4 - core index']
  #allocation1 [shape = 'u32[72,128]{1,0:T(1,128)}', space=vmem, size = 0x9000, scoped, tag = 'internal scratch']
  %s0 = inlined_call_operand.vmem [shape: bf16[9,8,512], index: 0, kind: input, shape index: {}]
  %s1 = inlined_call_operand.hbm [shape: bf16[9,512,512], index: 1, kind: input, shape index: {}]
  %s2 = inlined_call_operand.hbm [shape: f32[1,512], index: 2, kind: input, shape index: {}]
  %s3 = inlined_call_operand.hbm [shape: f32[1,512], index: 3, kind: input, shape index: {}]
  %s4 = inlined_call_operand.vmem [shape: f32[8,512], index: 4, kind: input, shape index: {}]
  %s5 = inlined_call_operand.vmem [shape: f32[8,512], index: 5, kind: output, shape index: {}]
  %s6 = sld [smem:[#allocation0]]
  $region73: #{bn_layer_forward.11} parent=0
    _
  %s8 = ssub.s32 1, %s6
  %s9 = scalar_select 0, %s8, %s6
  $region1: #{bn_layer_forward.11} parent=0
    #allocation2 [shape = 'u8[524288]{0}', space=vmem, size = 0x80000, scoped, tag = 'input window, operand 1']
    #allocation3 [shape = 's32[2]{0}', space=sflag, size = 0x8, scoped, tag = 'scoped memory for bn_layer_forward.11']
    #allocation4 [shape = 'u8[2048]{0}', space=vmem, size = 0x800, scoped, tag = 'input window, operand 2']
    #allocation5 [shape = 's32[2]{0}', space=sflag, size = 0x8, scoped, tag = 'scoped memory for bn_layer_forward.11']
    #allocation6 [shape = 'u8[2048]{0}', space=vmem, size = 0x800, scoped, tag = 'input window, operand 3']
    %10 = vsyncpa [#allocation3], 0
    %s11 = scalar_lea.sflag [#allocation3], 1
    %12 = vsyncpa %s11, 0
    %13 = vsyncpa [#allocation5], 0
    %s14 = scalar_lea.sflag [#allocation5], 1
    %15 = vsyncpa %s14, 0
    loop: start=0, step=1, limit=20
    $region2: #{bn_layer_forward.11} parent=1 // loop_pre_header
      _
    $region3: #{bn_layer_forward.11} parent=1 // loop_header
      %s17 = sphi 0, %s21
      %p18 = scmp.ge.s32.totalorder %s17, 20
      %s24 = sphi 0, %s36
      %s25 = sphi 0, %s32
      %s26 = sphi 0, %s24
      %s27 = sphi 0, %s25
      %s28 = sphi 0, %s26
      %s29 = sphi 0, %s27
      %s39 = sphi 0, %s41
      %s42 = sphi 0, %s39
      %s43 = sphi 0, %s42
      %s59 = sphi 0, %s43
      %s67 = sphi 0, %s69
      %s70 = sphi 0, %s67
      %s71 = sphi 0, %s70
      %s87 = sphi 0, %s71
      %s93 = sphi 0, %s95
      %s96 = sphi 0, %s93
      %s97 = sphi 0, %s96
      %s113 = sphi 0, %s97
      %s119 = sphi 0, %s121
      %s122 = sphi 0, %s119
      %s123 = sphi 0, %s122
      %s139 = sphi 0, %s123
      %s145 = sphi 0, %s147
      %s148 = sphi 0, %s145
      %s149 = sphi 0, %s148
      %s165 = sphi 0, %s149
      %s171 = sphi 0, %s173
      %s174 = sphi 0, %s171
      %s175 = sphi 0, %s174
      %s191 = sphi 0, %s175
    $region4: #{bn_layer_forward.11} parent=1 // loop_header_branch
      %20 = sbr.rel (%p18) target = $region8
    $region5: #{bn_layer_forward.11} parent=1 // loop_body
      %s22 = ssub.s32 %s17, 1
      %s23 = ssub.s32 %s17, 2
      %s30 = sadd.s32 1, %s25
      %p31 = scmp.ge.s32.totalorder %s30, 9
      %s32 = scalar_select %p31, 0, %s30
      %s33 = sadd.s32 1, %s24
      %s34 = scalar_select %p31, %s33, %s24
      %p35 = scmp.ge.s32.totalorder %s34, 2
      %s36 = scalar_select %p35, 0, %s34
      %s37 = ssub.s32 %s25, %s32
      %p38 = scmp.eq.s32.totalorder %s37, 0
      %s40 = sadd.s32 %s39, 1
      %s41 = scalar_select %p38, %s39, %s40
      %p44 = pneg %p38
      %p45 = scmp.eq.s32.totalorder %s17, 17
      %p46 = por %p44, %p45
      %p47 = scmp.ne.s32.totalorder %s39, %s42
      %p48 = scmp.eq.s32.totalorder %s17, 0
      %p49 = por %p47, %p48
      %p50 = scmp.ne.s32.totalorder %s39, %s42
      %p51 = scmp.eq.s32.totalorder %s22, 17
      %p52 = por %p50, %p51
      %p53 = scmp.ne.s32.totalorder %s42, %s43
      %p54 = scmp.eq.s32.totalorder %s22, 0
      %p55 = por %p53, %p54
      %p56 = scmp.ne.s32.totalorder %s42, %s43
      %p57 = scmp.eq.s32.totalorder %s23, 17
      %p58 = por %p56, %p57
      %p60 = scmp.ne.s32.totalorder %s43, %s59
      %p61 = scmp.eq.s32.totalorder %s23, 0
      %p62 = por %p60, %p61
      %s63 = ssub.s32 %s25, %s32
      %s64 = ssub.s32 %s24, %s36
      %s65 = sor.u32 %s63, %s64
      %p66 = scmp.eq.s32.totalorder %s65, 0
      %s68 = sadd.s32 %s67, 1
      %s69 = scalar_select %p66, %s67, %s68
      %p72 = pneg %p66
      %p73 = scmp.eq.s32.totalorder %s17, 17
      %p74 = por %p72, %p73
      %p75 = scmp.ne.s32.totalorder %s67, %s70
      %p76 = scmp.eq.s32.totalorder %s17, 0
      %p77 = por %p75, %p76
      %p78 = scmp.ne.s32.totalorder %s67, %s70
      %p79 = scmp.eq.s32.totalorder %s22, 17
      %p80 = por %p78, %p79
      %p81 = scmp.ne.s32.totalorder %s70, %s71
      %p82 = scmp.eq.s32.totalorder %s22, 0
      %p83 = por %p81, %p82
      %p84 = scmp.ne.s32.totalorder %s70, %s71
      %p85 = scmp.eq.s32.totalorder %s23, 17
      %p86 = por %p84, %p85
      %p88 = scmp.ne.s32.totalorder %s71, %s87
      %p89 = scmp.eq.s32.totalorder %s23, 0
      %p90 = por %p88, %p89
      %s91 = ssub.s32 %s24, %s36
      %p92 = scmp.eq.s32.totalorder %s91, 0
      %s94 = sadd.s32 %s93, 1
      %s95 = scalar_select %p92, %s93, %s94
      %p98 = pneg %p92
      %p99 = scmp.eq.s32.totalorder %s17, 17
      %p100 = por %p98, %p99
      %p101 = scmp.ne.s32.totalorder %s93, %s96
      %p102 = scmp.eq.s32.totalorder %s17, 0
      %p103 = por %p101, %p102
      %p104 = scmp.ne.s32.totalorder %s93, %s96
      %p105 = scmp.eq.s32.totalorder %s22, 17
      %p106 = por %p104, %p105
      %p107 = scmp.ne.s32.totalorder %s96, %s97
      %p108 = scmp.eq.s32.totalorder %s22, 0
      %p109 = por %p107, %p108
      %p110 = scmp.ne.s32.totalorder %s96, %s97
      %p111 = scmp.eq.s32.totalorder %s23, 17
      %p112 = por %p110, %p111
      %p114 = scmp.ne.s32.totalorder %s97, %s113
      %p115 = scmp.eq.s32.totalorder %s23, 0
      %p116 = por %p114, %p115
      %s117 = ssub.s32 %s24, %s36
      %p118 = scmp.eq.s32.totalorder %s117, 0
      %s120 = sadd.s32 %s119, 1
      %s121 = scalar_select %p118, %s119, %s120
      %p124 = pneg %p118
      %p125 = scmp.eq.s32.totalorder %s17, 17
      %p126 = por %p124, %p125
      %p127 = scmp.ne.s32.totalorder %s119, %s122
      %p128 = scmp.eq.s32.totalorder %s17, 0
      %p129 = por %p127, %p128
      %p130 = scmp.ne.s32.totalorder %s119, %s122
      %p131 = scmp.eq.s32.totalorder %s22, 17
      %p132 = por %p130, %p131
      %p133 = scmp.ne.s32.totalorder %s122, %s123
      %p134 = scmp.eq.s32.totalorder %s22, 0
      %p135 = por %p133, %p134
      %p136 = scmp.ne.s32.totalorder %s122, %s123
      %p137 = scmp.eq.s32.totalorder %s23, 17
      %p138 = por %p136, %p137
      %p140 = scmp.ne.s32.totalorder %s123, %s139
      %p141 = scmp.eq.s32.totalorder %s23, 0
      %p142 = por %p140, %p141
      %s143 = ssub.s32 %s24, %s36
      %p144 = scmp.eq.s32.totalorder %s143, 0
      %s146 = sadd.s32 %s145, 1
      %s147 = scalar_select %p144, %s145, %s146
      %p150 = pneg %p144
      %p151 = scmp.eq.s32.totalorder %s17, 17
      %p152 = por %p150, %p151
      %p153 = scmp.ne.s32.totalorder %s145, %s148
      %p154 = scmp.eq.s32.totalorder %s17, 0
      %p155 = por %p153, %p154
      %p156 = scmp.ne.s32.totalorder %s145, %s148
      %p157 = scmp.eq.s32.totalorder %s22, 17
      %p158 = por %p156, %p157
      %p159 = scmp.ne.s32.totalorder %s148, %s149
      %p160 = scmp.eq.s32.totalorder %s22, 0
      %p161 = por %p159, %p160
      %p162 = scmp.ne.s32.totalorder %s148, %s149
      %p163 = scmp.eq.s32.totalorder %s23, 17
      %p164 = por %p162, %p163
      %p166 = scmp.ne.s32.totalorder %s149, %s165
      %p167 = scmp.eq.s32.totalorder %s23, 0
      %p168 = por %p166, %p167
      %s169 = ssub.s32 %s24, %s36
      %p170 = scmp.eq.s32.totalorder %s169, 0
      %s172 = sadd.s32 %s171, 1
      %s173 = scalar_select %p170, %s171, %s172
      %p176 = pneg %p170
      %p177 = scmp.eq.s32.totalorder %s17, 17
      %p178 = por %p176, %p177
      %p179 = scmp.ne.s32.totalorder %s171, %s174
      %p180 = scmp.eq.s32.totalorder %s17, 0
      %p181 = por %p179, %p180
      %p182 = scmp.ne.s32.totalorder %s171, %s174
      %p183 = scmp.eq.s32.totalorder %s22, 17
      %p184 = por %p182, %p183
      %p185 = scmp.ne.s32.totalorder %s174, %s175
      %p186 = scmp.eq.s32.totalorder %s22, 0
      %p187 = por %p185, %p186
      %p188 = scmp.ne.s32.totalorder %s174, %s175
      %p189 = scmp.eq.s32.totalorder %s23, 17
      %p190 = por %p188, %p189
      %p192 = scmp.ne.s32.totalorder %s175, %s191
      %p193 = scmp.eq.s32.totalorder %s23, 0
      %p194 = por %p192, %p193
      %p195 = scmp.le.s32.totalorder 1, %s17
      %p196 = scmp.lt.s32.totalorder %s17, 19
      %p197 = pnand %p195, %p196
      %p198 = pneg %p197
      // Predicated region
      $region9: #{bn_layer_forward.11} parent=5 // pred_check
        _
      $region10: #{bn_layer_forward.11} parent=5 // pred_check_branch
        %200 = sbr.rel (%p197) target = $region12
      $region11: #{bn_layer_forward.11} parent=5 // pred_region
        %s201 = ssub.s32 %s17, 1
      $region12: #{bn_layer_forward.11} parent=5 // pred_fallthru
        _
      %p202 = scmp.lt.s32.totalorder %s17, 18
      // Predicated region
      $region13: #{bn_layer_forward.11} parent=5 // pred_check
        %p203 = pneg %p202
      $region14: #{bn_layer_forward.11} parent=5 // pred_check_branch
        %205 = sbr.rel (%p203) target = $region16
      $region15: #{bn_layer_forward.11} parent=5 // pred_region
        // Predicated region
        $region17: #{bn_layer_forward.11} parent=15 // pred_check
          %p206 = pneg %p49
        $region18: #{bn_layer_forward.11} parent=15 // pred_check_branch
          %208 = sbr.rel (%p206) target = $region20
        $region19: #{bn_layer_forward.11} parent=15 // pred_region
          %p209 = scmp.lt.s32.totalorder %s25, 8
          %s210 = scalar_select %p209, %s25, 8
          %s211 = smul.addr %s210, 4
          %s212 = smul.addr %s211, 4
          %s213 = scalar_lea.vmem %s0, %s212
        $region20: #{bn_layer_forward.11} parent=15 // pred_fallthru
          _
        // Predicated region
        $region21: #{bn_layer_forward.11} parent=15 // pred_check
          %p214 = pneg %p77
        $region22: #{bn_layer_forward.11} parent=15 // pred_check_branch
          %216 = sbr.rel (%p214) target = $region24
        $region23: #{bn_layer_forward.11} parent=15 // pred_region
          %s217 = sand.u32 %s67, 1
          %s218 = scalar_lea.sflag [#allocation3], %s217
          %s219 = sand.u32 %s67, 1
          %s220 = smul.addr %s219, 512
          %s221 = scalar_lea.vmem [#allocation2], %s220
          %s222 = smul.u32 2, %s24
          %224 = vsyncadd %s218, 0
          %s225 = smul.addr %s25, 256
          %s226 = sadd.s32 %s222, %s225
          %s227 = smul.addr %s226, 4
          %s228 = scalar_lea.hbm %s1, %s227
          %s229 = sshll.u32 %s228, 4
          %s230 = int_to_ptr.hbm [resolvable:$true] %s229
          %s231 = sshll.u32 %s221, 4
          %s232 = int_to_ptr.vmem [resolvable:$true] %s231
          %237 = dma.hbm_to_vmem [thread:$0]  %s230, 8192, %s232, %s218, 256, 128, 8
        $region24: #{bn_layer_forward.11} parent=15 // pred_fallthru
          _
        // Predicated region
        $region25: #{bn_layer_forward.11} parent=15 // pred_check
          %p238 = pneg %p103
        $region26: #{bn_layer_forward.11} parent=15 // pred_check_branch
          %240 = sbr.rel (%p238) target = $region28
        $region27: #{bn_layer_forward.11} parent=15 // pred_region
          %s241 = sand.u32 %s17, 1
          %s242 = scalar_lea.sflag [#allocation5], %s241
          %s243 = sand.u32 %s93, 1
          %s244 = smul.addr %s243, 2
          %s245 = scalar_lea.vmem [#allocation4], %s244
          %s246 = smul.u32 2, %s24
          %248 = vsyncadd %s242, 0
          %s249 = scalar_lea.hbm %s2, %s246
          %s251 = sshll.u32 %s249, 4
          %s252 = int_to_ptr.hbm [resolvable:$true] %s251
          %s253 = sshll.u32 %s245, 4
          %s254 = int_to_ptr.vmem [resolvable:$true] %s253
          %256 = dma.hbm_to_vmem [thread:$0]  %s252, 32, %s254, %s242
        $region28: #{bn_layer_forward.11} parent=15 // pred_fallthru
          _
        // Predicated region
        $region29: #{bn_layer_forward.11} parent=15 // pred_check
          %p257 = pneg %p129
        $region30: #{bn_layer_forward.11} parent=15 // pred_check_branch
          %259 = sbr.rel (%p257) target = $region32
        $region31: #{bn_layer_forward.11} parent=15 // pred_region
          %s260 = sand.u32 %s17, 1
          %s261 = scalar_lea.sflag [#allocation5], %s260
          %s262 = sand.u32 %s119, 1
          %s263 = smul.addr %s262, 2
          %s264 = scalar_lea.vmem [#allocation6], %s263
          %s265 = smul.u32 2, %s24
          %267 = vsyncadd %s261, 0
          %s268 = scalar_lea.hbm %s3, %s265
          %s270 = sshll.u32 %s268, 4
          %s271 = int_to_ptr.hbm [resolvable:$true] %s270
          %s272 = sshll.u32 %s264, 4
          %s273 = int_to_ptr.vmem [resolvable:$true] %s272
          %275 = dma.hbm_to_vmem [thread:$0]  %s271, 32, %s273, %s261
        $region32: #{bn_layer_forward.11} parent=15 // pred_fallthru
          _
        // Predicated region
        $region33: #{bn_layer_forward.11} parent=15 // pred_check
          %p276 = pneg %p155
        $region34: #{bn_layer_forward.11} parent=15 // pred_check_branch
          %278 = sbr.rel (%p276) target = $region36
        $region35: #{bn_layer_forward.11} parent=15 // pred_region
          %s279 = smul.u32 2, %s24
          %p280 = scmp.lt.s32.totalorder %s279, 3
          %s281 = scalar_select %p280, %s279, 3
          %s282 = smul.addr %s281, 8
          %s283 = scalar_lea.vmem %s4, %s282
          %s284 = smul.u32 2, %s24
        $region36: #{bn_layer_forward.11} parent=15 // pred_fallthru
          _
      $region16: #{bn_layer_forward.11} parent=5 // pred_fallthru
        _
      %p285 = scmp.le.s32.totalorder 1, %s17
      %p286 = scmp.lt.s32.totalorder %s17, 19
      %p287 = pnand %p285, %p286
      %p288 = pneg %p287
      // Predicated region
      $region37: #{bn_layer_forward.11} parent=5 // pred_check
        _
      $region38: #{bn_layer_forward.11} parent=5 // pred_check_branch
        %290 = sbr.rel (%p287) target = $region40
      $region39: #{bn_layer_forward.11} parent=5 // pred_region
        %s291 = ssub.s32 %s17, 1
        %s292 = sand.u32 %s70, 1
        %s293 = scalar_lea.sflag [#allocation3], %s292
        %s294 = sand.u32 %s70, 1
        %s295 = smul.addr %s294, 512
        %s296 = scalar_lea.vmem [#allocation2], %s295
        // Predicated region
        $region41: #{bn_layer_forward.11} parent=39 // pred_check
          %p297 = pneg %p83
        $region42: #{bn_layer_forward.11} parent=39 // pred_check_branch
          %299 = sbr.rel (%p297) target = $region44
        $region43: #{bn_layer_forward.11} parent=39 // pred_region
          %301 = dma.done %s293, 8192
        $region44: #{bn_layer_forward.11} parent=39 // pred_fallthru
          _
        %s302 = sand.u32 %s22, 1
        %s303 = scalar_lea.sflag [#allocation5], %s302
        %s304 = sand.u32 %s96, 1
        %s305 = smul.addr %s304, 2
        %s306 = scalar_lea.vmem [#allocation4], %s305
        // Predicated region
        $region45: #{bn_layer_forward.11} parent=39 // pred_check
          %p307 = pneg %p109
        $region46: #{bn_layer_forward.11} parent=39 // pred_check_branch
          %309 = sbr.rel (%p307) target = $region48
        $region47: #{bn_layer_forward.11} parent=39 // pred_region
          %311 = dma.done %s303, 32
        $region48: #{bn_layer_forward.11} parent=39 // pred_fallthru
          _
        %s312 = sand.u32 %s22, 1
        %s313 = scalar_lea.sflag [#allocation5], %s312
        %s314 = sand.u32 %s122, 1
        %s315 = smul.addr %s314, 2
        %s316 = scalar_lea.vmem [#allocation6], %s315
        // Predicated region
        $region49: #{bn_layer_forward.11} parent=39 // pred_check
          %p317 = pneg %p135
        $region50: #{bn_layer_forward.11} parent=39 // pred_check_branch
          %319 = sbr.rel (%p317) target = $region52
        $region51: #{bn_layer_forward.11} parent=39 // pred_region
          %321 = dma.done %s313, 32
        $region52: #{bn_layer_forward.11} parent=39 // pred_fallthru
          _
        %p322 = scmp.lt.s32.totalorder %s27, 8
        %s323 = scalar_select %p322, %s27, 8
        %s324 = smul.addr %s323, 4
        %s325 = smul.addr %s324, 4
        %s326 = scalar_lea.vmem %s0, %s325
        %p327 = pneg %p55
        %p328 = pneg %p52
        %s329 = sand.u32 %s70, 1
        %s330 = scalar_lea.sflag [#allocation3], %s329
        %s331 = sand.u32 %s70, 1
        %s332 = smul.addr %s331, 512
        %s333 = scalar_lea.vmem [#allocation2], %s332
        %p334 = pneg %p83
        %p335 = pneg %p80
        %s336 = sand.u32 %s22, 1
        %s337 = scalar_lea.sflag [#allocation5], %s336
        %s338 = sand.u32 %s96, 1
        %s339 = smul.addr %s338, 2
        %s340 = scalar_lea.vmem [#allocation4], %s339
        %p341 = pneg %p109
        %p342 = pneg %p106
        %s343 = sand.u32 %s22, 1
        %s344 = scalar_lea.sflag [#allocation5], %s343
        %s345 = sand.u32 %s122, 1
        %s346 = smul.addr %s345, 2
        %s347 = scalar_lea.vmem [#allocation6], %s346
        %p348 = pneg %p135
        %p349 = pneg %p132
        %s350 = smul.u32 2, %s26
        %p351 = scmp.lt.s32.totalorder %s350, 3
        %s352 = scalar_select %p351, %s350, 3
        %s353 = smul.addr %s352, 8
        %s354 = scalar_lea.vmem %s4, %s353
        %p355 = pneg %p161
        %p356 = pneg %p158
        %p357 = pneg %p187
        %p358 = pneg %p184
        %s359 = smul.u32 2, %s26
        %p360 = scmp.lt.s32.totalorder %s359, 3
        %s361 = scalar_select %p360, %s359, 3
        %s362 = smul.addr %s361, 8
        %s363 = scalar_lea.vmem %s5, %s362
        %p364 = scmp.lt.s32.totalorder %s27, 8
        %s365 = scalar_select %p364, %s27, 8
        %s366 = smul.addr %s365, 4
        %s367 = smul.addr %s366, 4
        %s368 = scalar_lea.vmem %s0, %s367
        %s369 = smul.u32 2, %s26
        %s370 = smul.u32 2, %s26
        %s371 = smul.u32 2, %s26
        %s372 = smul.u32 2, %s26
        %p373 = scmp.lt.s32.totalorder %s372, 3
        %s374 = scalar_select %p373, %s372, 3
        %s375 = smul.addr %s374, 8
        %s376 = scalar_lea.vmem %s4, %s375
        %s377 = smul.u32 2, %s26
        %s378 = smul.u32 2, %s26
        %p379 = scmp.lt.s32.totalorder %s378, 3
        %s380 = scalar_select %p379, %s378, 3
        %s381 = smul.addr %s380, 8
        %s382 = scalar_lea.vmem %s5, %s381
        %s383 = smul.u32 2, %s26
        %p384 = scmp.eq.s32.totalorder %s27, 0
        // Predicated region
        $region53: #{bn_layer_forward.11} parent=39 // pred_check
          %p385 = pneg %p384
        $region54: #{bn_layer_forward.11} parent=39 // pred_check_branch
          %387 = sbr.rel (%p385) target = $region56
        $region55: #{bn_layer_forward.11} parent=39 // pred_region
          %388 = vst [vmem:[%s382] sm:$0xff] 0.0
          %389 = vst [vmem:[%s382 + $0x8] sm:$0xff] 0.0
        $region56: #{bn_layer_forward.11} parent=39 // pred_fallthru
          _
        %v390 = vld [vmem:[%s382] sm:$0xff]
        %v391 = vld [vmem:[%s382 + $0x8] sm:$0xff]
        %v392 = vld [vmem:[%s368] sm:$0xff]
        %v393 = vld [vmem:[%s368 + $0x8] sm:$0xff]
        %v394 = vld [vmem:[%s296] sm:$0xff]
        %v395 = vld [vmem:[%s296 + $0x8] sm:$0xff]
        %v396 = vld [vmem:[%s296 + $0x10] sm:$0xff]
        %v397 = vld [vmem:[%s296 + $0x18] sm:$0xff]
        %v398 = vld [vmem:[%s296 + $0x20] sm:$0xff]
        %v399 = vld [vmem:[%s296 + $0x28] sm:$0xff]
        %v400 = vld [vmem:[%s296 + $0x30] sm:$0xff]
        %v401 = vld [vmem:[%s296 + $0x38] sm:$0xff]
        %v402 = vld [vmem:[%s296 + $0x40] sm:$0xff]
        %v403 = vld [vmem:[%s296 + $0x48] sm:$0xff]
        %v404 = vld [vmem:[%s296 + $0x50] sm:$0xff]
        %v405 = vld [vmem:[%s296 + $0x58] sm:$0xff]
        %v406 = vld [vmem:[%s296 + $0x60] sm:$0xff]
        %v407 = vld [vmem:[%s296 + $0x68] sm:$0xff]
        %v408 = vld [vmem:[%s296 + $0x70] sm:$0xff]
        %v409 = vld [vmem:[%s296 + $0x78] sm:$0xff]
        %v410 = vld [vmem:[%s296 + $0x80] sm:$0xff]
        %v411 = vld [vmem:[%s296 + $0x88] sm:$0xff]
        %v412 = vld [vmem:[%s296 + $0x90] sm:$0xff]
        %v413 = vld [vmem:[%s296 + $0x98] sm:$0xff]
        %v414 = vld [vmem:[%s296 + $0xa0] sm:$0xff]
        %v415 = vld [vmem:[%s296 + $0xa8] sm:$0xff]
        %v416 = vld [vmem:[%s296 + $0xb0] sm:$0xff]
        %v417 = vld [vmem:[%s296 + $0xb8] sm:$0xff]
        %v418 = vld [vmem:[%s296 + $0xc0] sm:$0xff]
        %v419 = vld [vmem:[%s296 + $0xc8] sm:$0xff]
        %v420 = vld [vmem:[%s296 + $0xd0] sm:$0xff]
        %v421 = vld [vmem:[%s296 + $0xd8] sm:$0xff]
        %v422 = vld [vmem:[%s296 + $0xe0] sm:$0xff]
        %v423 = vld [vmem:[%s296 + $0xe8] sm:$0xff]
        %v424 = vld [vmem:[%s296 + $0xf0] sm:$0xff]
        %v425 = vld [vmem:[%s296 + $0xf8] sm:$0xff]
        %v426 = vld [vmem:[%s296 + $0x100] sm:$0xff]
        %v427 = vld [vmem:[%s296 + $0x108] sm:$0xff]
        %v428 = vld [vmem:[%s296 + $0x110] sm:$0xff]
        %v429 = vld [vmem:[%s296 + $0x118] sm:$0xff]
        %v430 = vld [vmem:[%s296 + $0x120] sm:$0xff]
        %v431 = vld [vmem:[%s296 + $0x128] sm:$0xff]
        %v432 = vld [vmem:[%s296 + $0x130] sm:$0xff]
        %v433 = vld [vmem:[%s296 + $0x138] sm:$0xff]
        %v434 = vld [vmem:[%s296 + $0x140] sm:$0xff]
        %v435 = vld [vmem:[%s296 + $0x148] sm:$0xff]
        %v436 = vld [vmem:[%s296 + $0x150] sm:$0xff]
        %v437 = vld [vmem:[%s296 + $0x158] sm:$0xff]
        %v438 = vld [vmem:[%s296 + $0x160] sm:$0xff]
        %v439 = vld [vmem:[%s296 + $0x168] sm:$0xff]
        %v440 = vld [vmem:[%s296 + $0x170] sm:$0xff]
        %v441 = vld [vmem:[%s296 + $0x178] sm:$0xff]
        %v442 = vld [vmem:[%s296 + $0x180] sm:$0xff]
        %v443 = vld [vmem:[%s296 + $0x188] sm:$0xff]
        %v444 = vld [vmem:[%s296 + $0x190] sm:$0xff]
        %v445 = vld [vmem:[%s296 + $0x198] sm:$0xff]
        %v446 = vld [vmem:[%s296 + $0x1a0] sm:$0xff]
        %v447 = vld [vmem:[%s296 + $0x1a8] sm:$0xff]
        %v448 = vld [vmem:[%s296 + $0x1b0] sm:$0xff]
        %v449 = vld [vmem:[%s296 + $0x1b8] sm:$0xff]
        %v450 = vld [vmem:[%s296 + $0x1c0] sm:$0xff]
        %v451 = vld [vmem:[%s296 + $0x1c8] sm:$0xff]
        %v452 = vld [vmem:[%s296 + $0x1d0] sm:$0xff]
        %v453 = vld [vmem:[%s296 + $0x1d8] sm:$0xff]
        %v454 = vld [vmem:[%s296 + $0x1e0] sm:$0xff]
        %v455 = vld [vmem:[%s296 + $0x1e8] sm:$0xff]
        %v456 = vld [vmem:[%s296 + $0x1f0] sm:$0xff]
        %v457 = vld [vmem:[%s296 + $0x1f8] sm:$0xff]
        %v460 = vunpack.c.l.b16 %v392
        %v461 = vunpack.c.h.b16 %v392
        %v462 = vunpack.c.l.b16 %v393
        %v463 = vunpack.c.h.b16 %v393
        %v464 = vpack.c.b16 %v460, %v460
        %v465 = vpack.c.b16 %v461, %v461
        %v466 = vpack.c.b16 %v462, %v462
        %v467 = vpack.c.b16 %v463, %v463
        %v536 = vunpack.c.l.b16 %v394
        %v537 = vunpack.c.h.b16 %v394
        %v538 = vunpack.c.l.b16 %v395
        %v539 = vunpack.c.h.b16 %v395
        %v540 = vunpack.c.l.b16 %v396
        %v541 = vunpack.c.h.b16 %v396
        %v542 = vunpack.c.l.b16 %v397
        %v543 = vunpack.c.h.b16 %v397
        %v544 = vunpack.c.l.b16 %v398
        %v545 = vunpack.c.h.b16 %v398
        %v546 = vunpack.c.l.b16 %v399
        %v547 = vunpack.c.h.b16 %v399
        %v548 = vunpack.c.l.b16 %v400
        %v549 = vunpack.c.h.b16 %v400
        %v550 = vunpack.c.l.b16 %v401
        %v551 = vunpack.c.h.b16 %v401
        %v552 = vunpack.c.l.b16 %v402
        %v553 = vunpack.c.h.b16 %v402
        %v554 = vunpack.c.l.b16 %v403
        %v555 = vunpack.c.h.b16 %v403
        %v556 = vunpack.c.l.b16 %v404
        %v557 = vunpack.c.h.b16 %v404
        %v558 = vunpack.c.l.b16 %v405
        %v559 = vunpack.c.h.b16 %v405
        %v560 = vunpack.c.l.b16 %v406
        %v561 = vunpack.c.h.b16 %v406
        %v562 = vunpack.c.l.b16 %v407
        %v563 = vunpack.c.h.b16 %v407
        %v564 = vunpack.c.l.b16 %v408
        %v565 = vunpack.c.h.b16 %v408
        %v566 = vunpack.c.l.b16 %v409
        %v567 = vunpack.c.h.b16 %v409
        %v568 = vunpack.c.l.b16 %v410
        %v569 = vunpack.c.h.b16 %v410
        %v570 = vunpack.c.l.b16 %v411
        %v571 = vunpack.c.h.b16 %v411
        %v572 = vunpack.c.l.b16 %v412
        %v573 = vunpack.c.h.b16 %v412
        %v574 = vunpack.c.l.b16 %v413
        %v575 = vunpack.c.h.b16 %v413
        %v576 = vunpack.c.l.b16 %v414
        %v577 = vunpack.c.h.b16 %v414
        %v578 = vunpack.c.l.b16 %v415
        %v579 = vunpack.c.h.b16 %v415
        %v580 = vunpack.c.l.b16 %v416
        %v581 = vunpack.c.h.b16 %v416
        %v582 = vunpack.c.l.b16 %v417
        %v583 = vunpack.c.h.b16 %v417
        %v584 = vunpack.c.l.b16 %v418
        %v585 = vunpack.c.h.b16 %v418
        %v586 = vunpack.c.l.b16 %v419
        %v587 = vunpack.c.h.b16 %v419
        %v588 = vunpack.c.l.b16 %v420
        %v589 = vunpack.c.h.b16 %v420
        %v590 = vunpack.c.l.b16 %v421
        %v591 = vunpack.c.h.b16 %v421
        %v592 = vunpack.c.l.b16 %v422
        %v593 = vunpack.c.h.b16 %v422
        %v594 = vunpack.c.l.b16 %v423
        %v595 = vunpack.c.h.b16 %v423
        %v596 = vunpack.c.l.b16 %v424
        %v597 = vunpack.c.h.b16 %v424
        %v598 = vunpack.c.l.b16 %v425
        %v599 = vunpack.c.h.b16 %v425
        %v600 = vunpack.c.l.b16 %v426
        %v601 = vunpack.c.h.b16 %v426
        %v602 = vunpack.c.l.b16 %v427
        %v603 = vunpack.c.h.b16 %v427
        %v604 = vunpack.c.l.b16 %v428
        %v605 = vunpack.c.h.b16 %v428
        %v606 = vunpack.c.l.b16 %v429
        %v607 = vunpack.c.h.b16 %v429
        %v608 = vunpack.c.l.b16 %v430
        %v609 = vunpack.c.h.b16 %v430
        %v610 = vunpack.c.l.b16 %v431
        %v611 = vunpack.c.h.b16 %v431
        %v612 = vunpack.c.l.b16 %v432
        %v613 = vunpack.c.h.b16 %v432
        %v614 = vunpack.c.l.b16 %v433
        %v615 = vunpack.c.h.b16 %v433
        %v616 = vunpack.c.l.b16 %v434
        %v617 = vunpack.c.h.b16 %v434
        %v618 = vunpack.c.l.b16 %v435
        %v619 = vunpack.c.h.b16 %v435
        %v620 = vunpack.c.l.b16 %v436
        %v621 = vunpack.c.h.b16 %v436
        %v622 = vunpack.c.l.b16 %v437
        %v623 = vunpack.c.h.b16 %v437
        %v624 = vunpack.c.l.b16 %v438
        %v625 = vunpack.c.h.b16 %v438
        %v626 = vunpack.c.l.b16 %v439
        %v627 = vunpack.c.h.b16 %v439
        %v628 = vunpack.c.l.b16 %v440
        %v629 = vunpack.c.h.b16 %v440
        %v630 = vunpack.c.l.b16 %v441
        %v631 = vunpack.c.h.b16 %v441
        %v632 = vunpack.c.l.b16 %v442
        %v633 = vunpack.c.h.b16 %v442
        %v634 = vunpack.c.l.b16 %v443
        %v635 = vunpack.c.h.b16 %v443
        %v636 = vunpack.c.l.b16 %v444
        %v637 = vunpack.c.h.b16 %v444
        %v638 = vunpack.c.l.b16 %v445
        %v639 = vunpack.c.h.b16 %v445
        %v640 = vunpack.c.l.b16 %v446
        %v641 = vunpack.c.h.b16 %v446
        %v642 = vunpack.c.l.b16 %v447
        %v643 = vunpack.c.h.b16 %v447
        %v644 = vunpack.c.l.b16 %v448
        %v645 = vunpack.c.h.b16 %v448
        %v646 = vunpack.c.l.b16 %v449
        %v647 = vunpack.c.h.b16 %v449
        %v648 = vunpack.c.l.b16 %v450
        %v649 = vunpack.c.h.b16 %v450
        %v650 = vunpack.c.l.b16 %v451
        %v651 = vunpack.c.h.b16 %v451
        %v652 = vunpack.c.l.b16 %v452
        %v653 = vunpack.c.h.b16 %v452
        %v654 = vunpack.c.l.b16 %v453
        %v655 = vunpack.c.h.b16 %v453
        %v656 = vunpack.c.l.b16 %v454
        %v657 = vunpack.c.h.b16 %v454
        %v658 = vunpack.c.l.b16 %v455
        %v659 = vunpack.c.h.b16 %v455
        %v660 = vunpack.c.l.b16 %v456
        %v661 = vunpack.c.h.b16 %v456
        %v662 = vunpack.c.l.b16 %v457
        %v663 = vunpack.c.h.b16 %v457
        %v664 = vpack.c.b16 %v538, %v536
        %v665 = vpack.c.b16 %v539, %v537
        %v666 = vpack.c.b16 %v542, %v540
        %v667 = vpack.c.b16 %v543, %v541
        %v668 = vpack.c.b16 %v546, %v544
        %v669 = vpack.c.b16 %v547, %v545
        %v670 = vpack.c.b16 %v550, %v548
        %v671 = vpack.c.b16 %v551, %v549
        %v672 = vpack.c.b16 %v554, %v552
        %v673 = vpack.c.b16 %v555, %v553
        %v674 = vpack.c.b16 %v558, %v556
        %v675 = vpack.c.b16 %v559, %v557
        %v676 = vpack.c.b16 %v562, %v560
        %v677 = vpack.c.b16 %v563, %v561
        %v678 = vpack.c.b16 %v566, %v564
        %v679 = vpack.c.b16 %v567, %v565
        %v680 = vpack.c.b16 %v570, %v568
        %v681 = vpack.c.b16 %v571, %v569
        %v682 = vpack.c.b16 %v574, %v572
        %v683 = vpack.c.b16 %v575, %v573
        %v684 = vpack.c.b16 %v578, %v576
        %v685 = vpack.c.b16 %v579, %v577
        %v686 = vpack.c.b16 %v582, %v580
        %v687 = vpack.c.b16 %v583, %v581
        %v688 = vpack.c.b16 %v586, %v584
        %v689 = vpack.c.b16 %v587, %v585
        %v690 = vpack.c.b16 %v590, %v588
        %v691 = vpack.c.b16 %v591, %v589
        %v692 = vpack.c.b16 %v594, %v592
        %v693 = vpack.c.b16 %v595, %v593
        %v694 = vpack.c.b16 %v598, %v596
        %v695 = vpack.c.b16 %v599, %v597
        %v696 = vpack.c.b16 %v602, %v600
        %v697 = vpack.c.b16 %v603, %v601
        %v698 = vpack.c.b16 %v606, %v604
        %v699 = vpack.c.b16 %v607, %v605
        %v700 = vpack.c.b16 %v610, %v608
        %v701 = vpack.c.b16 %v611, %v609
        %v702 = vpack.c.b16 %v614, %v612
        %v703 = vpack.c.b16 %v615, %v613
        %v704 = vpack.c.b16 %v618, %v616
        %v705 = vpack.c.b16 %v619, %v617
        %v706 = vpack.c.b16 %v622, %v620
        %v707 = vpack.c.b16 %v623, %v621
        %v708 = vpack.c.b16 %v626, %v624
        %v709 = vpack.c.b16 %v627, %v625
        %v710 = vpack.c.b16 %v630, %v628
        %v711 = vpack.c.b16 %v631, %v629
        %v712 = vpack.c.b16 %v634, %v632
        %v713 = vpack.c.b16 %v635, %v633
        %v714 = vpack.c.b16 %v638, %v636
        %v715 = vpack.c.b16 %v639, %v637
        %v716 = vpack.c.b16 %v642, %v640
        %v717 = vpack.c.b16 %v643, %v641
        %v718 = vpack.c.b16 %v646, %v644
        %v719 = vpack.c.b16 %v647, %v645
        %v720 = vpack.c.b16 %v650, %v648
        %v721 = vpack.c.b16 %v651, %v649
        %v722 = vpack.c.b16 %v654, %v652
        %v723 = vpack.c.b16 %v655, %v653
        %v724 = vpack.c.b16 %v658, %v656
        %v725 = vpack.c.b16 %v659, %v657
        %v726 = vpack.c.b16 %v662, %v660
        %v727 = vpack.c.b16 %v663, %v661
        %792 = vmatpush.bf16.msra.mxu0 %v678
        %793 = vmatpush.bf16.msra.mxu0 %v676
        %794 = vmatpush.bf16.msra.mxu0 %v674
        %795 = vmatpush.bf16.msra.mxu0 %v672
        %796 = vmatpush.bf16.msra.mxu0 %v670
        %797 = vmatpush.bf16.msra.mxu0 %v668
        %798 = vmatpush.bf16.msra.mxu0 %v666
        %799 = vmatpush.bf16.msra.mxu0 %v664
        %800 = vmatmul.bf16.gmra.mxu0 %v464
        %v801 = vpop.f32.mrf.mxu0
        %v802 = vadd.f32 0.0, %v801
        %v803 = vpop.f32.mrf.mxu0
        %804 = vdwg.mxu0
        %805 = vmatpush.bf16.msra.mxu0 %v694
        %806 = vmatpush.bf16.msra.mxu0 %v692
        %807 = vmatpush.bf16.msra.mxu0 %v690
        %808 = vmatpush.bf16.msra.mxu0 %v688
        %809 = vmatpush.bf16.msra.mxu0 %v686
        %810 = vmatpush.bf16.msra.mxu0 %v684
        %811 = vmatpush.bf16.msra.mxu0 %v682
        %812 = vmatpush.bf16.msra.mxu0 %v680
        %813 = vmatmul.bf16.gmra.mxu0 %v465
        %v814 = vpop.f32.mrf.mxu0
        %v815 = vadd.f32 %v802, %v814
        %v816 = vpop.f32.mrf.mxu0
        %817 = vdwg.mxu0
        %818 = vmatpush.bf16.msra.mxu0 %v710
        %819 = vmatpush.bf16.msra.mxu0 %v708
        %820 = vmatpush.bf16.msra.mxu0 %v706
        %821 = vmatpush.bf16.msra.mxu0 %v704
        %822 = vmatpush.bf16.msra.mxu0 %v702
        %823 = vmatpush.bf16.msra.mxu0 %v700
        %824 = vmatpush.bf16.msra.mxu0 %v698
        %825 = vmatpush.bf16.msra.mxu0 %v696
        %826 = vmatmul.bf16.gmra.mxu0 %v466
        %v827 = vpop.f32.mrf.mxu0
        %v828 = vadd.f32 %v815, %v827
        %v829 = vpop.f32.mrf.mxu0
        %830 = vdwg.mxu0
        %831 = vmatpush.bf16.msra.mxu0 %v726
        %832 = vmatpush.bf16.msra.mxu0 %v724
        %833 = vmatpush.bf16.msra.mxu0 %v722
        %834 = vmatpush.bf16.msra.mxu0 %v720
        %835 = vmatpush.bf16.msra.mxu0 %v718
        %836 = vmatpush.bf16.msra.mxu0 %v716
        %837 = vmatpush.bf16.msra.mxu0 %v714
        %838 = vmatpush.bf16.msra.mxu0 %v712
        %839 = vmatmul.bf16.gmra.mxu0 %v467
        %v840 = vpop.f32.mrf.mxu0
        %v841 = vadd.f32 %v828, %v840
        %v842 = vpop.f32.mrf.mxu0
        %843 = vdwg.mxu0
        %844 = vmatpush.bf16.msra.mxu0 %v679
        %845 = vmatpush.bf16.msra.mxu0 %v677
        %846 = vmatpush.bf16.msra.mxu0 %v675
        %847 = vmatpush.bf16.msra.mxu0 %v673
        %848 = vmatpush.bf16.msra.mxu0 %v671
        %849 = vmatpush.bf16.msra.mxu0 %v669
        %850 = vmatpush.bf16.msra.mxu0 %v667
        %851 = vmatpush.bf16.msra.mxu0 %v665
        %852 = vmatmul.bf16.gmra.mxu0 %v464
        %v853 = vpop.f32.mrf.mxu0
        %v854 = vadd.f32 0.0, %v853
        %v855 = vpop.f32.mrf.mxu0
        %856 = vdwg.mxu0
        %857 = vmatpush.bf16.msra.mxu0 %v695
        %858 = vmatpush.bf16.msra.mxu0 %v693
        %859 = vmatpush.bf16.msra.mxu0 %v691
        %860 = vmatpush.bf16.msra.mxu0 %v689
        %861 = vmatpush.bf16.msra.mxu0 %v687
        %862 = vmatpush.bf16.msra.mxu0 %v685
        %863 = vmatpush.bf16.msra.mxu0 %v683
        %864 = vmatpush.bf16.msra.mxu0 %v681
        %865 = vmatmul.bf16.gmra.mxu0 %v465
        %v866 = vpop.f32.mrf.mxu0
        %v867 = vadd.f32 %v854, %v866
        %v868 = vpop.f32.mrf.mxu0
        %869 = vdwg.mxu0
        %870 = vmatpush.bf16.msra.mxu0 %v711
        %871 = vmatpush.bf16.msra.mxu0 %v709
        %872 = vmatpush.bf16.msra.mxu0 %v707
        %873 = vmatpush.bf16.msra.mxu0 %v705
        %874 = vmatpush.bf16.msra.mxu0 %v703
        %875 = vmatpush.bf16.msra.mxu0 %v701
        %876 = vmatpush.bf16.msra.mxu0 %v699
        %877 = vmatpush.bf16.msra.mxu0 %v697
        %878 = vmatmul.bf16.gmra.mxu0 %v466
        %v879 = vpop.f32.mrf.mxu0
        %v880 = vadd.f32 %v867, %v879
        %v881 = vpop.f32.mrf.mxu0
        %882 = vdwg.mxu0
        %883 = vmatpush.bf16.msra.mxu0 %v727
        %884 = vmatpush.bf16.msra.mxu0 %v725
        %885 = vmatpush.bf16.msra.mxu0 %v723
        %886 = vmatpush.bf16.msra.mxu0 %v721
        %887 = vmatpush.bf16.msra.mxu0 %v719
        %888 = vmatpush.bf16.msra.mxu0 %v717
        %889 = vmatpush.bf16.msra.mxu0 %v715
        %890 = vmatpush.bf16.msra.mxu0 %v713
        %891 = vmatmul.bf16.gmra.mxu0 %v467
        %v892 = vpop.f32.mrf.mxu0
        %v893 = vadd.f32 %v880, %v892
        %v894 = vpop.f32.mrf.mxu0
        %895 = vdwg.mxu0
        %v896 = vadd.f32 %v390, %v841
        %v897 = vadd.f32 %v391, %v893
        %898 = vst [vmem:[%s382] sm:$0xff] %v896
        %899 = vst [vmem:[%s382 + $0x8] sm:$0xff] %v897
        %p900 = scmp.eq.s32.totalorder %s27, 8
        // Predicated region
        $region57: #{bn_layer_forward.11} parent=39 // pred_check
          %p901 = pneg %p900
        $region58: #{bn_layer_forward.11} parent=39 // pred_check_branch
          %903 = sbr.rel (%p901) target = $region60
        $region59: #{bn_layer_forward.11} parent=39 // pred_region
          %v904 = vld [vmem:[%s382] sm:$0xff]
          %v905 = vld [vmem:[%s382 + $0x8] sm:$0xff]
          %v906 = vrot.slane %v904, 4
          %v907 = vadd.f32 %v904, %v906
          %v908 = vrot.slane %v907, 2
          %v909 = vadd.f32 %v907, %v908
          %v910 = vrot.slane %v909, 1
          %v911 = vadd.f32 %v909, %v910
          %v912 = vrot.slane %v905, 4
          %v913 = vadd.f32 %v905, %v912
          %v914 = vrot.slane %v913, 2
          %v915 = vadd.f32 %v913, %v914
          %v916 = vrot.slane %v915, 1
          %v917 = vadd.f32 %v915, %v916
          %v918 = vmul.f32 %v904, %v904
          %v919 = vmul.f32 %v905, %v905
          %v920 = vrot.slane %v918, 4
          %v921 = vadd.f32 %v918, %v920
          %v922 = vrot.slane %v921, 2
          %v923 = vadd.f32 %v921, %v922
          %v924 = vrot.slane %v923, 1
          %v925 = vadd.f32 %v923, %v924
          %v926 = vrot.slane %v919, 4
          %v927 = vadd.f32 %v919, %v926
          %v928 = vrot.slane %v927, 2
          %v929 = vadd.f32 %v927, %v928
          %v930 = vrot.slane %v929, 1
          %v931 = vadd.f32 %v929, %v930
          %v932 = vmul.f32 %v911, 0.125
          %v933 = vmul.f32 %v917, 0.125
          %v934 = vmul.f32 %v925, 0.125
          %v935 = vmul.f32 %v931, 0.125
          %v936 = vmul.f32 %v932, %v932
          %v937 = vmul.f32 %v933, %v933
          %v938 = vsub.f32 %v934, %v936
          %v939 = vsub.f32 %v935, %v937
          %v940 = vsub.f32 %v904, %v932
          %v941 = vsub.f32 %v905, %v933
          %v942 = vadd.f32 %v938, 1e-05
          %v943 = vadd.f32 %v939, 1e-05
          %v944 = vrsqrt.pop %v942
          %v945 = vmul.f32 %v944, %v942
          %v946 = vmul.f32 %v945, %v944
          %v947 = vmul.f32 0.5, %v946
          %v948 = vsub.f32 1.5, %v947
          %v949 = vmul.f32 %v944, %v948
          %vm950 = vweird.f32 %v942
          %vm951 = vweird.f32 %v944
          %vm952 = vmor %vm950, %vm951
          %v953 = vsel %vm952, %v944, %v949
          %v954 = vrsqrt.pop %v943
          %v955 = vmul.f32 %v954, %v943
          %v956 = vmul.f32 %v955, %v954
          %v957 = vmul.f32 0.5, %v956
          %v958 = vsub.f32 1.5, %v957
          %v959 = vmul.f32 %v954, %v958
          %vm960 = vweird.f32 %v943
          %vm961 = vweird.f32 %v954
          %vm962 = vmor %vm960, %vm961
          %v963 = vsel %vm962, %v954, %v959
          %v964 = vmul.f32 %v940, %v953
          %v965 = vmul.f32 %v941, %v963
          %v966 = vld [vmem:[%s306] sm:$0x3]
          %v968 = vperm.slane %v966, 0
          %v969 = vperm.slane %v966, 1
          %v972 = vmul.f32 %v964, %v968
          %v973 = vmul.f32 %v965, %v969
          %v974 = vld [vmem:[%s316] sm:$0x3]
          %v976 = vperm.slane %v974, 0
          %v977 = vperm.slane %v974, 1
          %v980 = vadd.f32 %v972, %v976
          %v981 = vadd.f32 %v973, %v977
          %v982 = vld [vmem:[%s376] sm:$0xff]
          %v983 = vld [vmem:[%s376 + $0x8] sm:$0xff]
          %v984 = vadd.f32 %v980, %v982
          %v985 = vadd.f32 %v981, %v983
          %v986 = vmax.f32 %v984, 0.0
          %v987 = vmax.f32 %v985, 0.0
          %988 = vst [vmem:[%s382] sm:$0xff] %v986
          %989 = vst [vmem:[%s382 + $0x8] sm:$0xff] %v987
        $region60: #{bn_layer_forward.11} parent=39 // pred_fallthru
          _
        %s990 = smul.u32 2, %s26
        %p991 = scmp.lt.s32.totalorder %s990, 3
        %s992 = scalar_select %p991, %s990, 3
        %s993 = smul.addr %s992, 8
        %s994 = scalar_lea.vmem %s5, %s993
        // Predicated region
        $region61: #{bn_layer_forward.11} parent=39 // pred_check
          %p995 = pneg %p184
        $region62: #{bn_layer_forward.11} parent=39 // pred_check_branch
          %997 = sbr.rel (%p995) target = $region64
        $region63: #{bn_layer_forward.11} parent=39 // pred_region
          %s998 = smul.u32 2, %s26
        $region64: #{bn_layer_forward.11} parent=39 // pred_fallthru
          _
      $region40: #{bn_layer_forward.11} parent=5 // pred_fallthru
        _
      %p999 = scmp.le.s32.totalorder 2, %s17
      // Predicated region
      $region65: #{bn_layer_forward.11} parent=5 // pred_check
        %p1000 = pneg %p999
      $region66: #{bn_layer_forward.11} parent=5 // pred_check_branch
        %1002 = sbr.rel (%p1000) target = $region68
      $region67: #{bn_layer_forward.11} parent=5 // pred_region
        %s1003 = ssub.s32 %s17, 2
        // Predicated region
        $region69: #{bn_layer_forward.11} parent=67 // pred_check
          %p1004 = pneg %p190
        $region70: #{bn_layer_forward.11} parent=67 // pred_check_branch
          %1006 = sbr.rel (%p1004) target = $region72
        $region71: #{bn_layer_forward.11} parent=67 // pred_region
          %s1007 = smul.u32 2, %s28
          %p1008 = scmp.lt.s32.totalorder %s1007, 3
          %s1009 = scalar_select %p1008, %s1007, 3
          %s1010 = smul.addr %s1009, 8
          %s1011 = scalar_lea.vmem %s5, %s1010
        $region72: #{bn_layer_forward.11} parent=67 // pred_fallthru
          _
      $region68: #{bn_layer_forward.11} parent=5 // pred_fallthru
        _
    $region6: #{bn_layer_forward.11} parent=1 // loop_footer
      %s21 = sadd.s32 1, %s17
    $region7: #{bn_layer_forward.11} parent=1 // loop_footer_branch
      %16 = sbr.rel target = $region3
    $region8: #{bn_layer_forward.11} parent=1 // loop_exit
      _
    %1012 = vsyncpa [#allocation3], 1
    %s1013 = scalar_lea.sflag [#allocation3], 1
    %1014 = vsyncpa %s1013, 1
    %1015 = vsyncpa [#allocation5], 1
    %s1016 = scalar_lea.sflag [#allocation5], 1
    %1017 = vsyncpa %s1016, 1

</llo_original>
